<compile_context>
chip_gen: v7x
topology: tpu7x:2x2x1
jax: 0.10.0
libtpu: 0.0.40
codegen_flags: <defaults>
</compile_context>

<pallas_src>
import jax
import jax.numpy as jnp
from jax.experimental import pallas as pl
from jax.experimental.pallas import tpu as pltpu


def _round_up(x, m):
    return -(-x // m) * m


# ----------------------------------------------------------------------------
# Fused HANLayer forward
# ----------------------------------------------------------------------------
def han_layer_forward(h, adjs, gat_params, sem_params, tile_n=128,
                      agg_dtype=jnp.float32):
    """agg_dtype: dtype of p/feat fed to the aggregation matmul (accumulation is
    always f32).  Use jnp.bfloat16 on v6e/v7x for native MXU throughput; keep
    f32 on v5e or when bit-level agreement with the f32 reference is needed."""
    h = jnp.asarray(h, jnp.float32)
    N, Fin = h.shape
    M = len(adjs)
    H, Fout = gat_params[0][1].shape
    HF = H * Fout
    HFp = _round_up(HF, 128)                     # lane-dense z / output stores
    W1, b1, W2 = sem_params
    W1 = jnp.asarray(W1, jnp.float32)
    b1 = jnp.asarray(b1, jnp.float32).reshape(1, -1)
    W2 = jnp.asarray(W2, jnp.float32).reshape(-1, 1)
    HIDDEN = W1.shape[1]

    # ---- dst-row tiling / padding (always 128-aligned: int8 adj friendly) ----
    TN = tile_n
    Np = _round_up(N, TN)
    B = Np // TN

    # ---- pad & pack inputs (plain JAX, one-time) -----------------------------
    hp = jnp.zeros((Np, Fin), jnp.float32).at[:N, :].set(h)
    htp = hp.T                                                    # (Fin, Np)

    adj_st = jnp.zeros((M, Np, Np), jnp.int8)                     # 0/1, int8
    for m, a in enumerate(adjs):
        adj_st = adj_st.at[m, :N, :N].set((jnp.asarray(a) > 0).astype(jnp.int8))

    def pack_attn(attn):  # (H, Fout) -> block-structured (H*Fout, H)
        eye = jnp.eye(H, dtype=jnp.float32)
        return (jnp.asarray(attn, jnp.float32)[:, :, None]
                * eye[:, None, :]).reshape(HF, H)

    W_l, Pl_l, Qr_l, bias_l = [], [], [], []
    for (W, al, ar, bg) in gat_params:
        W = jnp.asarray(W, jnp.float32)
        W_l.append(jnp.zeros((Fin, HFp), jnp.float32).at[:, :HF].set(W))
        Pl_l.append((W @ pack_attn(al)).T)                        # (H, Fin)
        Qr_l.append(W @ pack_attn(ar))                            # (Fin, H)
        bias_l.append(jnp.zeros((1, HFp), jnp.float32)
                      .at[:, :HF].set(jnp.asarray(bg, jnp.float32).reshape(1, HF)))
    W_st = jnp.stack(W_l)        # (M, Fin, HFp)  (zero-padded cols)
    Pl_st = jnp.stack(Pl_l)      # (M, H, Fin)
    Qr_st = jnp.stack(Qr_l)      # (M, Fin, H)
    bias_st = jnp.stack(bias_l)  # (M, 1, HFp)
    W1p = jnp.zeros((HFp, HIDDEN), jnp.float32).at[:HF, :].set(W1)

    # ======================================================================
    # Kernel 1: GATConv (all heads) + semantic tanh-projection column sum
    # ======================================================================
    def gat_kernel(h_ref, ht_ref, adj_ref, w_ref, plm_ref, qr_ref, bias_ref,
                   w1_ref, b1_ref, z_ref, ssum_ref,
                   feat_vmem, er_vmem, elt_vmem):
        b = pl.program_id(1)

        # Per-metapath projections, computed once and kept resident in VMEM.
        @pl.when(b == 0)
        def _init():
            hx = h_ref[...]                                                   # (Np, Fin)
            feat_vmem[...] = jnp.dot(hx, w_ref[0],
                                     preferred_element_type=jnp.float32
                                     ).astype(feat_vmem.dtype)                # (Np, HFp)
            er_vmem[...] = jnp.dot(hx, qr_ref[0],
                                   preferred_element_type=jnp.float32)        # (Np, H)
            elt_vmem[...] = jnp.dot(plm_ref[0], ht_ref[...],
                                    preferred_element_type=jnp.float32)       # (H, Np)
            ssum_ref[0] = jnp.zeros_like(ssum_ref[0])

        # Additive edge-mask bias, hoisted out of the head loop (int8 -> f32).
        neg_bias = (adj_ref[0].astype(jnp.float32) - 1.0) * 1e30   # 0 / -1e30

        row0 = pl.multiple_of(b * TN, TN)
        er_blk = er_vmem[pl.ds(row0, TN), :]                       # (TN, H)

        head_outs = []
        for hh in range(H):                                        # static unroll
            el_row = elt_vmem[hh:hh + 1, :]                        # (1, Np)
            e = er_blk[:, hh:hh + 1] + el_row                      # (TN, Np)
            e = jnp.maximum(e, 0.2 * e) + neg_bias                 # LeakyReLU + mask
            emax = jnp.maximum(jnp.max(e, axis=1, keepdims=True), -1e20)
            p = jnp.exp(e - emax)                                  # non-edges -> 0
            denom = jnp.sum(p, axis=1, keepdims=True)
            inv = 1.0 / jnp.where(denom > 0.0, denom, 1.0)         # (TN,1) only
            agg = jnp.dot(p.astype(feat_vmem.dtype),
                          feat_vmem[:, hh * Fout:(hh + 1) * Fout],
                          preferred_element_type=jnp.float32)      # (TN, Fout)
            head_outs.append(agg * inv)                            # deferred norm

        parts = head_outs
        if HFp > HF:
            parts = parts + [jnp.zeros((TN, HFp - HF), jnp.float32)]
        rst = jnp.concatenate(parts, axis=1) + bias_ref[0]         # (TN, HFp)
        z_blk = jnp.where(rst > 0, rst,
                          jnp.exp(jnp.minimum(rst, 0.0)) - 1.0)    # ELU
        z_ref[0] = z_blk                                           # lane-dense store

        # Semantic attention: accumulate column sum of tanh(z@W1+b1) (real rows).
        rows = jax.lax.broadcasted_iota(jnp.int32, (TN, 1), 0) + b * TN
        valid = (rows < N).astype(jnp.float32)
        proj = jnp.tanh(jnp.dot(z_blk, w1_ref[...],
                                preferred_element_type=jnp.float32) + b1_ref[...])
        ssum_ref[0] += jnp.sum(proj * valid, axis=0, keepdims=True)

    flops1 = int(M * (2 * Np * Fin * HFp + 4 * Np * Fin * H
                      + 2 * H * Np * Np * Fout + 6 * H * Np * Np
                      + 2 * Np * HFp * HIDDEN))
    trans1 = int(M * (H * Np * Np + Np * HIDDEN))
    bytes1 = int(adj_st.size
                 + (hp.size + htp.size + W_st.size + Pl_st.size + Qr_st.size
                    + bias_st.size + W1p.size + b1.size) * 4
                 + (M * Np * HFp + M * HIDDEN) * 4)

    z_stack, ssum = pl.pallas_call(
        gat_kernel,
        out_shape=(jax.ShapeDtypeStruct((M, Np, HFp), jnp.float32),
                   jax.ShapeDtypeStruct((M, 1, HIDDEN), jnp.float32)),
        grid_spec=pltpu.PrefetchScalarGridSpec(
            num_scalar_prefetch=0,
            grid=(M, B),
            in_specs=[
                pl.BlockSpec((Np, Fin), lambda m, b: (0, 0)),         # h (resident)
                pl.BlockSpec((Fin, Np), lambda m, b: (0, 0)),         # h^T (resident)
                pl.BlockSpec((1, TN, Np), lambda m, b: (m, b, 0)),    # adjacency (int8)
                pl.BlockSpec((1, Fin, HFp), lambda m, b: (m, 0, 0)),  # W (padded)
                pl.BlockSpec((1, H, Fin), lambda m, b: (m, 0, 0)),    # Pl
                pl.BlockSpec((1, Fin, H), lambda m, b: (m, 0, 0)),    # Qr
                pl.BlockSpec((1, 1, HFp), lambda m, b: (m, 0, 0)),    # GAT bias (padded)
                pl.BlockSpec((HFp, HIDDEN), lambda m, b: (0, 0)),     # semantic W1 (padded)
                pl.BlockSpec((1, HIDDEN), lambda m, b: (0, 0)),       # semantic b1
            ],
            out_specs=[
                pl.BlockSpec((1, TN, HFp), lambda m, b: (m, b, 0)),     # z
                pl.BlockSpec((1, 1, HIDDEN), lambda m, b: (m, 0, 0)),   # tanh col-sum
            ],
            scratch_shapes=[
                pltpu.VMEM((Np, HFp), agg_dtype),      # feat = h @ W (per metapath)
                pltpu.VMEM((Np, H), jnp.float32),      # er  (all nodes)
                pltpu.VMEM((H, Np), jnp.float32),      # el^T (all nodes)
            ]),
        compiler_params=pltpu.CompilerParams(
            dimension_semantics=("parallel", "arbitrary"),
            vmem_limit_bytes=32 * 1024 * 1024),
        cost_estimate=pl.CostEstimate(flops=flops1, transcendentals=trans1,
                                      bytes_accessed=bytes1),
    )(hp, htp, adj_st, W_st, Pl_st, Qr_st, bias_st, W1p, b1)

    # ---- semantic softmax hoisted to plain JAX (M scalars) -------------------
    w_scores = (ssum.reshape(M, HIDDEN) / jnp.float32(N)) @ W2     # (M, 1)
    beta = jax.nn.softmax(w_scores.reshape(M)).astype(jnp.float32) # (M,)

    # ======================================================================
    # Kernel 2: pure beta-weighted combine (beta lives in SMEM)
    # ======================================================================
    def combine_kernel(beta_ref, z_ref, out_ref):
        acc = beta_ref[0] * z_ref[0]
        for m in range(1, M):                                      # static unroll
            acc = acc + beta_ref[m] * z_ref[m]
        out_ref[...] = acc

    out = pl.pallas_call(
        combine_kernel,
        out_shape=jax.ShapeDtypeStruct((Np, HFp), jnp.float32),
        grid_spec=pltpu.PrefetchScalarGridSpec(
            num_scalar_prefetch=0,
            grid=(B,),
            in_specs=[
                pl.BlockSpec(memory_space=pltpu.MemorySpace.SMEM),   # beta (M,)
                pl.BlockSpec((M, TN, HFp), lambda b: (0, b, 0)),     # z blocks
            ],
            out_specs=pl.BlockSpec((TN, HFp), lambda b: (b, 0))),
        compiler_params=pltpu.CompilerParams(
            dimension_semantics=("parallel",),
            vmem_limit_bytes=32 * 1024 * 1024),
    )(beta, z_stack)

    return out[:N, :HF]


# ----------------------------------------------------------------------------
# Pure-JAX reference (correctness check)
# ----------------------------------------------------------------------------
def gat_ref(h, adj, W, attn_l, attn_r, bias):
    N = h.shape[0]
    H, Fout = attn_l.shape
    feat = (h @ W).reshape(N, H, Fout)
    el = jnp.sum(feat * attn_l[None], axis=-1)               # (N, H) src scores
    er = jnp.sum(feat * attn_r[None], axis=-1)               # (N, H) dst scores
    e = er[:, None, :] + el[None, :, :]                      # (Ndst, Nsrc, H)
    e = jnp.where(e > 0, e, 0.2 * e)
    mask = (adj > 0)[:, :, None]
    e = jnp.where(mask, e, -1e30)
    emax = jnp.max(e, axis=1, keepdims=True)
    p = jnp.exp(e - emax) * mask.astype(jnp.float32)
    denom = jnp.sum(p, axis=1, keepdims=True)
    alpha = p / jnp.where(denom > 0, denom, 1.0)
    rst = jnp.einsum('ijh,jhf->ihf', alpha, feat) + bias.reshape(1, H, Fout)
    out = jnp.where(rst > 0, rst, jnp.exp(jnp.minimum(rst, 0.0)) - 1.0)
    return out.reshape(N, H * Fout)


def han_ref(h, adjs, gat_params, sem_params):
    W1, b1, W2 = sem_params
    zs = jnp.stack([gat_ref(h, a, *p) for a, p in zip(adjs, gat_params)], axis=0)
    s = jnp.tanh(zs @ W1 + b1) @ W2                          # (M, N, 1)
    w = jnp.mean(s, axis=(1, 2))                             # (M,)
    beta = jax.nn.softmax(w)
    return jnp.sum(beta[:, None, None] * zs, axis=0)


# ----------------------------------------------------------------------------
if __name__ == "__main__":
    key = jax.random.PRNGKey(0)
    N, Fin, Fout, H, M, HIDDEN = 200, 16, 8, 4, 3, 128
    keys = jax.random.split(key, 3 + 2 * M)

    h = jax.random.normal(keys[0], (N, Fin), jnp.float32)

    # dense 0/1 metapath adjacency (dst, src); zero in-degree allowed
    adjs = [(jax.random.uniform(keys[1 + m], (N, N)) < 0.08).astype(jnp.float32)
            for m in range(M)]

    gat_params = []
    for m in range(M):
        k = jax.random.split(keys[1 + M + m], 4)
        W = jax.random.normal(k[0], (Fin, H * Fout), jnp.float32) * 0.2
        al = jax.random.normal(k[1], (H, Fout), jnp.float32) * 0.2
        ar = jax.random.normal(k[2], (H, Fout), jnp.float32) * 0.2
        bg = jax.random.normal(k[3], (1, H * Fout), jnp.float32) * 0.1
        gat_params.append((W, al, ar, bg))

    D = H * Fout
    ks = jax.random.split(keys[1 + 2 * M], 3)
    W1 = jax.random.normal(ks[0], (D, HIDDEN), jnp.float32) * 0.1
    b1 = jax.random.normal(ks[1], (1, HIDDEN), jnp.float32) * 0.1
    W2 = jax.random.normal(ks[2], (HIDDEN, 1), jnp.float32) * 0.1
    sem_params = (W1, b1, W2)

    out = jax.block_until_ready(han_layer_forward(h, adjs, gat_params, sem_params))
    ref = han_ref(h, adjs, gat_params, sem_params)

    assert out.shape == (N, D), out.shape
    err = float(jnp.max(jnp.abs(out - ref)))
    assert jnp.allclose(out, ref, rtol=2e-4, atol=2e-4), err

    print("KERNEL_OK")
</pallas_src>

<mosaic_0001>
module attributes {stable_mosaic.version = 11 : i64} {
  func.func @gat_kernel(%arg0: i32, %arg1: i32, %arg2: memref<256x16xf32, #tpu.memory_space<vmem>>, %arg3: memref<16x256xf32, #tpu.memory_space<vmem>>, %arg4: memref<1x128x256xi8, #tpu.memory_space<vmem>>, %arg5: memref<1x16x128xf32, #tpu.memory_space<vmem>>, %arg6: memref<1x4x16xf32, #tpu.memory_space<vmem>>, %arg7: memref<1x16x4xf32, #tpu.memory_space<vmem>>, %arg8: memref<1x1x128xf32, #tpu.memory_space<vmem>>, %arg9: memref<128x128xf32, #tpu.memory_space<vmem>>, %arg10: memref<1x128xf32, #tpu.memory_space<vmem>>, %arg11: memref<1x128x128xf32, #tpu.memory_space<vmem>>, %arg12: memref<1x1x128xf32, #tpu.memory_space<vmem>>, %arg13: memref<256x128xf32, #tpu.memory_space<vmem>>, %arg14: memref<256x4xf32, #tpu.memory_space<vmem>>, %arg15: memref<4x256xf32, #tpu.memory_space<vmem>>) attributes {dimension_semantics = [#tpu.dimension_semantics<parallel>, #tpu.dimension_semantics<arbitrary>], iteration_bounds = array<i64: 3, 2>, scalar_prefetch = 0 : i64, scratch_operands = 3 : i64, tpu.core_type = #tpu.core_type<tc>, window_params = [{pipeline_mode = #tpu.pipeline_mode<synchronous>, transform_indices = @transform_0, window_bounds = array<i64: 256, 16>}, {pipeline_mode = #tpu.pipeline_mode<synchronous>, transform_indices = @transform_1, window_bounds = array<i64: 16, 256>}, {transform_indices = @transform_2, window_bounds = array<i64: 1, 128, 256>}, {transform_indices = @transform_3, window_bounds = array<i64: 1, 16, 128>}, {transform_indices = @transform_4, window_bounds = array<i64: 1, 4, 16>}, {transform_indices = @transform_5, window_bounds = array<i64: 1, 16, 4>}, {transform_indices = @transform_6, window_bounds = array<i64: 1, 1, 128>}, {pipeline_mode = #tpu.pipeline_mode<synchronous>, transform_indices = @transform_7, window_bounds = array<i64: 128, 128>}, {pipeline_mode = #tpu.pipeline_mode<synchronous>, transform_indices = @transform_8, window_bounds = array<i64: 1, 128>}, {transform_indices = @transform_9, window_bounds = array<i64: 1, 128, 128>}, {transform_indices = @transform_10, window_bounds = array<i64: 1, 1, 128>}]} {
    %c0_i32 = arith.constant 0 : i32
    %0 = arith.cmpi eq, %arg1, %c0_i32 : i32
    %1 = arith.extui %0 : i1 to i32
    %c0_i32_0 = arith.constant 0 : i32
    %2 = arith.cmpi ne, %1, %c0_i32_0 : i32
    scf.if %2 {
      %c0_70 = arith.constant 0 : index
      %c0_71 = arith.constant 0 : index
      %167 = vector.load %arg2[%c0_70, %c0_71] : memref<256x16xf32, #tpu.memory_space<vmem>>, vector<256x16xf32>
      %c0_72 = arith.constant 0 : index
      %c0_73 = arith.constant 0 : index
      %c0_74 = arith.constant 0 : index
      %168 = vector.load %arg5[%c0_72, %c0_73, %c0_74] : memref<1x16x128xf32, #tpu.memory_space<vmem>>, vector<1x16x128xf32>
      %169 = vector.shape_cast %168 : vector<1x16x128xf32> to vector<16x128xf32>
      %cst_75 = arith.constant dense<0.000000e+00> : vector<256x128xf32>
      %170 = tpu.matmul %167, %169, %cst_75 {dimension_numbers = #tpu.dot_dimension_numbers<[1], [0], [0], [1], [0, 0, 1, 1], [], []>} : vector<256x16xf32>, vector<16x128xf32>, vector<256x128xf32> -> vector<256x128xf32>
      %c0_76 = arith.constant 0 : index
      %c0_77 = arith.constant 0 : index
      %171 = vector.load %arg13[%c0_76, %c0_77] : memref<256x128xf32, #tpu.memory_space<vmem>>, vector<256x128xf32>
      tpu.vector_store %arg13[%c0_76, %c0_77], %170 {strides = array<i32>} : memref<256x128xf32, #tpu.memory_space<vmem>>, vector<256x128xf32>,
      %c0_78 = arith.constant 0 : index
      %c0_79 = arith.constant 0 : index
      %c0_80 = arith.constant 0 : index
      %172 = vector.load %arg7[%c0_78, %c0_79, %c0_80] : memref<1x16x4xf32, #tpu.memory_space<vmem>>, vector<1x16x4xf32>
      %173 = vector.shape_cast %172 : vector<1x16x4xf32> to vector<16x4xf32>
      %cst_81 = arith.constant dense<0.000000e+00> : vector<256x4xf32>
      %174 = tpu.matmul %167, %173, %cst_81 {dimension_numbers = #tpu.dot_dimension_numbers<[1], [0], [0], [1], [0, 0, 1, 1], [], []>} : vector<256x16xf32>, vector<16x4xf32>, vector<256x4xf32> -> vector<256x4xf32>
      %c0_82 = arith.constant 0 : index
      %c0_83 = arith.constant 0 : index
      %175 = vector.load %arg14[%c0_82, %c0_83] : memref<256x4xf32, #tpu.memory_space<vmem>>, vector<256x4xf32>
      tpu.vector_store %arg14[%c0_82, %c0_83], %174 {strides = array<i32>} : memref<256x4xf32, #tpu.memory_space<vmem>>, vector<256x4xf32>,
      %c0_84 = arith.constant 0 : index
      %c0_85 = arith.constant 0 : index
      %c0_86 = arith.constant 0 : index
      %176 = vector.load %arg6[%c0_84, %c0_85, %c0_86] : memref<1x4x16xf32, #tpu.memory_space<vmem>>, vector<1x4x16xf32>
      %177 = vector.shape_cast %176 : vector<1x4x16xf32> to vector<4x16xf32>
      %c0_87 = arith.constant 0 : index
      %c0_88 = arith.constant 0 : index
      %178 = vector.load %arg3[%c0_87, %c0_88] : memref<16x256xf32, #tpu.memory_space<vmem>>, vector<16x256xf32>
      %cst_89 = arith.constant dense<0.000000e+00> : vector<4x256xf32>
      %179 = tpu.matmul %177, %178, %cst_89 {dimension_numbers = #tpu.dot_dimension_numbers<[1], [0], [0], [1], [0, 0, 1, 1], [], []>} : vector<4x16xf32>, vector<16x256xf32>, vector<4x256xf32> -> vector<4x256xf32>
      %c0_90 = arith.constant 0 : index
      %c0_91 = arith.constant 0 : index
      %180 = vector.load %arg15[%c0_90, %c0_91] : memref<4x256xf32, #tpu.memory_space<vmem>>, vector<4x256xf32>
      tpu.vector_store %arg15[%c0_90, %c0_91], %179 {strides = array<i32>} : memref<4x256xf32, #tpu.memory_space<vmem>>, vector<4x256xf32>,
      %cst_92 = arith.constant 0.000000e+00 : f32
      %181 = vector.broadcast %cst_92 : f32 to vector<1x128xf32>
      %c0_93 = arith.constant 0 : index
      %c0_94 = arith.constant 0 : index
      %c0_95 = arith.constant 0 : index
      %182 = vector.load %arg12[%c0_93, %c0_94, %c0_95] : memref<1x1x128xf32, #tpu.memory_space<vmem>>, vector<1x1x128xf32>
      %183 = vector.shape_cast %182 : vector<1x1x128xf32> to vector<1x128xf32>
      %184 = vector.shape_cast %181 : vector<1x128xf32> to vector<1x1x128xf32>
      tpu.vector_store %arg12[%c0_93, %c0_94, %c0_95], %184 {strides = array<i32>} : memref<1x1x128xf32, #tpu.memory_space<vmem>>, vector<1x1x128xf32>,
    } else {
    }
    %c0 = arith.constant 0 : index
    %c0_1 = arith.constant 0 : index
    %c0_2 = arith.constant 0 : index
    %3 = vector.load %arg4[%c0, %c0_1, %c0_2] : memref<1x128x256xi8, #tpu.memory_space<vmem>>, vector<1x128x256xi8>
    %4 = vector.shape_cast %3 : vector<1x128x256xi8> to vector<128x256xi8>
    %5 = arith.sitofp %4 : vector<128x256xi8> to vector<128x256xf32>
    %cst = arith.constant 1.000000e+00 : f32
    %6 = vector.broadcast %cst : f32 to vector<128x256xf32>
    %7 = arith.subf %5, %6 : vector<128x256xf32>
    %cst_3 = arith.constant 1.000000e+30 : f32
    %8 = vector.broadcast %cst_3 : f32 to vector<128x256xf32>
    %9 = arith.mulf %7, %8 : vector<128x256xf32>
    %c128_i32 = arith.constant 128 : i32
    %10 = arith.muli %arg1, %c128_i32 : i32
    %11 = tpu.assume_multiple %10, 128 : i32
    %12 = arith.index_cast %11 : i32 to index
    %c0_4 = arith.constant 0 : index
    %13 = vector.load %arg14[%12, %c0_4] : memref<256x4xf32, #tpu.memory_space<vmem>>, vector<128x4xf32>
    %c0_5 = arith.constant 0 : index
    %c0_6 = arith.constant 0 : index
    %14 = vector.load %arg15[%c0_5, %c0_6] : memref<4x256xf32, #tpu.memory_space<vmem>>, vector<1x256xf32>
    %15 = vector.extract_strided_slice %13 {offsets = [0, 0], sizes = [128, 1], strides = [1, 1]} : vector<128x4xf32> to vector<128x1xf32>
    %16 = vector.broadcast %15 : vector<128x1xf32> to vector<128x256xf32>
    %17 = vector.broadcast %14 : vector<1x256xf32> to vector<128x256xf32>
    %18 = arith.addf %16, %17 : vector<128x256xf32>
    %cst_7 = arith.constant 2.000000e-01 : f32
    %19 = vector.broadcast %cst_7 : f32 to vector<128x256xf32>
    %20 = arith.mulf %19, %18 : vector<128x256xf32>
    %21 = arith.maximumf %18, %20 : vector<128x256xf32>
    %22 = arith.addf %21, %9 : vector<128x256xf32>
    %cst_8 = arith.constant dense<0xFF800000> : vector<128xf32>
    %23 = vector.multi_reduction <maximumf>, %22, %cst_8 [1] : vector<128x256xf32> to vector<128xf32>
    %24 = vector.shape_cast %23 : vector<128xf32> to vector<128x1xf32>
    %cst_9 = arith.constant -1.000000e+20 : f32
    %25 = vector.broadcast %cst_9 : f32 to vector<128x1xf32>
    %26 = arith.maximumf %24, %25 : vector<128x1xf32>
    %27 = vector.broadcast %26 : vector<128x1xf32> to vector<128x256xf32>
    %28 = arith.subf %22, %27 : vector<128x256xf32>
    %29 = math.exp %28 : vector<128x256xf32>
    %cst_10 = arith.constant dense<0.000000e+00> : vector<128xf32>
    %30 = vector.multi_reduction <add>, %29, %cst_10 [1] : vector<128x256xf32> to vector<128xf32>
    %31 = vector.shape_cast %30 : vector<128xf32> to vector<128x1xf32>
    %cst_11 = arith.constant 0.000000e+00 : f32
    %32 = vector.broadcast %cst_11 : f32 to vector<128x1xf32>
    %33 = arith.cmpf ogt, %31, %32 : vector<128x1xf32>
    %cst_12 = arith.constant 1.000000e+00 : f32
    %34 = vector.broadcast %cst_12 : f32 to vector<128x1xf32>
    %35 = arith.select %33, %31, %34 : vector<128x1xi1>, vector<128x1xf32>
    %cst_13 = arith.constant 1.000000e+00 : f32
    %36 = vector.broadcast %cst_13 : f32 to vector<128x1xf32>
    %37 = arith.divf %36, %35 : vector<128x1xf32>
    %c0_14 = arith.constant 0 : index
    %c0_15 = arith.constant 0 : index
    %38 = vector.load %arg13[%c0_14, %c0_15] : memref<256x128xf32, #tpu.memory_space<vmem>>, vector<256x8xf32>
    %cst_16 = arith.constant dense<0.000000e+00> : vector<128x8xf32>
    %39 = tpu.matmul %29, %38, %cst_16 {dimension_numbers = #tpu.dot_dimension_numbers<[1], [0], [0], [1], [0, 0, 1, 1], [], []>} : vector<128x256xf32>, vector<256x8xf32>, vector<128x8xf32> -> vector<128x8xf32>
    %40 = vector.broadcast %37 : vector<128x1xf32> to vector<128x8xf32>
    %41 = arith.mulf %39, %40 : vector<128x8xf32>
    %c1 = arith.constant 1 : index
    %c0_17 = arith.constant 0 : index
    %42 = vector.load %arg15[%c1, %c0_17] : memref<4x256xf32, #tpu.memory_space<vmem>>, vector<1x256xf32>
    %43 = vector.extract_strided_slice %13 {offsets = [0, 1], sizes = [128, 1], strides = [1, 1]} : vector<128x4xf32> to vector<128x1xf32>
    %44 = vector.broadcast %43 : vector<128x1xf32> to vector<128x256xf32>
    %45 = vector.broadcast %42 : vector<1x256xf32> to vector<128x256xf32>
    %46 = arith.addf %44, %45 : vector<128x256xf32>
    %cst_18 = arith.constant 2.000000e-01 : f32
    %47 = vector.broadcast %cst_18 : f32 to vector<128x256xf32>
    %48 = arith.mulf %47, %46 : vector<128x256xf32>
    %49 = arith.maximumf %46, %48 : vector<128x256xf32>
    %50 = arith.addf %49, %9 : vector<128x256xf32>
    %cst_19 = arith.constant dense<0xFF800000> : vector<128xf32>
    %51 = vector.multi_reduction <maximumf>, %50, %cst_19 [1] : vector<128x256xf32> to vector<128xf32>
    %52 = vector.shape_cast %51 : vector<128xf32> to vector<128x1xf32>
    %cst_20 = arith.constant -1.000000e+20 : f32
    %53 = vector.broadcast %cst_20 : f32 to vector<128x1xf32>
    %54 = arith.maximumf %52, %53 : vector<128x1xf32>
    %55 = vector.broadcast %54 : vector<128x1xf32> to vector<128x256xf32>
    %56 = arith.subf %50, %55 : vector<128x256xf32>
    %57 = math.exp %56 : vector<128x256xf32>
    %cst_21 = arith.constant dense<0.000000e+00> : vector<128xf32>
    %58 = vector.multi_reduction <add>, %57, %cst_21 [1] : vector<128x256xf32> to vector<128xf32>
    %59 = vector.shape_cast %58 : vector<128xf32> to vector<128x1xf32>
    %cst_22 = arith.constant 0.000000e+00 : f32
    %60 = vector.broadcast %cst_22 : f32 to vector<128x1xf32>
    %61 = arith.cmpf ogt, %59, %60 : vector<128x1xf32>
    %cst_23 = arith.constant 1.000000e+00 : f32
    %62 = vector.broadcast %cst_23 : f32 to vector<128x1xf32>
    %63 = arith.select %61, %59, %62 : vector<128x1xi1>, vector<128x1xf32>
    %cst_24 = arith.constant 1.000000e+00 : f32
    %64 = vector.broadcast %cst_24 : f32 to vector<128x1xf32>
    %65 = arith.divf %64, %63 : vector<128x1xf32>
    %c0_25 = arith.constant 0 : index
    %c8 = arith.constant 8 : index
    %66 = vector.load %arg13[%c0_25, %c8] : memref<256x128xf32, #tpu.memory_space<vmem>>, vector<256x8xf32>
    %cst_26 = arith.constant dense<0.000000e+00> : vector<128x8xf32>
    %67 = tpu.matmul %57, %66, %cst_26 {dimension_numbers = #tpu.dot_dimension_numbers<[1], [0], [0], [1], [0, 0, 1, 1], [], []>} : vector<128x256xf32>, vector<256x8xf32>, vector<128x8xf32> -> vector<128x8xf32>
    %68 = vector.broadcast %65 : vector<128x1xf32> to vector<128x8xf32>
    %69 = arith.mulf %67, %68 : vector<128x8xf32>
    %c2 = arith.constant 2 : index
    %c0_27 = arith.constant 0 : index
    %70 = vector.load %arg15[%c2, %c0_27] : memref<4x256xf32, #tpu.memory_space<vmem>>, vector<1x256xf32>
    %71 = vector.extract_strided_slice %13 {offsets = [0, 2], sizes = [128, 1], strides = [1, 1]} : vector<128x4xf32> to vector<128x1xf32>
    %72 = vector.broadcast %71 : vector<128x1xf32> to vector<128x256xf32>
    %73 = vector.broadcast %70 : vector<1x256xf32> to vector<128x256xf32>
    %74 = arith.addf %72, %73 : vector<128x256xf32>
    %cst_28 = arith.constant 2.000000e-01 : f32
    %75 = vector.broadcast %cst_28 : f32 to vector<128x256xf32>
    %76 = arith.mulf %75, %74 : vector<128x256xf32>
    %77 = arith.maximumf %74, %76 : vector<128x256xf32>
    %78 = arith.addf %77, %9 : vector<128x256xf32>
    %cst_29 = arith.constant dense<0xFF800000> : vector<128xf32>
    %79 = vector.multi_reduction <maximumf>, %78, %cst_29 [1] : vector<128x256xf32> to vector<128xf32>
    %80 = vector.shape_cast %79 : vector<128xf32> to vector<128x1xf32>
    %cst_30 = arith.constant -1.000000e+20 : f32
    %81 = vector.broadcast %cst_30 : f32 to vector<128x1xf32>
    %82 = arith.maximumf %80, %81 : vector<128x1xf32>
    %83 = vector.broadcast %82 : vector<128x1xf32> to vector<128x256xf32>
    %84 = arith.subf %78, %83 : vector<128x256xf32>
    %85 = math.exp %84 : vector<128x256xf32>
    %cst_31 = arith.constant dense<0.000000e+00> : vector<128xf32>
    %86 = vector.multi_reduction <add>, %85, %cst_31 [1] : vector<128x256xf32> to vector<128xf32>
    %87 = vector.shape_cast %86 : vector<128xf32> to vector<128x1xf32>
    %cst_32 = arith.constant 0.000000e+00 : f32
    %88 = vector.broadcast %cst_32 : f32 to vector<128x1xf32>
    %89 = arith.cmpf ogt, %87, %88 : vector<128x1xf32>
    %cst_33 = arith.constant 1.000000e+00 : f32
    %90 = vector.broadcast %cst_33 : f32 to vector<128x1xf32>
    %91 = arith.select %89, %87, %90 : vector<128x1xi1>, vector<128x1xf32>
    %cst_34 = arith.constant 1.000000e+00 : f32
    %92 = vector.broadcast %cst_34 : f32 to vector<128x1xf32>
    %93 = arith.divf %92, %91 : vector<128x1xf32>
    %c0_35 = arith.constant 0 : index
    %c16 = arith.constant 16 : index
    %94 = vector.load %arg13[%c0_35, %c16] : memref<256x128xf32, #tpu.memory_space<vmem>>, vector<256x8xf32>
    %cst_36 = arith.constant dense<0.000000e+00> : vector<128x8xf32>
    %95 = tpu.matmul %85, %94, %cst_36 {dimension_numbers = #tpu.dot_dimension_numbers<[1], [0], [0], [1], [0, 0, 1, 1], [], []>} : vector<128x256xf32>, vector<256x8xf32>, vector<128x8xf32> -> vector<128x8xf32>
    %96 = vector.broadcast %93 : vector<128x1xf32> to vector<128x8xf32>
    %97 = arith.mulf %95, %96 : vector<128x8xf32>
    %c3 = arith.constant 3 : index
    %c0_37 = arith.constant 0 : index
    %98 = vector.load %arg15[%c3, %c0_37] : memref<4x256xf32, #tpu.memory_space<vmem>>, vector<1x256xf32>
    %99 = vector.extract_strided_slice %13 {offsets = [0, 3], sizes = [128, 1], strides = [1, 1]} : vector<128x4xf32> to vector<128x1xf32>
    %100 = vector.broadcast %99 : vector<128x1xf32> to vector<128x256xf32>
    %101 = vector.broadcast %98 : vector<1x256xf32> to vector<128x256xf32>
    %102 = arith.addf %100, %101 : vector<128x256xf32>
    %cst_38 = arith.constant 2.000000e-01 : f32
    %103 = vector.broadcast %cst_38 : f32 to vector<128x256xf32>
    %104 = arith.mulf %103, %102 : vector<128x256xf32>
    %105 = arith.maximumf %102, %104 : vector<128x256xf32>
    %106 = arith.addf %105, %9 : vector<128x256xf32>
    %cst_39 = arith.constant dense<0xFF800000> : vector<128xf32>
    %107 = vector.multi_reduction <maximumf>, %106, %cst_39 [1] : vector<128x256xf32> to vector<128xf32>
    %108 = vector.shape_cast %107 : vector<128xf32> to vector<128x1xf32>
    %cst_40 = arith.constant -1.000000e+20 : f32
    %109 = vector.broadcast %cst_40 : f32 to vector<128x1xf32>
    %110 = arith.maximumf %108, %109 : vector<128x1xf32>
    %111 = vector.broadcast %110 : vector<128x1xf32> to vector<128x256xf32>
    %112 = arith.subf %106, %111 : vector<128x256xf32>
    %113 = math.exp %112 : vector<128x256xf32>
    %cst_41 = arith.constant dense<0.000000e+00> : vector<128xf32>
    %114 = vector.multi_reduction <add>, %113, %cst_41 [1] : vector<128x256xf32> to vector<128xf32>
    %115 = vector.shape_cast %114 : vector<128xf32> to vector<128x1xf32>
    %cst_42 = arith.constant 0.000000e+00 : f32
    %116 = vector.broadcast %cst_42 : f32 to vector<128x1xf32>
    %117 = arith.cmpf ogt, %115, %116 : vector<128x1xf32>
    %cst_43 = arith.constant 1.000000e+00 : f32
    %118 = vector.broadcast %cst_43 : f32 to vector<128x1xf32>
    %119 = arith.select %117, %115, %118 : vector<128x1xi1>, vector<128x1xf32>
    %cst_44 = arith.constant 1.000000e+00 : f32
    %120 = vector.broadcast %cst_44 : f32 to vector<128x1xf32>
    %121 = arith.divf %120, %119 : vector<128x1xf32>
    %c0_45 = arith.constant 0 : index
    %c24 = arith.constant 24 : index
    %122 = vector.load %arg13[%c0_45, %c24] : memref<256x128xf32, #tpu.memory_space<vmem>>, vector<256x8xf32>
    %cst_46 = arith.constant dense<0.000000e+00> : vector<128x8xf32>
    %123 = tpu.matmul %113, %122, %cst_46 {dimension_numbers = #tpu.dot_dimension_numbers<[1], [0], [0], [1], [0, 0, 1, 1], [], []>} : vector<128x256xf32>, vector<256x8xf32>, vector<128x8xf32> -> vector<128x8xf32>
    %124 = vector.broadcast %121 : vector<128x1xf32> to vector<128x8xf32>
    %125 = arith.mulf %123, %124 : vector<128x8xf32>
    %cst_47 = arith.constant 0.000000e+00 : f32
    %126 = vector.broadcast %cst_47 : f32 to vector<128x96xf32>
    %127 = tpu.concatenate %41, %69, %97, %125, %126 in 1 : vector<128x8xf32>, vector<128x8xf32>, vector<128x8xf32>, vector<128x8xf32>, vector<128x96xf32> -> vector<128x128xf32>
    %c0_48 = arith.constant 0 : index
    %c0_49 = arith.constant 0 : index
    %c0_50 = arith.constant 0 : index
    %128 = vector.load %arg8[%c0_48, %c0_49, %c0_50] : memref<1x1x128xf32, #tpu.memory_space<vmem>>, vector<1x1x128xf32>
    %129 = vector.shape_cast %128 : vector<1x1x128xf32> to vector<1x128xf32>
    %130 = vector.broadcast %129 : vector<1x128xf32> to vector<128x128xf32>
    %131 = arith.addf %127, %130 : vector<128x128xf32>
    %cst_51 = arith.constant 0.000000e+00 : f32
    %132 = vector.broadcast %cst_51 : f32 to vector<128x128xf32>
    %133 = arith.cmpf ogt, %131, %132 : vector<128x128xf32>
    %cst_52 = arith.constant 0.000000e+00 : f32
    %134 = vector.broadcast %cst_52 : f32 to vector<128x128xf32>
    %135 = arith.minimumf %131, %134 : vector<128x128xf32>
    %136 = math.exp %135 : vector<128x128xf32>
    %cst_53 = arith.constant 1.000000e+00 : f32
    %137 = vector.broadcast %cst_53 : f32 to vector<128x128xf32>
    %138 = arith.subf %136, %137 : vector<128x128xf32>
    %139 = arith.select %133, %131, %138 : vector<128x128xi1>, vector<128x128xf32>
    %c0_54 = arith.constant 0 : index
    %c0_55 = arith.constant 0 : index
    %c0_56 = arith.constant 0 : index
    %140 = vector.load %arg11[%c0_54, %c0_55, %c0_56] : memref<1x128x128xf32, #tpu.memory_space<vmem>>, vector<1x128x128xf32>
    %141 = vector.shape_cast %140 : vector<1x128x128xf32> to vector<128x128xf32>
    %142 = vector.shape_cast %139 : vector<128x128xf32> to vector<1x128x128xf32>
    tpu.vector_store %arg11[%c0_54, %c0_55, %c0_56], %142 {strides = array<i32>} : memref<1x128x128xf32, #tpu.memory_space<vmem>>, vector<1x128x128xf32>,
    %143 = tpu.iota {dimensions = array<i32: 0>} : vector<128x1xi32>
    %c128_i32_57 = arith.constant 128 : i32
    %144 = arith.muli %arg1, %c128_i32_57 : i32
    %145 = vector.broadcast %144 : i32 to vector<128x1xi32>
    %146 = arith.addi %143, %145 : vector<128x1xi32>
    %c200_i32 = arith.constant 200 : i32
    %147 = vector.broadcast %c200_i32 : i32 to vector<128x1xi32>
    %148 = arith.cmpi slt, %146, %147 : vector<128x1xi32>
    %149 = arith.extui %148 : vector<128x1xi1> to vector<128x1xi32>
    %150 = arith.sitofp %149 : vector<128x1xi32> to vector<128x1xf32>
    %c0_58 = arith.constant 0 : index
    %c0_59 = arith.constant 0 : index
    %151 = vector.load %arg9[%c0_58, %c0_59] : memref<128x128xf32, #tpu.memory_space<vmem>>, vector<128x128xf32>
    %cst_60 = arith.constant dense<0.000000e+00> : vector<128x128xf32>
    %152 = tpu.matmul %139, %151, %cst_60 {dimension_numbers = #tpu.dot_dimension_numbers<[1], [0], [0], [1], [0, 0, 1, 1], [], []>} : vector<128x128xf32>, vector<128x128xf32>, vector<128x128xf32> -> vector<128x128xf32>
    %c0_61 = arith.constant 0 : index
    %c0_62 = arith.constant 0 : index
    %153 = vector.load %arg10[%c0_61, %c0_62] : memref<1x128xf32, #tpu.memory_space<vmem>>, vector<1x128xf32>
    %154 = vector.broadcast %153 : vector<1x128xf32> to vector<128x128xf32>
    %155 = arith.addf %152, %154 : vector<128x128xf32>
    %156 = math.tanh %155 : vector<128x128xf32>
    %c0_63 = arith.constant 0 : index
    %c0_64 = arith.constant 0 : index
    %c0_65 = arith.constant 0 : index
    %157 = vector.load %arg12[%c0_63, %c0_64, %c0_65] : memref<1x1x128xf32, #tpu.memory_space<vmem>>, vector<1x1x128xf32>
    %158 = vector.shape_cast %157 : vector<1x1x128xf32> to vector<1x128xf32>
    %159 = vector.broadcast %150 : vector<128x1xf32> to vector<128x128xf32>
    %160 = arith.mulf %156, %159 : vector<128x128xf32>
    %cst_66 = arith.constant dense<0.000000e+00> : vector<128xf32>
    %161 = vector.multi_reduction <add>, %160, %cst_66 [0] : vector<128x128xf32> to vector<128xf32>
    %162 = vector.shape_cast %161 : vector<128xf32> to vector<1x128xf32>
    %163 = arith.addf %158, %162 : vector<1x128xf32>
    %c0_67 = arith.constant 0 : index
    %c0_68 = arith.constant 0 : index
    %c0_69 = arith.constant 0 : index
    %164 = vector.load %arg12[%c0_67, %c0_68, %c0_69] : memref<1x1x128xf32, #tpu.memory_space<vmem>>, vector<1x1x128xf32>
    %165 = vector.shape_cast %164 : vector<1x1x128xf32> to vector<1x128xf32>
    %166 = vector.shape_cast %163 : vector<1x128xf32> to vector<1x1x128xf32>
    tpu.vector_store %arg12[%c0_67, %c0_68, %c0_69], %166 {strides = array<i32>} : memref<1x1x128xf32, #tpu.memory_space<vmem>>, vector<1x1x128xf32>,
    return
  }
  func.func @transform_0(%arg0: i32, %arg1: i32) -> (i32, i32) {
    %c0_i32 = arith.constant 0 : i32
    %c0_i32_0 = arith.constant 0 : i32
    %c0_i32_1 = arith.constant 0 : i32
    return %c0_i32, %c0_i32_0 : i32, i32
  }
  func.func @transform_1(%arg0: i32, %arg1: i32) -> (i32, i32) {
    %c0_i32 = arith.constant 0 : i32
    %c0_i32_0 = arith.constant 0 : i32
    %c0_i32_1 = arith.constant 0 : i32
    return %c0_i32, %c0_i32_0 : i32, i32
  }
  func.func @transform_2(%arg0: i32, %arg1: i32) -> (i32, i32, i32) {
    %c0_i32 = arith.constant 0 : i32
    %c0_i32_0 = arith.constant 0 : i32
    return %arg0, %arg1, %c0_i32 : i32, i32, i32
  }
  func.func @transform_3(%arg0: i32, %arg1: i32) -> (i32, i32, i32) {
    %c0_i32 = arith.constant 0 : i32
    %c0_i32_0 = arith.constant 0 : i32
    %c0_i32_1 = arith.constant 0 : i32
    return %arg0, %c0_i32, %c0_i32_0 : i32, i32, i32
  }
  func.func @transform_4(%arg0: i32, %arg1: i32) -> (i32, i32, i32) {
    %c0_i32 = arith.constant 0 : i32
    %c0_i32_0 = arith.constant 0 : i32
    %c0_i32_1 = arith.constant 0 : i32
    return %arg0, %c0_i32, %c0_i32_0 : i32, i32, i32
  }
  func.func @transform_5(%arg0: i32, %arg1: i32) -> (i32, i32, i32) {
    %c0_i32 = arith.constant 0 : i32
    %c0_i32_0 = arith.constant 0 : i32
    %c0_i32_1 = arith.constant 0 : i32
    return %arg0, %c0_i32, %c0_i32_0 : i32, i32, i32
  }
  func.func @transform_6(%arg0: i32, %arg1: i32) -> (i32, i32, i32) {
    %c0_i32 = arith.constant 0 : i32
    %c0_i32_0 = arith.constant 0 : i32
    %c0_i32_1 = arith.constant 0 : i32
    return %arg0, %c0_i32, %c0_i32_0 : i32, i32, i32
  }
  func.func @transform_7(%arg0: i32, %arg1: i32) -> (i32, i32) {
    %c0_i32 = arith.constant 0 : i32
    %c0_i32_0 = arith.constant 0 : i32
    %c0_i32_1 = arith.constant 0 : i32
    return %c0_i32, %c0_i32_0 : i32, i32
  }
  func.func @transform_8(%arg0: i32, %arg1: i32) -> (i32, i32) {
    %c0_i32 = arith.constant 0 : i32
    %c0_i32_0 = arith.constant 0 : i32
    %c0_i32_1 = arith.constant 0 : i32
    return %c0_i32, %c0_i32_0 : i32, i32
  }
  func.func @transform_9(%arg0: i32, %arg1: i32) -> (i32, i32, i32) {
    %c0_i32 = arith.constant 0 : i32
    %c0_i32_0 = arith.constant 0 : i32
    return %arg0, %arg1, %c0_i32 : i32, i32, i32
  }
  func.func @transform_10(%arg0: i32, %arg1: i32) -> (i32, i32, i32) {
    %c0_i32 = arith.constant 0 : i32
    %c0_i32_0 = arith.constant 0 : i32
    %c0_i32_1 = arith.constant 0 : i32
    return %arg0, %c0_i32, %c0_i32_0 : i32, i32, i32
  }
}

</mosaic_0001>

<llo_original>
// kernel: tpu_custom_call.1
$region0: #{tpu_custom_call.1}
  #allocation0 [shape = 'u32[]', space=smem, size = 0x4, offset = 0x4, fixed_abs, tag = 'smem constant byte address 0x4 - core index']
  #allocation1 [shape = 'u32[144,128]{1,0:T(1,128)}', space=vmem, size = 0x12000, scoped, tag = 'internal scratch']
  #allocation2 [shape = 'f32[256,128]{1,0:T(8,128)}', space=vmem, size = 0x20000, scoped, tag = 'scratch operand']
  #allocation3 [shape = 'f32[256,4]{1,0:T(8,128)}', space=vmem, size = 0x20000, scoped, tag = 'scratch operand']
  #allocation4 [shape = 'f32[4,256]{1,0:T(4,128)}', space=vmem, size = 0x1000, scoped, tag = 'scratch operand']
  %s0 = inlined_call_operand.vmem [shape: f32[256,16], index: 0, kind: input, shape index: {}]
  %s1 = inlined_call_operand.vmem [shape: f32[16,256], index: 1, kind: input, shape index: {}]
  %s2 = inlined_call_operand.hbm [shape: s8[3,256,256], index: 2, kind: input, shape index: {}]
  %s3 = inlined_call_operand.vmem [shape: f32[3,16,128], index: 3, kind: input, shape index: {}]
  %s4 = inlined_call_operand.vmem [shape: f32[3,4,16], index: 4, kind: input, shape index: {}]
  %s5 = inlined_call_operand.vmem [shape: f32[3,16,4], index: 5, kind: input, shape index: {}]
  %s6 = inlined_call_operand.vmem [shape: f32[3,1,128], index: 6, kind: input, shape index: {}]
  %s7 = inlined_call_operand.vmem [shape: f32[128,128], index: 7, kind: input, shape index: {}]
  %s8 = inlined_call_operand.vmem [shape: f32[1,128], index: 8, kind: input, shape index: {}]
  %s9 = inlined_call_operand.hbm [shape: f32[3,256,128], index: 9, kind: output, shape index: {0}]
  %s10 = inlined_call_operand.hbm [shape: f32[3,1,128], index: 10, kind: output, shape index: {1}]
  %11 = xla_tuple %s9, %s10
  %s12 = sld [smem:[#allocation0]]
  $region85: #{tpu_custom_call.1} parent=0
    _
  %s14 = ssub.s32 1, %s12
  %s15 = scalar_select 0, %s14, %s12
  $region1: #{tpu_custom_call.1} parent=0
    #allocation5 [shape = 'u8[65536]{0}', space=vmem, size = 0x10000, scoped, tag = 'input window, operand 2']
    #allocation6 [shape = 's32[2]{0}', space=sflag, size = 0x8, scoped, tag = 'scoped memory for tpu_custom_call.1']
    #allocation7 [shape = 's32[2]{0}', space=sflag, size = 0x8, scoped, tag = 'scoped memory for tpu_custom_call.1']
    #allocation8 [shape = 'u8[131072]{0}', space=vmem, size = 0x20000, scoped, tag = 'output window, operand 0']
    #allocation9 [shape = 'u8[1024]{0}', space=vmem, size = 0x400, scoped, tag = 'output window, operand 1']
    #allocation10 [shape = 's32[2]{0}', space=sflag, size = 0x8, scoped, tag = 'scoped memory for tpu_custom_call.1']
    %16 = vsyncpa [#allocation6], 0
    %s17 = scalar_lea.sflag [#allocation6], 1
    %18 = vsyncpa %s17, 0
    %19 = vsyncpa [#allocation7], 0
    %s20 = scalar_lea.sflag [#allocation7], 1
    %21 = vsyncpa %s20, 0
    %22 = vsyncpa [#allocation10], 0
    %s23 = scalar_lea.sflag [#allocation10], 1
    %24 = vsyncpa %s23, 0
    loop: start=0, step=1, limit=8
    $region2: #{tpu_custom_call.1} parent=1 // loop_pre_header
      _
    $region3: #{tpu_custom_call.1} parent=1 // loop_header
      %s26 = sphi 0, %s30
      %p27 = scmp.ge.s32.totalorder %s26, 8
      %s33 = sphi 0, %s45
      %s34 = sphi 0, %s41
      %s35 = sphi 0, %s33
      %s36 = sphi 0, %s34
      %s37 = sphi 0, %s35
      %s38 = sphi 0, %s36
      %s46 = sphi 0, %s46
      %s48 = sphi 0, %s46
      %s49 = sphi 0, %s48
      %s63 = sphi 0, %s49
      %s67 = sphi 0, %s67
      %s69 = sphi 0, %s67
      %s70 = sphi 0, %s69
      %s84 = sphi 0, %s70
      %s92 = sphi 0, %s94
      %s95 = sphi 0, %s92
      %s96 = sphi 0, %s95
      %s112 = sphi 0, %s96
      %s118 = sphi 0, %s120
      %s121 = sphi 0, %s118
      %s122 = sphi 0, %s121
      %s138 = sphi 0, %s122
      %s144 = sphi 0, %s146
      %s147 = sphi 0, %s144
      %s148 = sphi 0, %s147
      %s164 = sphi 0, %s148
      %s170 = sphi 0, %s172
      %s173 = sphi 0, %s170
      %s174 = sphi 0, %s173
      %s190 = sphi 0, %s174
      %s196 = sphi 0, %s198
      %s199 = sphi 0, %s196
      %s200 = sphi 0, %s199
      %s216 = sphi 0, %s200
      %s220 = sphi 0, %s220
      %s222 = sphi 0, %s220
      %s223 = sphi 0, %s222
      %s237 = sphi 0, %s223
      %s241 = sphi 0, %s241
      %s243 = sphi 0, %s241
      %s244 = sphi 0, %s243
      %s258 = sphi 0, %s244
      %s266 = sphi 0, %s268
      %s269 = sphi 0, %s266
      %s270 = sphi 0, %s269
      %s286 = sphi 0, %s270
      %s292 = sphi 0, %s294
      %s295 = sphi 0, %s292
      %s296 = sphi 0, %s295
      %s312 = sphi 0, %s296
    $region4: #{tpu_custom_call.1} parent=1 // loop_header_branch
      %29 = sbr.rel (%p27) target = $region8
    $region5: #{tpu_custom_call.1} parent=1 // loop_body
      %s31 = ssub.s32 %s26, 1
      %s32 = ssub.s32 %s26, 2
      %s39 = sadd.s32 1, %s34
      %p40 = scmp.ge.s32.totalorder %s39, 2
      %s41 = scalar_select %p40, 0, %s39
      %s42 = sadd.s32 1, %s33
      %s43 = scalar_select %p40, %s42, %s33
      %p44 = scmp.ge.s32.totalorder %s43, 3
      %s45 = scalar_select %p44, 0, %s43
      %s47 = sadd.s32 %s46, 1
      %p50 = scmp.eq.s32.totalorder %s26, 5
      %p51 = scmp.ne.s32.totalorder %s46, %s48
      %p52 = scmp.eq.s32.totalorder %s26, 0
      %p53 = por %p51, %p52
      %p54 = scmp.ne.s32.totalorder %s46, %s48
      %p55 = scmp.eq.s32.totalorder %s31, 5
      %p56 = por %p54, %p55
      %p57 = scmp.ne.s32.totalorder %s48, %s49
      %p58 = scmp.eq.s32.totalorder %s31, 0
      %p59 = por %p57, %p58
      %p60 = scmp.ne.s32.totalorder %s48, %s49
      %p61 = scmp.eq.s32.totalorder %s32, 5
      %p62 = por %p60, %p61
      %p64 = scmp.ne.s32.totalorder %s49, %s63
      %p65 = scmp.eq.s32.totalorder %s32, 0
      %p66 = por %p64, %p65
      %s68 = sadd.s32 %s67, 1
      %p71 = scmp.eq.s32.totalorder %s26, 5
      %p72 = scmp.ne.s32.totalorder %s67, %s69
      %p73 = scmp.eq.s32.totalorder %s26, 0
      %p74 = por %p72, %p73
      %p75 = scmp.ne.s32.totalorder %s67, %s69
      %p76 = scmp.eq.s32.totalorder %s31, 5
      %p77 = por %p75, %p76
      %p78 = scmp.ne.s32.totalorder %s69, %s70
      %p79 = scmp.eq.s32.totalorder %s31, 0
      %p80 = por %p78, %p79
      %p81 = scmp.ne.s32.totalorder %s69, %s70
      %p82 = scmp.eq.s32.totalorder %s32, 5
      %p83 = por %p81, %p82
      %p85 = scmp.ne.s32.totalorder %s70, %s84
      %p86 = scmp.eq.s32.totalorder %s32, 0
      %p87 = por %p85, %p86
      %s88 = ssub.s32 %s33, %s45
      %s89 = ssub.s32 %s34, %s41
      %s90 = sor.u32 %s88, %s89
      %p91 = scmp.eq.s32.totalorder %s90, 0
      %s93 = sadd.s32 %s92, 1
      %s94 = scalar_select %p91, %s92, %s93
      %p97 = pneg %p91
      %p98 = scmp.eq.s32.totalorder %s26, 5
      %p99 = por %p97, %p98
      %p100 = scmp.ne.s32.totalorder %s92, %s95
      %p101 = scmp.eq.s32.totalorder %s26, 0
      %p102 = por %p100, %p101
      %p103 = scmp.ne.s32.totalorder %s92, %s95
      %p104 = scmp.eq.s32.totalorder %s31, 5
      %p105 = por %p103, %p104
      %p106 = scmp.ne.s32.totalorder %s95, %s96
      %p107 = scmp.eq.s32.totalorder %s31, 0
      %p108 = por %p106, %p107
      %p109 = scmp.ne.s32.totalorder %s95, %s96
      %p110 = scmp.eq.s32.totalorder %s32, 5
      %p111 = por %p109, %p110
      %p113 = scmp.ne.s32.totalorder %s96, %s112
      %p114 = scmp.eq.s32.totalorder %s32, 0
      %p115 = por %p113, %p114
      %s116 = ssub.s32 %s33, %s45
      %p117 = scmp.eq.s32.totalorder %s116, 0
      %s119 = sadd.s32 %s118, 1
      %s120 = scalar_select %p117, %s118, %s119
      %p123 = pneg %p117
      %p124 = scmp.eq.s32.totalorder %s26, 5
      %p125 = por %p123, %p124
      %p126 = scmp.ne.s32.totalorder %s118, %s121
      %p127 = scmp.eq.s32.totalorder %s26, 0
      %p128 = por %p126, %p127
      %p129 = scmp.ne.s32.totalorder %s118, %s121
      %p130 = scmp.eq.s32.totalorder %s31, 5
      %p131 = por %p129, %p130
      %p132 = scmp.ne.s32.totalorder %s121, %s122
      %p133 = scmp.eq.s32.totalorder %s31, 0
      %p134 = por %p132, %p133
      %p135 = scmp.ne.s32.totalorder %s121, %s122
      %p136 = scmp.eq.s32.totalorder %s32, 5
      %p137 = por %p135, %p136
      %p139 = scmp.ne.s32.totalorder %s122, %s138
      %p140 = scmp.eq.s32.totalorder %s32, 0
      %p141 = por %p139, %p140
      %s142 = ssub.s32 %s33, %s45
      %p143 = scmp.eq.s32.totalorder %s142, 0
      %s145 = sadd.s32 %s144, 1
      %s146 = scalar_select %p143, %s144, %s145
      %p149 = pneg %p143
      %p150 = scmp.eq.s32.totalorder %s26, 5
      %p151 = por %p149, %p150
      %p152 = scmp.ne.s32.totalorder %s144, %s147
      %p153 = scmp.eq.s32.totalorder %s26, 0
      %p154 = por %p152, %p153
      %p155 = scmp.ne.s32.totalorder %s144, %s147
      %p156 = scmp.eq.s32.totalorder %s31, 5
      %p157 = por %p155, %p156
      %p158 = scmp.ne.s32.totalorder %s147, %s148
      %p159 = scmp.eq.s32.totalorder %s31, 0
      %p160 = por %p158, %p159
      %p161 = scmp.ne.s32.totalorder %s147, %s148
      %p162 = scmp.eq.s32.totalorder %s32, 5
      %p163 = por %p161, %p162
      %p165 = scmp.ne.s32.totalorder %s148, %s164
      %p166 = scmp.eq.s32.totalorder %s32, 0
      %p167 = por %p165, %p166
      %s168 = ssub.s32 %s33, %s45
      %p169 = scmp.eq.s32.totalorder %s168, 0
      %s171 = sadd.s32 %s170, 1
      %s172 = scalar_select %p169, %s170, %s171
      %p175 = pneg %p169
      %p176 = scmp.eq.s32.totalorder %s26, 5
      %p177 = por %p175, %p176
      %p178 = scmp.ne.s32.totalorder %s170, %s173
      %p179 = scmp.eq.s32.totalorder %s26, 0
      %p180 = por %p178, %p179
      %p181 = scmp.ne.s32.totalorder %s170, %s173
      %p182 = scmp.eq.s32.totalorder %s31, 5
      %p183 = por %p181, %p182
      %p184 = scmp.ne.s32.totalorder %s173, %s174
      %p185 = scmp.eq.s32.totalorder %s31, 0
      %p186 = por %p184, %p185
      %p187 = scmp.ne.s32.totalorder %s173, %s174
      %p188 = scmp.eq.s32.totalorder %s32, 5
      %p189 = por %p187, %p188
      %p191 = scmp.ne.s32.totalorder %s174, %s190
      %p192 = scmp.eq.s32.totalorder %s32, 0
      %p193 = por %p191, %p192
      %s194 = ssub.s32 %s33, %s45
      %p195 = scmp.eq.s32.totalorder %s194, 0
      %s197 = sadd.s32 %s196, 1
      %s198 = scalar_select %p195, %s196, %s197
      %p201 = pneg %p195
      %p202 = scmp.eq.s32.totalorder %s26, 5
      %p203 = por %p201, %p202
      %p204 = scmp.ne.s32.totalorder %s196, %s199
      %p205 = scmp.eq.s32.totalorder %s26, 0
      %p206 = por %p204, %p205
      %p207 = scmp.ne.s32.totalorder %s196, %s199
      %p208 = scmp.eq.s32.totalorder %s31, 5
      %p209 = por %p207, %p208
      %p210 = scmp.ne.s32.totalorder %s199, %s200
      %p211 = scmp.eq.s32.totalorder %s31, 0
      %p212 = por %p210, %p211
      %p213 = scmp.ne.s32.totalorder %s199, %s200
      %p214 = scmp.eq.s32.totalorder %s32, 5
      %p215 = por %p213, %p214
      %p217 = scmp.ne.s32.totalorder %s200, %s216
      %p218 = scmp.eq.s32.totalorder %s32, 0
      %p219 = por %p217, %p218
      %s221 = sadd.s32 %s220, 1
      %p224 = scmp.eq.s32.totalorder %s26, 5
      %p225 = scmp.ne.s32.totalorder %s220, %s222
      %p226 = scmp.eq.s32.totalorder %s26, 0
      %p227 = por %p225, %p226
      %p228 = scmp.ne.s32.totalorder %s220, %s222
      %p229 = scmp.eq.s32.totalorder %s31, 5
      %p230 = por %p228, %p229
      %p231 = scmp.ne.s32.totalorder %s222, %s223
      %p232 = scmp.eq.s32.totalorder %s31, 0
      %p233 = por %p231, %p232
      %p234 = scmp.ne.s32.totalorder %s222, %s223
      %p235 = scmp.eq.s32.totalorder %s32, 5
      %p236 = por %p234, %p235
      %p238 = scmp.ne.s32.totalorder %s223, %s237
      %p239 = scmp.eq.s32.totalorder %s32, 0
      %p240 = por %p238, %p239
      %s242 = sadd.s32 %s241, 1
      %p245 = scmp.eq.s32.totalorder %s26, 5
      %p246 = scmp.ne.s32.totalorder %s241, %s243
      %p247 = scmp.eq.s32.totalorder %s26, 0
      %p248 = por %p246, %p247
      %p249 = scmp.ne.s32.totalorder %s241, %s243
      %p250 = scmp.eq.s32.totalorder %s31, 5
      %p251 = por %p249, %p250
      %p252 = scmp.ne.s32.totalorder %s243, %s244
      %p253 = scmp.eq.s32.totalorder %s31, 0
      %p254 = por %p252, %p253
      %p255 = scmp.ne.s32.totalorder %s243, %s244
      %p256 = scmp.eq.s32.totalorder %s32, 5
      %p257 = por %p255, %p256
      %p259 = scmp.ne.s32.totalorder %s244, %s258
      %p260 = scmp.eq.s32.totalorder %s32, 0
      %p261 = por %p259, %p260
      %s262 = ssub.s32 %s33, %s45
      %s263 = ssub.s32 %s34, %s41
      %s264 = sor.u32 %s262, %s263
      %p265 = scmp.eq.s32.totalorder %s264, 0
      %s267 = sadd.s32 %s266, 1
      %s268 = scalar_select %p265, %s266, %s267
      %p271 = pneg %p265
      %p272 = scmp.eq.s32.totalorder %s26, 5
      %p273 = por %p271, %p272
      %p274 = scmp.ne.s32.totalorder %s266, %s269
      %p275 = scmp.eq.s32.totalorder %s26, 0
      %p276 = por %p274, %p275
      %p277 = scmp.ne.s32.totalorder %s266, %s269
      %p278 = scmp.eq.s32.totalorder %s31, 5
      %p279 = por %p277, %p278
      %p280 = scmp.ne.s32.totalorder %s269, %s270
      %p281 = scmp.eq.s32.totalorder %s31, 0
      %p282 = por %p280, %p281
      %p283 = scmp.ne.s32.totalorder %s269, %s270
      %p284 = scmp.eq.s32.totalorder %s32, 5
      %p285 = por %p283, %p284
      %p287 = scmp.ne.s32.totalorder %s270, %s286
      %p288 = scmp.eq.s32.totalorder %s32, 0
      %p289 = por %p287, %p288
      %s290 = ssub.s32 %s33, %s45
      %p291 = scmp.eq.s32.totalorder %s290, 0
      %s293 = sadd.s32 %s292, 1
      %s294 = scalar_select %p291, %s292, %s293
      %p297 = pneg %p291
      %p298 = scmp.eq.s32.totalorder %s26, 5
      %p299 = por %p297, %p298
      %p300 = scmp.ne.s32.totalorder %s292, %s295
      %p301 = scmp.eq.s32.totalorder %s26, 0
      %p302 = por %p300, %p301
      %p303 = scmp.ne.s32.totalorder %s292, %s295
      %p304 = scmp.eq.s32.totalorder %s31, 5
      %p305 = por %p303, %p304
      %p306 = scmp.ne.s32.totalorder %s295, %s296
      %p307 = scmp.eq.s32.totalorder %s31, 0
      %p308 = por %p306, %p307
      %p309 = scmp.ne.s32.totalorder %s295, %s296
      %p310 = scmp.eq.s32.totalorder %s32, 5
      %p311 = por %p309, %p310
      %p313 = scmp.ne.s32.totalorder %s296, %s312
      %p314 = scmp.eq.s32.totalorder %s32, 0
      %p315 = por %p313, %p314
      %p316 = scmp.le.s32.totalorder 1, %s26
      %p317 = scmp.lt.s32.totalorder %s26, 7
      %p318 = pnand %p316, %p317
      %p319 = pneg %p318
      // Predicated region
      $region9: #{tpu_custom_call.1} parent=5 // pred_check
        _
      $region10: #{tpu_custom_call.1} parent=5 // pred_check_branch
        %321 = sbr.rel (%p318) target = $region12
      $region11: #{tpu_custom_call.1} parent=5 // pred_region
        %s322 = ssub.s32 %s26, 1
        // Predicated region
        $region13: #{tpu_custom_call.1} parent=11 // pred_check
          %p323 = pneg %p59
        $region14: #{tpu_custom_call.1} parent=11 // pred_check_branch
          %325 = sbr.rel (%p323) target = $region16
        $region15: #{tpu_custom_call.1} parent=11 // pred_region
          _
        $region16: #{tpu_custom_call.1} parent=11 // pred_fallthru
          _
        // Predicated region
        $region17: #{tpu_custom_call.1} parent=11 // pred_check
          %p326 = pneg %p80
        $region18: #{tpu_custom_call.1} parent=11 // pred_check_branch
          %328 = sbr.rel (%p326) target = $region20
        $region19: #{tpu_custom_call.1} parent=11 // pred_region
          _
        $region20: #{tpu_custom_call.1} parent=11 // pred_fallthru
          _
        // Predicated region
        $region21: #{tpu_custom_call.1} parent=11 // pred_check
          %p329 = pneg %p233
        $region22: #{tpu_custom_call.1} parent=11 // pred_check_branch
          %331 = sbr.rel (%p329) target = $region24
        $region23: #{tpu_custom_call.1} parent=11 // pred_region
          _
        $region24: #{tpu_custom_call.1} parent=11 // pred_fallthru
          _
        // Predicated region
        $region25: #{tpu_custom_call.1} parent=11 // pred_check
          %p332 = pneg %p254
        $region26: #{tpu_custom_call.1} parent=11 // pred_check_branch
          %334 = sbr.rel (%p332) target = $region28
        $region27: #{tpu_custom_call.1} parent=11 // pred_region
          _
        $region28: #{tpu_custom_call.1} parent=11 // pred_fallthru
          _
      $region12: #{tpu_custom_call.1} parent=5 // pred_fallthru
        _
      %p335 = scmp.lt.s32.totalorder %s26, 6
      // Predicated region
      $region29: #{tpu_custom_call.1} parent=5 // pred_check
        %p336 = pneg %p335
      $region30: #{tpu_custom_call.1} parent=5 // pred_check_branch
        %338 = sbr.rel (%p336) target = $region32
      $region31: #{tpu_custom_call.1} parent=5 // pred_region
        // Predicated region
        $region33: #{tpu_custom_call.1} parent=31 // pred_check
          %p339 = pneg %p102
        $region34: #{tpu_custom_call.1} parent=31 // pred_check_branch
          %341 = sbr.rel (%p339) target = $region36
        $region35: #{tpu_custom_call.1} parent=31 // pred_region
          %s342 = sand.u32 %s92, 1
          %s343 = scalar_lea.sflag [#allocation6], %s342
          %s344 = sand.u32 %s92, 1
          %s345 = smul.addr %s344, 64
          %s346 = scalar_lea.vmem [#allocation5], %s345
          %s347 = smul.u32 4, %s34
          %s349 = ssub.s32 1024, 1024
          %350 = vsyncadd %s343, %s349
          %s351 = smul.addr %s347, 2
          %s352 = smul.addr %s33, 16
          %s353 = sadd.s32 %s351, %s352
          %s354 = smul.addr %s353, 128
          %s355 = scalar_lea.hbm %s2, %s354
          %s356 = sshll.u32 %s346, 4
          %s357 = int_to_ptr.vmem [resolvable:$true] %s356
          %362 = dma.hbm_to_vmem [thread:$0]  %s355, 1024, %s357, %s343, 256, 256, 16
        $region36: #{tpu_custom_call.1} parent=31 // pred_fallthru
          _
        // Predicated region
        $region37: #{tpu_custom_call.1} parent=31 // pred_check
          %p363 = pneg %p128
        $region38: #{tpu_custom_call.1} parent=31 // pred_check_branch
          %365 = sbr.rel (%p363) target = $region40
        $region39: #{tpu_custom_call.1} parent=31 // pred_region
          %p366 = scmp.lt.s32.totalorder %s33, 2
          %s367 = scalar_select %p366, %s33, 2
          %s368 = smul.addr %s367, 2
          %s369 = smul.addr %s368, 8
          %s370 = scalar_lea.vmem %s3, %s369
        $region40: #{tpu_custom_call.1} parent=31 // pred_fallthru
          _
        // Predicated region
        $region41: #{tpu_custom_call.1} parent=31 // pred_check
          %p371 = pneg %p154
        $region42: #{tpu_custom_call.1} parent=31 // pred_check_branch
          %373 = sbr.rel (%p371) target = $region44
        $region43: #{tpu_custom_call.1} parent=31 // pred_region
          %p374 = scmp.lt.s32.totalorder %s33, 2
          %s375 = scalar_select %p374, %s33, 2
          %s376 = smul.addr %s375, 4
          %s377 = scalar_lea.vmem %s4, %s376
        $region44: #{tpu_custom_call.1} parent=31 // pred_fallthru
          _
        // Predicated region
        $region45: #{tpu_custom_call.1} parent=31 // pred_check
          %p378 = pneg %p180
        $region46: #{tpu_custom_call.1} parent=31 // pred_check_branch
          %380 = sbr.rel (%p378) target = $region48
        $region47: #{tpu_custom_call.1} parent=31 // pred_region
          %p381 = scmp.lt.s32.totalorder %s33, 2
          %s382 = scalar_select %p381, %s33, 2
          %s383 = smul.addr %s382, 2
          %s384 = smul.addr %s383, 8
          %s385 = scalar_lea.vmem %s5, %s384
        $region48: #{tpu_custom_call.1} parent=31 // pred_fallthru
          _
        // Predicated region
        $region49: #{tpu_custom_call.1} parent=31 // pred_check
          %p386 = pneg %p206
        $region50: #{tpu_custom_call.1} parent=31 // pred_check_branch
          %388 = sbr.rel (%p386) target = $region52
        $region51: #{tpu_custom_call.1} parent=31 // pred_region
          %p389 = scmp.lt.s32.totalorder %s33, 2
          %s390 = scalar_select %p389, %s33, 2
          %s391 = scalar_lea.vmem %s6, %s390
        $region52: #{tpu_custom_call.1} parent=31 // pred_fallthru
          _
      $region32: #{tpu_custom_call.1} parent=5 // pred_fallthru
        _
      %p392 = scmp.le.s32.totalorder 1, %s26
      %p393 = scmp.lt.s32.totalorder %s26, 7
      %p394 = pnand %p392, %p393
      %p395 = pneg %p394
      // Predicated region
      $region53: #{tpu_custom_call.1} parent=5 // pred_check
        _
      $region54: #{tpu_custom_call.1} parent=5 // pred_check_branch
        %397 = sbr.rel (%p394) target = $region56
      $region55: #{tpu_custom_call.1} parent=5 // pred_region
        %s398 = ssub.s32 %s26, 1
        %s399 = sand.u32 %s95, 1
        %s400 = scalar_lea.sflag [#allocation6], %s399
        %s401 = sand.u32 %s95, 1
        %s402 = smul.addr %s401, 64
        %s403 = scalar_lea.vmem [#allocation5], %s402
        // Predicated region
        $region57: #{tpu_custom_call.1} parent=55 // pred_check
          %p404 = pneg %p108
        $region58: #{tpu_custom_call.1} parent=55 // pred_check_branch
          %406 = sbr.rel (%p404) target = $region60
        $region59: #{tpu_custom_call.1} parent=55 // pred_region
          %407 = dma.done %s400, 1024
        $region60: #{tpu_custom_call.1} parent=55 // pred_fallthru
          _
        %p408 = pneg %p59
        %p409 = pneg %p56
        %p410 = pneg %p80
        %p411 = pneg %p77
        %s412 = sand.u32 %s95, 1
        %s413 = scalar_lea.sflag [#allocation6], %s412
        %s414 = sand.u32 %s95, 1
        %s415 = smul.addr %s414, 64
        %s416 = scalar_lea.vmem [#allocation5], %s415
        %p417 = pneg %p108
        %p418 = pneg %p105
        %p419 = scmp.lt.s32.totalorder %s35, 2
        %s420 = scalar_select %p419, %s35, 2
        %s421 = smul.addr %s420, 2
        %s422 = smul.addr %s421, 8
        %s423 = scalar_lea.vmem %s3, %s422
        %p424 = pneg %p134
        %p425 = pneg %p131
        %p426 = scmp.lt.s32.totalorder %s35, 2
        %s427 = scalar_select %p426, %s35, 2
        %s428 = smul.addr %s427, 4
        %s429 = scalar_lea.vmem %s4, %s428
        %p430 = pneg %p160
        %p431 = pneg %p157
        %p432 = scmp.lt.s32.totalorder %s35, 2
        %s433 = scalar_select %p432, %s35, 2
        %s434 = smul.addr %s433, 2
        %s435 = smul.addr %s434, 8
        %s436 = scalar_lea.vmem %s5, %s435
        %p437 = pneg %p186
        %p438 = pneg %p183
        %p439 = scmp.lt.s32.totalorder %s35, 2
        %s440 = scalar_select %p439, %s35, 2
        %s441 = scalar_lea.vmem %s6, %s440
        %p442 = pneg %p212
        %p443 = pneg %p209
        %p444 = pneg %p233
        %p445 = pneg %p230
        %p446 = pneg %p254
        %p447 = pneg %p251
        %p448 = pneg %p282
        %p449 = pneg %p279
        %s450 = sand.u32 %s269, 1
        %s451 = scalar_lea.sflag [#allocation7], %s450
        %s452 = sand.u32 %s269, 1
        %s453 = smul.addr %s452, 128
        %s454 = scalar_lea.vmem [#allocation8], %s453
        %p455 = pneg %p308
        %p456 = pneg %p305
        %s457 = sand.u32 %s295, 1
        %s458 = scalar_lea.sflag [#allocation10], %s457
        %s459 = sand.u32 %s295, 1
        %s460 = scalar_lea.vmem [#allocation9], %s459
        %s461 = smul.u32 4, %s36
        %p462 = scmp.lt.s32.totalorder %s35, 2
        %s463 = scalar_select %p462, %s35, 2
        %s464 = smul.addr %s463, 2
        %s465 = smul.addr %s464, 8
        %s466 = scalar_lea.vmem %s3, %s465
        %p467 = scmp.lt.s32.totalorder %s35, 2
        %s468 = scalar_select %p467, %s35, 2
        %s469 = smul.addr %s468, 4
        %s470 = scalar_lea.vmem %s4, %s469
        %p471 = scmp.lt.s32.totalorder %s35, 2
        %s472 = scalar_select %p471, %s35, 2
        %s473 = smul.addr %s472, 2
        %s474 = smul.addr %s473, 8
        %s475 = scalar_lea.vmem %s5, %s474
        %p476 = scmp.lt.s32.totalorder %s35, 2
        %s477 = scalar_select %p476, %s35, 2
        %s478 = scalar_lea.vmem %s6, %s477
        %s479 = smul.u32 16, %s36
        %p480 = scmp.eq.s32.totalorder %s36, 0
        // Predicated region
        $region61: #{tpu_custom_call.1} parent=55 // pred_check
          %p481 = pneg %p480
        $region62: #{tpu_custom_call.1} parent=55 // pred_check_branch
          %483 = sbr.rel (%p481) target = $region64
        $region63: #{tpu_custom_call.1} parent=55 // pred_region
          %v484 = vld [vmem:[%s0] sm:$0xff]
          %v485 = vld [vmem:[%s0 + $0x8] sm:$0xff]
          %v486 = vld [vmem:[%s0 + $0x10] sm:$0xff]
          %v487 = vld [vmem:[%s0 + $0x18] sm:$0xff]
          %v488 = vld [vmem:[%s0 + $0x20] sm:$0xff]
          %v489 = vld [vmem:[%s0 + $0x28] sm:$0xff]
          %v490 = vld [vmem:[%s0 + $0x30] sm:$0xff]
          %v491 = vld [vmem:[%s0 + $0x38] sm:$0xff]
          %v492 = vld [vmem:[%s0 + $0x40] sm:$0xff]
          %v493 = vld [vmem:[%s0 + $0x48] sm:$0xff]
          %v494 = vld [vmem:[%s0 + $0x50] sm:$0xff]
          %v495 = vld [vmem:[%s0 + $0x58] sm:$0xff]
          %v496 = vld [vmem:[%s0 + $0x60] sm:$0xff]
          %v497 = vld [vmem:[%s0 + $0x68] sm:$0xff]
          %v498 = vld [vmem:[%s0 + $0x70] sm:$0xff]
          %v499 = vld [vmem:[%s0 + $0x78] sm:$0xff]
          %v500 = vld [vmem:[%s0 + $0x80] sm:$0xff]
          %v501 = vld [vmem:[%s0 + $0x88] sm:$0xff]
          %v502 = vld [vmem:[%s0 + $0x90] sm:$0xff]
          %v503 = vld [vmem:[%s0 + $0x98] sm:$0xff]
          %v504 = vld [vmem:[%s0 + $0xa0] sm:$0xff]
          %v505 = vld [vmem:[%s0 + $0xa8] sm:$0xff]
          %v506 = vld [vmem:[%s0 + $0xb0] sm:$0xff]
          %v507 = vld [vmem:[%s0 + $0xb8] sm:$0xff]
          %v508 = vld [vmem:[%s0 + $0xc0] sm:$0xff]
          %v509 = vld [vmem:[%s0 + $0xc8] sm:$0xff]
          %v510 = vld [vmem:[%s0 + $0xd0] sm:$0xff]
          %v511 = vld [vmem:[%s0 + $0xd8] sm:$0xff]
          %v512 = vld [vmem:[%s0 + $0xe0] sm:$0xff]
          %v513 = vld [vmem:[%s0 + $0xe8] sm:$0xff]
          %v514 = vld [vmem:[%s0 + $0xf0] sm:$0xff]
          %v515 = vld [vmem:[%s0 + $0xf8] sm:$0xff]
          %v516 = vld [vmem:[%s466] sm:$0xff]
          %v517 = vld [vmem:[%s466 + $0x8] sm:$0xff]
          %vm518 = vcmask 130048
          %v520 = vsel %vm518, %v484, 0
          %v523 = vsel %vm518, %v485, 0
          %v526 = vsel %vm518, %v486, 0
          %v529 = vsel %vm518, %v487, 0
          %v532 = vsel %vm518, %v488, 0
          %v535 = vsel %vm518, %v489, 0
          %v538 = vsel %vm518, %v490, 0
          %v541 = vsel %vm518, %v491, 0
          %v544 = vsel %vm518, %v492, 0
          %v547 = vsel %vm518, %v493, 0
          %v550 = vsel %vm518, %v494, 0
          %v553 = vsel %vm518, %v495, 0
          %v556 = vsel %vm518, %v496, 0
          %v559 = vsel %vm518, %v497, 0
          %v562 = vsel %vm518, %v498, 0
          %v565 = vsel %vm518, %v499, 0
          %v568 = vsel %vm518, %v500, 0
          %v571 = vsel %vm518, %v501, 0
          %v574 = vsel %vm518, %v502, 0
          %v577 = vsel %vm518, %v503, 0
          %v580 = vsel %vm518, %v504, 0
          %v583 = vsel %vm518, %v505, 0
          %v586 = vsel %vm518, %v506, 0
          %v589 = vsel %vm518, %v507, 0
          %v592 = vsel %vm518, %v508, 0
          %v595 = vsel %vm518, %v509, 0
          %v598 = vsel %vm518, %v510, 0
          %v601 = vsel %vm518, %v511, 0
          %v604 = vsel %vm518, %v512, 0
          %v607 = vsel %vm518, %v513, 0
          %v610 = vsel %vm518, %v514, 0
          %v613 = vsel %vm518, %v515, 0
          %615 = vmatprep.subr.mxu0 0.0
          %616 = vmatpush1.msra.mxu0 %v516
          %617 = vmatprep.subr.mxu0 0.0
          %618 = vmatpush1.msra.mxu0 %v517
          %619 = vmatprep.subr.mxu0 0.0
          %620 = vmatpush1.msra.mxu0 0.0
          %621 = vmatprep.subr.mxu0 0.0
          %622 = vmatpush1.msra.mxu0 0.0
          %623 = vmatprep.subr.mxu0 0.0
          %624 = vmatpush1.msra.mxu0 0.0
          %625 = vmatprep.subr.mxu0 0.0
          %626 = vmatpush1.msra.mxu0 0.0
          %627 = vmatprep.subr.mxu0 0.0
          %628 = vmatpush1.msra.mxu0 0.0
          %629 = vmatprep.subr.mxu0 0.0
          %630 = vmatpush1.msra.mxu0 0.0
          %631 = vmatprep.subr.mxu0 0.0
          %632 = vmatpush1.msra.mxu0 0.0
          %633 = vmatprep.subr.mxu0 0.0
          %634 = vmatpush1.msra.mxu0 0.0
          %635 = vmatprep.subr.mxu0 0.0
          %636 = vmatpush1.msra.mxu0 0.0
          %637 = vmatprep.subr.mxu0 0.0
          %638 = vmatpush1.msra.mxu0 0.0
          %639 = vmatprep.subr.mxu0 0.0
          %640 = vmatpush1.msra.mxu0 0.0
          %641 = vmatprep.subr.mxu0 0.0
          %642 = vmatpush1.msra.mxu0 0.0
          %643 = vmatprep.subr.mxu0 0.0
          %644 = vmatpush1.msra.mxu0 0.0
          %645 = vmatprep.subr.mxu0 0.0
          %646 = vmatpush1.msra.mxu0 0.0
          %647 = vmatprep.subr.mxu0 0.0
          %648 = vmatpush1.msra.mxu0 0.0
          %649 = vmatprep.subr.mxu0 0.0
          %650 = vmatpush1.msra.mxu0 0.0
          %651 = vmatprep.subr.mxu0 0.0
          %652 = vmatpush1.msra.mxu0 0.0
          %653 = vmatprep.subr.mxu0 0.0
          %654 = vmatpush1.msra.mxu0 0.0
          %655 = vmatprep.subr.mxu0 0.0
          %656 = vmatpush1.msra.mxu0 0.0
          %657 = vmatprep.subr.mxu0 0.0
          %658 = vmatpush1.msra.mxu0 0.0
          %659 = vmatprep.subr.mxu0 0.0
          %660 = vmatpush1.msra.mxu0 0.0
          %661 = vmatprep.subr.mxu0 0.0
          %662 = vmatpush1.msra.mxu0 0.0
          %663 = vmatprep.subr.mxu0 0.0
          %664 = vmatpush1.msra.mxu0 0.0
          %665 = vmatprep.subr.mxu0 0.0
          %666 = vmatpush1.msra.mxu0 0.0
          %667 = vmatprep.subr.mxu0 0.0
          %668 = vmatpush1.msra.mxu0 0.0
          %669 = vmatprep.subr.mxu0 0.0
          %670 = vmatpush1.msra.mxu0 0.0
          %671 = vmatprep.subr.mxu0 0.0
          %672 = vmatpush1.msra.mxu0 0.0
          %673 = vmatprep.subr.mxu0 0.0
          %674 = vmatpush1.msra.mxu0 0.0
          %675 = vmatprep.subr.mxu0 0.0
          %676 = vmatpush1.msra.mxu0 0.0
          %677 = vmatprep.subr.mxu0 0.0
          %678 = vmatpush1.msra.mxu0 0.0
          %679 = vmatprep.mubr.f32.mxu0 0.0
          %680 = vmatmul.mubr.f32.gmra.mrb[0].mxu0 %v520
          %v681 = vpop.f32.mrb[0].mxu0
          %v682 = vadd.f32 0.0, %v681
          %v683 = vpop.f32.mrb[0].mxu0
          %684 = vmatprep.mubr.f32.mxu0 0.0
          %685 = vmatmul.mubr.f32.gmra.mrb[0].mxu0 %v523
          %v686 = vpop.f32.mrb[0].mxu0
          %v687 = vadd.f32 0.0, %v686
          %v688 = vpop.f32.mrb[0].mxu0
          %689 = vmatprep.mubr.f32.mxu0 0.0
          %690 = vmatmul.mubr.f32.gmra.mrb[0].mxu0 %v526
          %v691 = vpop.f32.mrb[0].mxu0
          %v692 = vadd.f32 0.0, %v691
          %v693 = vpop.f32.mrb[0].mxu0
          %694 = vmatprep.mubr.f32.mxu0 0.0
          %695 = vmatmul.mubr.f32.gmra.mrb[0].mxu0 %v529
          %v696 = vpop.f32.mrb[0].mxu0
          %v697 = vadd.f32 0.0, %v696
          %v698 = vpop.f32.mrb[0].mxu0
          %699 = vmatprep.mubr.f32.mxu0 0.0
          %700 = vmatmul.mubr.f32.gmra.mrb[0].mxu0 %v532
          %v701 = vpop.f32.mrb[0].mxu0
          %v702 = vadd.f32 0.0, %v701
          %v703 = vpop.f32.mrb[0].mxu0
          %704 = vmatprep.mubr.f32.mxu0 0.0
          %705 = vmatmul.mubr.f32.gmra.mrb[0].mxu0 %v535
          %v706 = vpop.f32.mrb[0].mxu0
          %v707 = vadd.f32 0.0, %v706
          %v708 = vpop.f32.mrb[0].mxu0
          %709 = vmatprep.mubr.f32.mxu0 0.0
          %710 = vmatmul.mubr.f32.gmra.mrb[0].mxu0 %v538
          %v711 = vpop.f32.mrb[0].mxu0
          %v712 = vadd.f32 0.0, %v711
          %v713 = vpop.f32.mrb[0].mxu0
          %714 = vmatprep.mubr.f32.mxu0 0.0
          %715 = vmatmul.mubr.f32.gmra.mrb[0].mxu0 %v541
          %v716 = vpop.f32.mrb[0].mxu0
          %v717 = vadd.f32 0.0, %v716
          %v718 = vpop.f32.mrb[0].mxu0
          %719 = vmatprep.mubr.f32.mxu0 0.0
          %720 = vmatmul.mubr.f32.gmra.mrb[0].mxu0 %v544
          %v721 = vpop.f32.mrb[0].mxu0
          %v722 = vadd.f32 0.0, %v721
          %v723 = vpop.f32.mrb[0].mxu0
          %724 = vmatprep.mubr.f32.mxu0 0.0
          %725 = vmatmul.mubr.f32.gmra.mrb[0].mxu0 %v547
          %v726 = vpop.f32.mrb[0].mxu0
          %v727 = vadd.f32 0.0, %v726
          %v728 = vpop.f32.mrb[0].mxu0
          %729 = vmatprep.mubr.f32.mxu0 0.0
          %730 = vmatmul.mubr.f32.gmra.mrb[0].mxu0 %v550
          %v731 = vpop.f32.mrb[0].mxu0
          %v732 = vadd.f32 0.0, %v731
          %v733 = vpop.f32.mrb[0].mxu0
          %734 = vmatprep.mubr.f32.mxu0 0.0
          %735 = vmatmul.mubr.f32.gmra.mrb[0].mxu0 %v553
          %v736 = vpop.f32.mrb[0].mxu0
          %v737 = vadd.f32 0.0, %v736
          %v738 = vpop.f32.mrb[0].mxu0
          %739 = vmatprep.mubr.f32.mxu0 0.0
          %740 = vmatmul.mubr.f32.gmra.mrb[0].mxu0 %v556
          %v741 = vpop.f32.mrb[0].mxu0
          %v742 = vadd.f32 0.0, %v741
          %v743 = vpop.f32.mrb[0].mxu0
          %744 = vmatprep.mubr.f32.mxu0 0.0
          %745 = vmatmul.mubr.f32.gmra.mrb[0].mxu0 %v559
          %v746 = vpop.f32.mrb[0].mxu0
          %v747 = vadd.f32 0.0, %v746
          %v748 = vpop.f32.mrb[0].mxu0
          %749 = vmatprep.mubr.f32.mxu0 0.0
          %750 = vmatmul.mubr.f32.gmra.mrb[0].mxu0 %v562
          %v751 = vpop.f32.mrb[0].mxu0
          %v752 = vadd.f32 0.0, %v751
          %v753 = vpop.f32.mrb[0].mxu0
          %754 = vmatprep.mubr.f32.mxu0 0.0
          %755 = vmatmul.mubr.f32.gmra.mrb[0].mxu0 %v565
          %v756 = vpop.f32.mrb[0].mxu0
          %v757 = vadd.f32 0.0, %v756
          %v758 = vpop.f32.mrb[0].mxu0
          %759 = vmatprep.mubr.f32.mxu0 0.0
          %760 = vmatmul.mubr.f32.gmra.mrb[0].mxu0 %v568
          %v761 = vpop.f32.mrb[0].mxu0
          %v762 = vadd.f32 0.0, %v761
          %v763 = vpop.f32.mrb[0].mxu0
          %764 = vmatprep.mubr.f32.mxu0 0.0
          %765 = vmatmul.mubr.f32.gmra.mrb[0].mxu0 %v571
          %v766 = vpop.f32.mrb[0].mxu0
          %v767 = vadd.f32 0.0, %v766
          %v768 = vpop.f32.mrb[0].mxu0
          %769 = vmatprep.mubr.f32.mxu0 0.0
          %770 = vmatmul.mubr.f32.gmra.mrb[0].mxu0 %v574
          %v771 = vpop.f32.mrb[0].mxu0
          %v772 = vadd.f32 0.0, %v771
          %v773 = vpop.f32.mrb[0].mxu0
          %774 = vmatprep.mubr.f32.mxu0 0.0
          %775 = vmatmul.mubr.f32.gmra.mrb[0].mxu0 %v577
          %v776 = vpop.f32.mrb[0].mxu0
          %v777 = vadd.f32 0.0, %v776
          %v778 = vpop.f32.mrb[0].mxu0
          %779 = vmatprep.mubr.f32.mxu0 0.0
          %780 = vmatmul.mubr.f32.gmra.mrb[0].mxu0 %v580
          %v781 = vpop.f32.mrb[0].mxu0
          %v782 = vadd.f32 0.0, %v781
          %v783 = vpop.f32.mrb[0].mxu0
          %784 = vmatprep.mubr.f32.mxu0 0.0
          %785 = vmatmul.mubr.f32.gmra.mrb[0].mxu0 %v583
          %v786 = vpop.f32.mrb[0].mxu0
          %v787 = vadd.f32 0.0, %v786
          %v788 = vpop.f32.mrb[0].mxu0
          %789 = vmatprep.mubr.f32.mxu0 0.0
          %790 = vmatmul.mubr.f32.gmra.mrb[0].mxu0 %v586
          %v791 = vpop.f32.mrb[0].mxu0
          %v792 = vadd.f32 0.0, %v791
          %v793 = vpop.f32.mrb[0].mxu0
          %794 = vmatprep.mubr.f32.mxu0 0.0
          %795 = vmatmul.mubr.f32.gmra.mrb[0].mxu0 %v589
          %v796 = vpop.f32.mrb[0].mxu0
          %v797 = vadd.f32 0.0, %v796
          %v798 = vpop.f32.mrb[0].mxu0
          %799 = vmatprep.mubr.f32.mxu0 0.0
          %800 = vmatmul.mubr.f32.gmra.mrb[0].mxu0 %v592
          %v801 = vpop.f32.mrb[0].mxu0
          %v802 = vadd.f32 0.0, %v801
          %v803 = vpop.f32.mrb[0].mxu0
          %804 = vmatprep.mubr.f32.mxu0 0.0
          %805 = vmatmul.mubr.f32.gmra.mrb[0].mxu0 %v595
          %v806 = vpop.f32.mrb[0].mxu0
          %v807 = vadd.f32 0.0, %v806
          %v808 = vpop.f32.mrb[0].mxu0
          %809 = vmatprep.mubr.f32.mxu0 0.0
          %810 = vmatmul.mubr.f32.gmra.mrb[0].mxu0 %v598
          %v811 = vpop.f32.mrb[0].mxu0
          %v812 = vadd.f32 0.0, %v811
          %v813 = vpop.f32.mrb[0].mxu0
          %814 = vmatprep.mubr.f32.mxu0 0.0
          %815 = vmatmul.mubr.f32.gmra.mrb[0].mxu0 %v601
          %v816 = vpop.f32.mrb[0].mxu0
          %v817 = vadd.f32 0.0, %v816
          %v818 = vpop.f32.mrb[0].mxu0
          %819 = vmatprep.mubr.f32.mxu0 0.0
          %820 = vmatmul.mubr.f32.gmra.mrb[0].mxu0 %v604
          %v821 = vpop.f32.mrb[0].mxu0
          %v822 = vadd.f32 0.0, %v821
          %v823 = vpop.f32.mrb[0].mxu0
          %824 = vmatprep.mubr.f32.mxu0 0.0
          %825 = vmatmul.mubr.f32.gmra.mrb[0].mxu0 %v607
          %v826 = vpop.f32.mrb[0].mxu0
          %v827 = vadd.f32 0.0, %v826
          %v828 = vpop.f32.mrb[0].mxu0
          %829 = vmatprep.mubr.f32.mxu0 0.0
          %830 = vmatmul.mubr.f32.gmra.mrb[0].mxu0 %v610
          %v831 = vpop.f32.mrb[0].mxu0
          %v832 = vadd.f32 0.0, %v831
          %v833 = vpop.f32.mrb[0].mxu0
          %834 = vmatprep.mubr.f32.mxu0 0.0
          %835 = vmatmul.mubr.f32.gmra.mrb[0].mxu0 %v613
          %v836 = vpop.f32.mrb[0].mxu0
          %v837 = vadd.f32 0.0, %v836
          %v838 = vpop.f32.mrb[0].mxu0
          %839 = vdwg.mxu0
          %840 = vst [vmem:[#allocation2] sm:$0xff] %v682
          %841 = vst [vmem:[#allocation2 + $0x8] sm:$0xff] %v687
          %842 = vst [vmem:[#allocation2 + $0x10] sm:$0xff] %v692
          %843 = vst [vmem:[#allocation2 + $0x18] sm:$0xff] %v697
          %844 = vst [vmem:[#allocation2 + $0x20] sm:$0xff] %v702
          %845 = vst [vmem:[#allocation2 + $0x28] sm:$0xff] %v707
          %846 = vst [vmem:[#allocation2 + $0x30] sm:$0xff] %v712
          %847 = vst [vmem:[#allocation2 + $0x38] sm:$0xff] %v717
          %848 = vst [vmem:[#allocation2 + $0x40] sm:$0xff] %v722
          %849 = vst [vmem:[#allocation2 + $0x48] sm:$0xff] %v727
          %850 = vst [vmem:[#allocation2 + $0x50] sm:$0xff] %v732
          %851 = vst [vmem:[#allocation2 + $0x58] sm:$0xff] %v737
          %852 = vst [vmem:[#allocation2 + $0x60] sm:$0xff] %v742
          %853 = vst [vmem:[#allocation2 + $0x68] sm:$0xff] %v747
          %854 = vst [vmem:[#allocation2 + $0x70] sm:$0xff] %v752
          %855 = vst [vmem:[#allocation2 + $0x78] sm:$0xff] %v757
          %856 = vst [vmem:[#allocation2 + $0x80] sm:$0xff] %v762
          %857 = vst [vmem:[#allocation2 + $0x88] sm:$0xff] %v767
          %858 = vst [vmem:[#allocation2 + $0x90] sm:$0xff] %v772
          %859 = vst [vmem:[#allocation2 + $0x98] sm:$0xff] %v777
          %860 = vst [vmem:[#allocation2 + $0xa0] sm:$0xff] %v782
          %861 = vst [vmem:[#allocation2 + $0xa8] sm:$0xff] %v787
          %862 = vst [vmem:[#allocation2 + $0xb0] sm:$0xff] %v792
          %863 = vst [vmem:[#allocation2 + $0xb8] sm:$0xff] %v797
          %864 = vst [vmem:[#allocation2 + $0xc0] sm:$0xff] %v802
          %865 = vst [vmem:[#allocation2 + $0xc8] sm:$0xff] %v807
          %866 = vst [vmem:[#allocation2 + $0xd0] sm:$0xff] %v812
          %867 = vst [vmem:[#allocation2 + $0xd8] sm:$0xff] %v817
          %868 = vst [vmem:[#allocation2 + $0xe0] sm:$0xff] %v822
          %869 = vst [vmem:[#allocation2 + $0xe8] sm:$0xff] %v827
          %870 = vst [vmem:[#allocation2 + $0xf0] sm:$0xff] %v832
          %871 = vst [vmem:[#allocation2 + $0xf8] sm:$0xff] %v837
          %v872 = vld [vmem:[%s475] sm:$0xff]
          %v873 = vld [vmem:[%s475 + $0x8] sm:$0xff]
          %874 = vmatprep.subr.mxu0 0.0
          %875 = vmatpush1.msra.mxu0 %v872
          %876 = vmatprep.subr.mxu0 0.0
          %877 = vmatpush1.msra.mxu0 %v873
          %878 = vmatprep.subr.mxu0 0.0
          %879 = vmatpush1.msra.mxu0 0.0
          %880 = vmatprep.subr.mxu0 0.0
          %881 = vmatpush1.msra.mxu0 0.0
          %882 = vmatprep.subr.mxu0 0.0
          %883 = vmatpush1.msra.mxu0 0.0
          %884 = vmatprep.subr.mxu0 0.0
          %885 = vmatpush1.msra.mxu0 0.0
          %886 = vmatprep.subr.mxu0 0.0
          %887 = vmatpush1.msra.mxu0 0.0
          %888 = vmatprep.subr.mxu0 0.0
          %889 = vmatpush1.msra.mxu0 0.0
          %890 = vmatprep.subr.mxu0 0.0
          %891 = vmatpush1.msra.mxu0 0.0
          %892 = vmatprep.subr.mxu0 0.0
          %893 = vmatpush1.msra.mxu0 0.0
          %894 = vmatprep.subr.mxu0 0.0
          %895 = vmatpush1.msra.mxu0 0.0
          %896 = vmatprep.subr.mxu0 0.0
          %897 = vmatpush1.msra.mxu0 0.0
          %898 = vmatprep.subr.mxu0 0.0
          %899 = vmatpush1.msra.mxu0 0.0
          %900 = vmatprep.subr.mxu0 0.0
          %901 = vmatpush1.msra.mxu0 0.0
          %902 = vmatprep.subr.mxu0 0.0
          %903 = vmatpush1.msra.mxu0 0.0
          %904 = vmatprep.subr.mxu0 0.0
          %905 = vmatpush1.msra.mxu0 0.0
          %906 = vmatprep.subr.mxu0 0.0
          %907 = vmatpush1.msra.mxu0 0.0
          %908 = vmatprep.subr.mxu0 0.0
          %909 = vmatpush1.msra.mxu0 0.0
          %910 = vmatprep.subr.mxu0 0.0
          %911 = vmatpush1.msra.mxu0 0.0
          %912 = vmatprep.subr.mxu0 0.0
          %913 = vmatpush1.msra.mxu0 0.0
          %914 = vmatprep.subr.mxu0 0.0
          %915 = vmatpush1.msra.mxu0 0.0
          %916 = vmatprep.subr.mxu0 0.0
          %917 = vmatpush1.msra.mxu0 0.0
          %918 = vmatprep.subr.mxu0 0.0
          %919 = vmatpush1.msra.mxu0 0.0
          %920 = vmatprep.subr.mxu0 0.0
          %921 = vmatpush1.msra.mxu0 0.0
          %922 = vmatprep.subr.mxu0 0.0
          %923 = vmatpush1.msra.mxu0 0.0
          %924 = vmatprep.subr.mxu0 0.0
          %925 = vmatpush1.msra.mxu0 0.0
          %926 = vmatprep.subr.mxu0 0.0
          %927 = vmatpush1.msra.mxu0 0.0
          %928 = vmatprep.subr.mxu0 0.0
          %929 = vmatpush1.msra.mxu0 0.0
          %930 = vmatprep.subr.mxu0 0.0
          %931 = vmatpush1.msra.mxu0 0.0
          %932 = vmatprep.subr.mxu0 0.0
          %933 = vmatpush1.msra.mxu0 0.0
          %934 = vmatprep.subr.mxu0 0.0
          %935 = vmatpush1.msra.mxu0 0.0
          %936 = vmatprep.subr.mxu0 0.0
          %937 = vmatpush1.msra.mxu0 0.0
          %938 = vmatprep.mubr.f32.mxu0 0.0
          %939 = vmatmul.mubr.f32.gmra.mrb[0].mxu0 %v520
          %v940 = vpop.f32.mrb[0].mxu0
          %v941 = vadd.f32 0.0, %v940
          %v942 = vpop.f32.mrb[0].mxu0
          %943 = vmatprep.mubr.f32.mxu0 0.0
          %944 = vmatmul.mubr.f32.gmra.mrb[0].mxu0 %v523
          %v945 = vpop.f32.mrb[0].mxu0
          %v946 = vadd.f32 0.0, %v945
          %v947 = vpop.f32.mrb[0].mxu0
          %948 = vmatprep.mubr.f32.mxu0 0.0
          %949 = vmatmul.mubr.f32.gmra.mrb[0].mxu0 %v526
          %v950 = vpop.f32.mrb[0].mxu0
          %v951 = vadd.f32 0.0, %v950
          %v952 = vpop.f32.mrb[0].mxu0
          %953 = vmatprep.mubr.f32.mxu0 0.0
          %954 = vmatmul.mubr.f32.gmra.mrb[0].mxu0 %v529
          %v955 = vpop.f32.mrb[0].mxu0
          %v956 = vadd.f32 0.0, %v955
          %v957 = vpop.f32.mrb[0].mxu0
          %958 = vmatprep.mubr.f32.mxu0 0.0
          %959 = vmatmul.mubr.f32.gmra.mrb[0].mxu0 %v532
          %v960 = vpop.f32.mrb[0].mxu0
          %v961 = vadd.f32 0.0, %v960
          %v962 = vpop.f32.mrb[0].mxu0
          %963 = vmatprep.mubr.f32.mxu0 0.0
          %964 = vmatmul.mubr.f32.gmra.mrb[0].mxu0 %v535
          %v965 = vpop.f32.mrb[0].mxu0
          %v966 = vadd.f32 0.0, %v965
          %v967 = vpop.f32.mrb[0].mxu0
          %968 = vmatprep.mubr.f32.mxu0 0.0
          %969 = vmatmul.mubr.f32.gmra.mrb[0].mxu0 %v538
          %v970 = vpop.f32.mrb[0].mxu0
          %v971 = vadd.f32 0.0, %v970
          %v972 = vpop.f32.mrb[0].mxu0
          %973 = vmatprep.mubr.f32.mxu0 0.0
          %974 = vmatmul.mubr.f32.gmra.mrb[0].mxu0 %v541
          %v975 = vpop.f32.mrb[0].mxu0
          %v976 = vadd.f32 0.0, %v975
          %v977 = vpop.f32.mrb[0].mxu0
          %978 = vmatprep.mubr.f32.mxu0 0.0
          %979 = vmatmul.mubr.f32.gmra.mrb[0].mxu0 %v544
          %v980 = vpop.f32.mrb[0].mxu0
          %v981 = vadd.f32 0.0, %v980
          %v982 = vpop.f32.mrb[0].mxu0
          %983 = vmatprep.mubr.f32.mxu0 0.0
          %984 = vmatmul.mubr.f32.gmra.mrb[0].mxu0 %v547
          %v985 = vpop.f32.mrb[0].mxu0
          %v986 = vadd.f32 0.0, %v985
          %v987 = vpop.f32.mrb[0].mxu0
          %988 = vmatprep.mubr.f32.mxu0 0.0
          %989 = vmatmul.mubr.f32.gmra.mrb[0].mxu0 %v550
          %v990 = vpop.f32.mrb[0].mxu0
          %v991 = vadd.f32 0.0, %v990
          %v992 = vpop.f32.mrb[0].mxu0
          %993 = vmatprep.mubr.f32.mxu0 0.0
          %994 = vmatmul.mubr.f32.gmra.mrb[0].mxu0 %v553
          %v995 = vpop.f32.mrb[0].mxu0
          %v996 = vadd.f32 0.0, %v995
          %v997 = vpop.f32.mrb[0].mxu0
          %998 = vmatprep.mubr.f32.mxu0 0.0
          %999 = vmatmul.mubr.f32.gmra.mrb[0].mxu0 %v556
          %v1000 = vpop.f32.mrb[0].mxu0
          %v1001 = vadd.f32 0.0, %v1000
          %v1002 = vpop.f32.mrb[0].mxu0
          %1003 = vmatprep.mubr.f32.mxu0 0.0
          %1004 = vmatmul.mubr.f32.gmra.mrb[0].mxu0 %v559
          %v1005 = vpop.f32.mrb[0].mxu0
          %v1006 = vadd.f32 0.0, %v1005
          %v1007 = vpop.f32.mrb[0].mxu0
          %1008 = vmatprep.mubr.f32.mxu0 0.0
          %1009 = vmatmul.mubr.f32.gmra.mrb[0].mxu0 %v562
          %v1010 = vpop.f32.mrb[0].mxu0
          %v1011 = vadd.f32 0.0, %v1010
          %v1012 = vpop.f32.mrb[0].mxu0
          %1013 = vmatprep.mubr.f32.mxu0 0.0
          %1014 = vmatmul.mubr.f32.gmra.mrb[0].mxu0 %v565
          %v1015 = vpop.f32.mrb[0].mxu0
          %v1016 = vadd.f32 0.0, %v1015
          %v1017 = vpop.f32.mrb[0].mxu0
          %1018 = vmatprep.mubr.f32.mxu0 0.0
          %1019 = vmatmul.mubr.f32.gmra.mrb[0].mxu0 %v568
          %v1020 = vpop.f32.mrb[0].mxu0
          %v1021 = vadd.f32 0.0, %v1020
          %v1022 = vpop.f32.mrb[0].mxu0
          %1023 = vmatprep.mubr.f32.mxu0 0.0
          %1024 = vmatmul.mubr.f32.gmra.mrb[0].mxu0 %v571
          %v1025 = vpop.f32.mrb[0].mxu0
          %v1026 = vadd.f32 0.0, %v1025
          %v1027 = vpop.f32.mrb[0].mxu0
          %1028 = vmatprep.mubr.f32.mxu0 0.0
          %1029 = vmatmul.mubr.f32.gmra.mrb[0].mxu0 %v574
          %v1030 = vpop.f32.mrb[0].mxu0
          %v1031 = vadd.f32 0.0, %v1030
          %v1032 = vpop.f32.mrb[0].mxu0
          %1033 = vmatprep.mubr.f32.mxu0 0.0
          %1034 = vmatmul.mubr.f32.gmra.mrb[0].mxu0 %v577
          %v1035 = vpop.f32.mrb[0].mxu0
          %v1036 = vadd.f32 0.0, %v1035
          %v1037 = vpop.f32.mrb[0].mxu0
          %1038 = vmatprep.mubr.f32.mxu0 0.0
          %1039 = vmatmul.mubr.f32.gmra.mrb[0].mxu0 %v580
          %v1040 = vpop.f32.mrb[0].mxu0
          %v1041 = vadd.f32 0.0, %v1040
          %v1042 = vpop.f32.mrb[0].mxu0
          %1043 = vmatprep.mubr.f32.mxu0 0.0
          %1044 = vmatmul.mubr.f32.gmra.mrb[0].mxu0 %v583
          %v1045 = vpop.f32.mrb[0].mxu0
          %v1046 = vadd.f32 0.0, %v1045
          %v1047 = vpop.f32.mrb[0].mxu0
          %1048 = vmatprep.mubr.f32.mxu0 0.0
          %1049 = vmatmul.mubr.f32.gmra.mrb[0].mxu0 %v586
          %v1050 = vpop.f32.mrb[0].mxu0
          %v1051 = vadd.f32 0.0, %v1050
          %v1052 = vpop.f32.mrb[0].mxu0
          %1053 = vmatprep.mubr.f32.mxu0 0.0
          %1054 = vmatmul.mubr.f32.gmra.mrb[0].mxu0 %v589
          %v1055 = vpop.f32.mrb[0].mxu0
          %v1056 = vadd.f32 0.0, %v1055
          %v1057 = vpop.f32.mrb[0].mxu0
          %1058 = vmatprep.mubr.f32.mxu0 0.0
          %1059 = vmatmul.mubr.f32.gmra.mrb[0].mxu0 %v592
          %v1060 = vpop.f32.mrb[0].mxu0
          %v1061 = vadd.f32 0.0, %v1060
          %v1062 = vpop.f32.mrb[0].mxu0
          %1063 = vmatprep.mubr.f32.mxu0 0.0
          %1064 = vmatmul.mubr.f32.gmra.mrb[0].mxu0 %v595
          %v1065 = vpop.f32.mrb[0].mxu0
          %v1066 = vadd.f32 0.0, %v1065
          %v1067 = vpop.f32.mrb[0].mxu0
          %1068 = vmatprep.mubr.f32.mxu0 0.0
          %1069 = vmatmul.mubr.f32.gmra.mrb[0].mxu0 %v598
          %v1070 = vpop.f32.mrb[0].mxu0
          %v1071 = vadd.f32 0.0, %v1070
          %v1072 = vpop.f32.mrb[0].mxu0
          %1073 = vmatprep.mubr.f32.mxu0 0.0
          %1074 = vmatmul.mubr.f32.gmra.mrb[0].mxu0 %v601
          %v1075 = vpop.f32.mrb[0].mxu0
          %v1076 = vadd.f32 0.0, %v1075
          %v1077 = vpop.f32.mrb[0].mxu0
          %1078 = vmatprep.mubr.f32.mxu0 0.0
          %1079 = vmatmul.mubr.f32.gmra.mrb[0].mxu0 %v604
          %v1080 = vpop.f32.mrb[0].mxu0
          %v1081 = vadd.f32 0.0, %v1080
          %v1082 = vpop.f32.mrb[0].mxu0
          %1083 = vmatprep.mubr.f32.mxu0 0.0
          %1084 = vmatmul.mubr.f32.gmra.mrb[0].mxu0 %v607
          %v1085 = vpop.f32.mrb[0].mxu0
          %v1086 = vadd.f32 0.0, %v1085
          %v1087 = vpop.f32.mrb[0].mxu0
          %1088 = vmatprep.mubr.f32.mxu0 0.0
          %1089 = vmatmul.mubr.f32.gmra.mrb[0].mxu0 %v610
          %v1090 = vpop.f32.mrb[0].mxu0
          %v1091 = vadd.f32 0.0, %v1090
          %v1092 = vpop.f32.mrb[0].mxu0
          %1093 = vmatprep.mubr.f32.mxu0 0.0
          %1094 = vmatmul.mubr.f32.gmra.mrb[0].mxu0 %v613
          %v1095 = vpop.f32.mrb[0].mxu0
          %v1096 = vadd.f32 0.0, %v1095
          %v1097 = vpop.f32.mrb[0].mxu0
          %1098 = vdwg.mxu0
          %vm1099 = vcmask 31744
          %1100 = vst.msk [vmem:[#allocation3] sm:$0xff] %vm1099, %v941
          %1101 = vst.msk [vmem:[#allocation3 + $0x8] sm:$0xff] %vm1099, %v946
          %1102 = vst.msk [vmem:[#allocation3 + $0x10] sm:$0xff] %vm1099, %v951
          %1103 = vst.msk [vmem:[#allocation3 + $0x18] sm:$0xff] %vm1099, %v956
          %1104 = vst.msk [vmem:[#allocation3 + $0x20] sm:$0xff] %vm1099, %v961
          %1105 = vst.msk [vmem:[#allocation3 + $0x28] sm:$0xff] %vm1099, %v966
          %1106 = vst.msk [vmem:[#allocation3 + $0x30] sm:$0xff] %vm1099, %v971
          %1107 = vst.msk [vmem:[#allocation3 + $0x38] sm:$0xff] %vm1099, %v976
          %1108 = vst.msk [vmem:[#allocation3 + $0x40] sm:$0xff] %vm1099, %v981
          %1109 = vst.msk [vmem:[#allocation3 + $0x48] sm:$0xff] %vm1099, %v986
          %1110 = vst.msk [vmem:[#allocation3 + $0x50] sm:$0xff] %vm1099, %v991
          %1111 = vst.msk [vmem:[#allocation3 + $0x58] sm:$0xff] %vm1099, %v996
          %1112 = vst.msk [vmem:[#allocation3 + $0x60] sm:$0xff] %vm1099, %v1001
          %1113 = vst.msk [vmem:[#allocation3 + $0x68] sm:$0xff] %vm1099, %v1006
          %1114 = vst.msk [vmem:[#allocation3 + $0x70] sm:$0xff] %vm1099, %v1011
          %1115 = vst.msk [vmem:[#allocation3 + $0x78] sm:$0xff] %vm1099, %v1016
          %1116 = vst.msk [vmem:[#allocation3 + $0x80] sm:$0xff] %vm1099, %v1021
          %1117 = vst.msk [vmem:[#allocation3 + $0x88] sm:$0xff] %vm1099, %v1026
          %1118 = vst.msk [vmem:[#allocation3 + $0x90] sm:$0xff] %vm1099, %v1031
          %1119 = vst.msk [vmem:[#allocation3 + $0x98] sm:$0xff] %vm1099, %v1036
          %1120 = vst.msk [vmem:[#allocation3 + $0xa0] sm:$0xff] %vm1099, %v1041
          %1121 = vst.msk [vmem:[#allocation3 + $0xa8] sm:$0xff] %vm1099, %v1046
          %1122 = vst.msk [vmem:[#allocation3 + $0xb0] sm:$0xff] %vm1099, %v1051
          %1123 = vst.msk [vmem:[#allocation3 + $0xb8] sm:$0xff] %vm1099, %v1056
          %1124 = vst.msk [vmem:[#allocation3 + $0xc0] sm:$0xff] %vm1099, %v1061
          %1125 = vst.msk [vmem:[#allocation3 + $0xc8] sm:$0xff] %vm1099, %v1066
          %1126 = vst.msk [vmem:[#allocation3 + $0xd0] sm:$0xff] %vm1099, %v1071
          %1127 = vst.msk [vmem:[#allocation3 + $0xd8] sm:$0xff] %vm1099, %v1076
          %1128 = vst.msk [vmem:[#allocation3 + $0xe0] sm:$0xff] %vm1099, %v1081
          %1129 = vst.msk [vmem:[#allocation3 + $0xe8] sm:$0xff] %vm1099, %v1086
          %1130 = vst.msk [vmem:[#allocation3 + $0xf0] sm:$0xff] %vm1099, %v1091
          %1131 = vst.msk [vmem:[#allocation3 + $0xf8] sm:$0xff] %vm1099, %v1096
          %v1132 = vld [vmem:[%s470] sm:$0xf]
          %v1133 = vld [vmem:[%s1] sm:$0xff]
          %v1134 = vld [vmem:[%s1 + $0x8] sm:$0xff]
          %v1135 = vld [vmem:[%s1 + $0x10] sm:$0xff]
          %v1136 = vld [vmem:[%s1 + $0x18] sm:$0xff]
          %v1138 = vsel %vm518, %v1132, 0
          %1140 = vmatprep.subr.mxu0 %v1134
          %1141 = vmatpush1.msra.mxu0 %v1133
          %1142 = vmatprep.subr.mxu0 %v1136
          %1143 = vmatpush1.msra.mxu0 %v1135
          %1144 = vmatprep.subr.mxu0 0.0
          %1145 = vmatpush1.msra.mxu0 0.0
          %1146 = vmatprep.subr.mxu0 0.0
          %1147 = vmatpush1.msra.mxu0 0.0
          %1148 = vmatprep.subr.mxu0 0.0
          %1149 = vmatpush1.msra.mxu0 0.0
          %1150 = vmatprep.subr.mxu0 0.0
          %1151 = vmatpush1.msra.mxu0 0.0
          %1152 = vmatprep.subr.mxu0 0.0
          %1153 = vmatpush1.msra.mxu0 0.0
          %1154 = vmatprep.subr.mxu0 0.0
          %1155 = vmatpush1.msra.mxu0 0.0
          %1156 = vmatprep.subr.mxu0 0.0
          %1157 = vmatpush1.msra.mxu0 0.0
          %1158 = vmatprep.subr.mxu0 0.0
          %1159 = vmatpush1.msra.mxu0 0.0
          %1160 = vmatprep.subr.mxu0 0.0
          %1161 = vmatpush1.msra.mxu0 0.0
          %1162 = vmatprep.subr.mxu0 0.0
          %1163 = vmatpush1.msra.mxu0 0.0
          %1164 = vmatprep.subr.mxu0 0.0
          %1165 = vmatpush1.msra.mxu0 0.0
          %1166 = vmatprep.subr.mxu0 0.0
          %1167 = vmatpush1.msra.mxu0 0.0
          %1168 = vmatprep.subr.mxu0 0.0
          %1169 = vmatpush1.msra.mxu0 0.0
          %1170 = vmatprep.subr.mxu0 0.0
          %1171 = vmatpush1.msra.mxu0 0.0
          %1172 = vmatprep.subr.mxu0 0.0
          %1173 = vmatpush1.msra.mxu0 0.0
          %1174 = vmatprep.subr.mxu0 0.0
          %1175 = vmatpush1.msra.mxu0 0.0
          %1176 = vmatprep.subr.mxu0 0.0
          %1177 = vmatpush1.msra.mxu0 0.0
          %1178 = vmatprep.subr.mxu0 0.0
          %1179 = vmatpush1.msra.mxu0 0.0
          %1180 = vmatprep.subr.mxu0 0.0
          %1181 = vmatpush1.msra.mxu0 0.0
          %1182 = vmatprep.subr.mxu0 0.0
          %1183 = vmatpush1.msra.mxu0 0.0
          %1184 = vmatprep.subr.mxu0 0.0
          %1185 = vmatpush1.msra.mxu0 0.0
          %1186 = vmatprep.subr.mxu0 0.0
          %1187 = vmatpush1.msra.mxu0 0.0
          %1188 = vmatprep.subr.mxu0 0.0
          %1189 = vmatpush1.msra.mxu0 0.0
          %1190 = vmatprep.subr.mxu0 0.0
          %1191 = vmatpush1.msra.mxu0 0.0
          %1192 = vmatprep.subr.mxu0 0.0
          %1193 = vmatpush1.msra.mxu0 0.0
          %1194 = vmatprep.subr.mxu0 0.0
          %1195 = vmatpush1.msra.mxu0 0.0
          %1196 = vmatprep.subr.mxu0 0.0
          %1197 = vmatpush1.msra.mxu0 0.0
          %1198 = vmatprep.subr.mxu0 0.0
          %1199 = vmatpush1.msra.mxu0 0.0
          %1200 = vmatprep.subr.mxu0 0.0
          %1201 = vmatpush1.msra.mxu0 0.0
          %1202 = vmatprep.subr.mxu0 0.0
          %1203 = vmatpush1.msra.mxu0 0.0
          %1204 = vmatprep.mubr.f32.mxu0 0.0
          %1205 = vmatmul.mubr.f32.gmra.mrb[0].mxu0 %v1138
          %v1206 = vpop.f32.mrb[0].mxu0
          %v1207 = vadd.f32 0.0, %v1206
          %v1208 = vpop.f32.mrb[0].mxu0
          %v1209 = vadd.f32 0.0, %v1208
          %1210 = vdwg.mxu0
          %v1213 = vcombine.low %v1207, %v1209
          %1215 = vst [vmem:[#allocation4] sm:$0xff] %v1213
          %1216 = vst [vmem:[%s460] sm:$0x1] 0.0
        $region64: #{tpu_custom_call.1} parent=55 // pred_fallthru
          _
        %v1217 = vld [vmem:[%s403] sm:$0xff]
        %v1218 = vld [vmem:[%s403 + $0x8] sm:$0xff]
        %v1219 = vld [vmem:[%s403 + $0x10] sm:$0xff]
        %v1220 = vld [vmem:[%s403 + $0x18] sm:$0xff]
        %v1221 = vld [vmem:[%s403 + $0x20] sm:$0xff]
        %v1222 = vld [vmem:[%s403 + $0x28] sm:$0xff]
        %v1223 = vld [vmem:[%s403 + $0x30] sm:$0xff]
        %v1224 = vld [vmem:[%s403 + $0x38] sm:$0xff]
        %v1225 = vunpack.c.0.s8 %v1217
        %v1226 = vunpack.c.0.s8 %v1218
        %v1227 = vunpack.c.1.s8 %v1217
        %v1228 = vunpack.c.1.s8 %v1218
        %v1229 = vunpack.c.2.s8 %v1217
        %v1230 = vunpack.c.2.s8 %v1218
        %v1231 = vunpack.c.3.s8 %v1217
        %v1232 = vunpack.c.3.s8 %v1218
        %v1233 = vunpack.c.0.s8 %v1219
        %v1234 = vunpack.c.0.s8 %v1220
        %v1235 = vunpack.c.1.s8 %v1219
        %v1236 = vunpack.c.1.s8 %v1220
        %v1237 = vunpack.c.2.s8 %v1219
        %v1238 = vunpack.c.2.s8 %v1220
        %v1239 = vunpack.c.3.s8 %v1219
        %v1240 = vunpack.c.3.s8 %v1220
        %v1241 = vunpack.c.0.s8 %v1221
        %v1242 = vunpack.c.0.s8 %v1222
        %v1243 = vunpack.c.1.s8 %v1221
        %v1244 = vunpack.c.1.s8 %v1222
        %v1245 = vunpack.c.2.s8 %v1221
        %v1246 = vunpack.c.2.s8 %v1222
        %v1247 = vunpack.c.3.s8 %v1221
        %v1248 = vunpack.c.3.s8 %v1222
        %v1249 = vunpack.c.0.s8 %v1223
        %v1250 = vunpack.c.0.s8 %v1224
        %v1251 = vunpack.c.1.s8 %v1223
        %v1252 = vunpack.c.1.s8 %v1224
        %v1253 = vunpack.c.2.s8 %v1223
        %v1254 = vunpack.c.2.s8 %v1224
        %v1255 = vunpack.c.3.s8 %v1223
        %v1256 = vunpack.c.3.s8 %v1224
        %v1257 = vcvt.s32.f32 %v1225
        %v1258 = vcvt.s32.f32 %v1226
        %v1259 = vcvt.s32.f32 %v1227
        %v1260 = vcvt.s32.f32 %v1228
        %v1261 = vcvt.s32.f32 %v1229
        %v1262 = vcvt.s32.f32 %v1230
        %v1263 = vcvt.s32.f32 %v1231
        %v1264 = vcvt.s32.f32 %v1232
        %v1265 = vcvt.s32.f32 %v1233
        %v1266 = vcvt.s32.f32 %v1234
        %v1267 = vcvt.s32.f32 %v1235
        %v1268 = vcvt.s32.f32 %v1236
        %v1269 = vcvt.s32.f32 %v1237
        %v1270 = vcvt.s32.f32 %v1238
        %v1271 = vcvt.s32.f32 %v1239
        %v1272 = vcvt.s32.f32 %v1240
        %v1273 = vcvt.s32.f32 %v1241
        %v1274 = vcvt.s32.f32 %v1242
        %v1275 = vcvt.s32.f32 %v1243
        %v1276 = vcvt.s32.f32 %v1244
        %v1277 = vcvt.s32.f32 %v1245
        %v1278 = vcvt.s32.f32 %v1246
        %v1279 = vcvt.s32.f32 %v1247
        %v1280 = vcvt.s32.f32 %v1248
        %v1281 = vcvt.s32.f32 %v1249
        %v1282 = vcvt.s32.f32 %v1250
        %v1283 = vcvt.s32.f32 %v1251
        %v1284 = vcvt.s32.f32 %v1252
        %v1285 = vcvt.s32.f32 %v1253
        %v1286 = vcvt.s32.f32 %v1254
        %v1287 = vcvt.s32.f32 %v1255
        %v1288 = vcvt.s32.f32 %v1256
        %v1289 = vsub.f32 %v1257, 1.0
        %v1290 = vsub.f32 %v1258, 1.0
        %v1291 = vsub.f32 %v1259, 1.0
        %v1292 = vsub.f32 %v1260, 1.0
        %v1293 = vsub.f32 %v1261, 1.0
        %v1294 = vsub.f32 %v1262, 1.0
        %v1295 = vsub.f32 %v1263, 1.0
        %v1296 = vsub.f32 %v1264, 1.0
        %v1297 = vsub.f32 %v1265, 1.0
        %v1298 = vsub.f32 %v1266, 1.0
        %v1299 = vsub.f32 %v1267, 1.0
        %v1300 = vsub.f32 %v1268, 1.0
        %v1301 = vsub.f32 %v1269, 1.0
        %v1302 = vsub.f32 %v1270, 1.0
        %v1303 = vsub.f32 %v1271, 1.0
        %v1304 = vsub.f32 %v1272, 1.0
        %v1305 = vsub.f32 %v1273, 1.0
        %v1306 = vsub.f32 %v1274, 1.0
        %v1307 = vsub.f32 %v1275, 1.0
        %v1308 = vsub.f32 %v1276, 1.0
        %v1309 = vsub.f32 %v1277, 1.0
        %v1310 = vsub.f32 %v1278, 1.0
        %v1311 = vsub.f32 %v1279, 1.0
        %v1312 = vsub.f32 %v1280, 1.0
        %v1313 = vsub.f32 %v1281, 1.0
        %v1314 = vsub.f32 %v1282, 1.0
        %v1315 = vsub.f32 %v1283, 1.0
        %v1316 = vsub.f32 %v1284, 1.0
        %v1317 = vsub.f32 %v1285, 1.0
        %v1318 = vsub.f32 %v1286, 1.0
        %v1319 = vsub.f32 %v1287, 1.0
        %v1320 = vsub.f32 %v1288, 1.0
        %v1321 = vmul.f32 %v1289, 1e+30
        %v1322 = vmul.f32 %v1290, 1e+30
        %v1323 = vmul.f32 %v1291, 1e+30
        %v1324 = vmul.f32 %v1292, 1e+30
        %v1325 = vmul.f32 %v1293, 1e+30
        %v1326 = vmul.f32 %v1294, 1e+30
        %v1327 = vmul.f32 %v1295, 1e+30
        %v1328 = vmul.f32 %v1296, 1e+30
        %v1329 = vmul.f32 %v1297, 1e+30
        %v1330 = vmul.f32 %v1298, 1e+30
        %v1331 = vmul.f32 %v1299, 1e+30
        %v1332 = vmul.f32 %v1300, 1e+30
        %v1333 = vmul.f32 %v1301, 1e+30
        %v1334 = vmul.f32 %v1302, 1e+30
        %v1335 = vmul.f32 %v1303, 1e+30
        %v1336 = vmul.f32 %v1304, 1e+30
        %v1337 = vmul.f32 %v1305, 1e+30
        %v1338 = vmul.f32 %v1306, 1e+30
        %v1339 = vmul.f32 %v1307, 1e+30
        %v1340 = vmul.f32 %v1308, 1e+30
        %v1341 = vmul.f32 %v1309, 1e+30
        %v1342 = vmul.f32 %v1310, 1e+30
        %v1343 = vmul.f32 %v1311, 1e+30
        %v1344 = vmul.f32 %v1312, 1e+30
        %v1345 = vmul.f32 %v1313, 1e+30
        %v1346 = vmul.f32 %v1314, 1e+30
        %v1347 = vmul.f32 %v1315, 1e+30
        %v1348 = vmul.f32 %v1316, 1e+30
        %v1349 = vmul.f32 %v1317, 1e+30
        %v1350 = vmul.f32 %v1318, 1e+30
        %v1351 = vmul.f32 %v1319, 1e+30
        %v1352 = vmul.f32 %v1320, 1e+30
        %s1353 = smul.u32 %s36, 128
        %s1354 = scalar_lea.vmem [#allocation3], %s1353
        %v1355 = vld [vmem:[%s1354] sm:$0xff]
        %v1356 = vld [vmem:[%s1354 + $0x8] sm:$0xff]
        %v1357 = vld [vmem:[%s1354 + $0x10] sm:$0xff]
        %v1358 = vld [vmem:[%s1354 + $0x18] sm:$0xff]
        %v1359 = vld [vmem:[%s1354 + $0x20] sm:$0xff]
        %v1360 = vld [vmem:[%s1354 + $0x28] sm:$0xff]
        %v1361 = vld [vmem:[%s1354 + $0x30] sm:$0xff]
        %v1362 = vld [vmem:[%s1354 + $0x38] sm:$0xff]
        %v1363 = vld [vmem:[%s1354 + $0x40] sm:$0xff]
        %v1364 = vld [vmem:[%s1354 + $0x48] sm:$0xff]
        %v1365 = vld [vmem:[%s1354 + $0x50] sm:$0xff]
        %v1366 = vld [vmem:[%s1354 + $0x58] sm:$0xff]
        %v1367 = vld [vmem:[%s1354 + $0x60] sm:$0xff]
        %v1368 = vld [vmem:[%s1354 + $0x68] sm:$0xff]
        %v1369 = vld [vmem:[%s1354 + $0x70] sm:$0xff]
        %v1370 = vld [vmem:[%s1354 + $0x78] sm:$0xff]
        %v1371 = vld [vmem:[#allocation4] ss:$4 sm:$0x3]
        %1373 = vset.pattern.permute.xlu0 0
        %1374 = vperm.xlu0 %1373, %v1355
        %v1375 = vpop.permute.xlu0 %1374
        %1378 = vset.pattern.permute.xlu0 0
        %1379 = vperm.xlu0 %1378, %v1356
        %v1380 = vpop.permute.xlu0 %1379
        %1383 = vset.pattern.permute.xlu0 0
        %1384 = vperm.xlu0 %1383, %v1357
        %v1385 = vpop.permute.xlu0 %1384
        %1388 = vset.pattern.permute.xlu0 0
        %1389 = vperm.xlu0 %1388, %v1358
        %v1390 = vpop.permute.xlu0 %1389
        %1393 = vset.pattern.permute.xlu0 0
        %1394 = vperm.xlu0 %1393, %v1359
        %v1395 = vpop.permute.xlu0 %1394
        %1398 = vset.pattern.permute.xlu0 0
        %1399 = vperm.xlu0 %1398, %v1360
        %v1400 = vpop.permute.xlu0 %1399
        %1403 = vset.pattern.permute.xlu0 0
        %1404 = vperm.xlu0 %1403, %v1361
        %v1405 = vpop.permute.xlu0 %1404
        %1408 = vset.pattern.permute.xlu0 0
        %1409 = vperm.xlu0 %1408, %v1362
        %v1410 = vpop.permute.xlu0 %1409
        %1413 = vset.pattern.permute.xlu0 0
        %1414 = vperm.xlu0 %1413, %v1363
        %v1415 = vpop.permute.xlu0 %1414
        %1418 = vset.pattern.permute.xlu0 0
        %1419 = vperm.xlu0 %1418, %v1364
        %v1420 = vpop.permute.xlu0 %1419
        %1423 = vset.pattern.permute.xlu0 0
        %1424 = vperm.xlu0 %1423, %v1365
        %v1425 = vpop.permute.xlu0 %1424
        %1428 = vset.pattern.permute.xlu0 0
        %1429 = vperm.xlu0 %1428, %v1366
        %v1430 = vpop.permute.xlu0 %1429
        %1433 = vset.pattern.permute.xlu0 0
        %1434 = vperm.xlu0 %1433, %v1367
        %v1435 = vpop.permute.xlu0 %1434
        %1438 = vset.pattern.permute.xlu0 0
        %1439 = vperm.xlu0 %1438, %v1368
        %v1440 = vpop.permute.xlu0 %1439
        %1443 = vset.pattern.permute.xlu0 0
        %1444 = vperm.xlu0 %1443, %v1369
        %v1445 = vpop.permute.xlu0 %1444
        %1448 = vset.pattern.permute.xlu0 0
        %1449 = vperm.xlu0 %1448, %v1370
        %v1450 = vpop.permute.xlu0 %1449
        %v1453 = vlaneseq
        %v1454 = vshrl.u32 %v1453, 7
        %v1455 = vsub.s32 0, %v1454
        %v1456 = vrot.slane %v1371, %v1455
        %v1457 = vlaneseq
        %v1458 = vshrl.u32 %v1457, 7
        %v1459 = vsub.s32 1, %v1458
        %v1460 = vrot.slane %v1371, %v1459
        %v1463 = vadd.f32 %v1375, %v1456
        %v1464 = vadd.f32 %v1375, %v1460
        %v1465 = vadd.f32 %v1380, %v1456
        %v1466 = vadd.f32 %v1380, %v1460
        %v1467 = vadd.f32 %v1385, %v1456
        %v1468 = vadd.f32 %v1385, %v1460
        %v1469 = vadd.f32 %v1390, %v1456
        %v1470 = vadd.f32 %v1390, %v1460
        %v1471 = vadd.f32 %v1395, %v1456
        %v1472 = vadd.f32 %v1395, %v1460
        %v1473 = vadd.f32 %v1400, %v1456
        %v1474 = vadd.f32 %v1400, %v1460
        %v1475 = vadd.f32 %v1405, %v1456
        %v1476 = vadd.f32 %v1405, %v1460
        %v1477 = vadd.f32 %v1410, %v1456
        %v1478 = vadd.f32 %v1410, %v1460
        %v1479 = vadd.f32 %v1415, %v1456
        %v1480 = vadd.f32 %v1415, %v1460
        %v1481 = vadd.f32 %v1420, %v1456
        %v1482 = vadd.f32 %v1420, %v1460
        %v1483 = vadd.f32 %v1425, %v1456
        %v1484 = vadd.f32 %v1425, %v1460
        %v1485 = vadd.f32 %v1430, %v1456
        %v1486 = vadd.f32 %v1430, %v1460
        %v1487 = vadd.f32 %v1435, %v1456
        %v1488 = vadd.f32 %v1435, %v1460
        %v1489 = vadd.f32 %v1440, %v1456
        %v1490 = vadd.f32 %v1440, %v1460
        %v1491 = vadd.f32 %v1445, %v1456
        %v1492 = vadd.f32 %v1445, %v1460
        %v1493 = vadd.f32 %v1450, %v1456
        %v1494 = vadd.f32 %v1450, %v1460
        %v1495 = vmul.f32 %v1463, 0.2
        %v1496 = vmul.f32 %v1464, 0.2
        %v1497 = vmul.f32 %v1465, 0.2
        %v1498 = vmul.f32 %v1466, 0.2
        %v1499 = vmul.f32 %v1467, 0.2
        %v1500 = vmul.f32 %v1468, 0.2
        %v1501 = vmul.f32 %v1469, 0.2
        %v1502 = vmul.f32 %v1470, 0.2
        %v1503 = vmul.f32 %v1471, 0.2
        %v1504 = vmul.f32 %v1472, 0.2
        %v1505 = vmul.f32 %v1473, 0.2
        %v1506 = vmul.f32 %v1474, 0.2
        %v1507 = vmul.f32 %v1475, 0.2
        %v1508 = vmul.f32 %v1476, 0.2
        %v1509 = vmul.f32 %v1477, 0.2
        %v1510 = vmul.f32 %v1478, 0.2
        %v1511 = vmul.f32 %v1479, 0.2
        %v1512 = vmul.f32 %v1480, 0.2
        %v1513 = vmul.f32 %v1481, 0.2
        %v1514 = vmul.f32 %v1482, 0.2
        %v1515 = vmul.f32 %v1483, 0.2
        %v1516 = vmul.f32 %v1484, 0.2
        %v1517 = vmul.f32 %v1485, 0.2
        %v1518 = vmul.f32 %v1486, 0.2
        %v1519 = vmul.f32 %v1487, 0.2
        %v1520 = vmul.f32 %v1488, 0.2
        %v1521 = vmul.f32 %v1489, 0.2
        %v1522 = vmul.f32 %v1490, 0.2
        %v1523 = vmul.f32 %v1491, 0.2
        %v1524 = vmul.f32 %v1492, 0.2
        %v1525 = vmul.f32 %v1493, 0.2
        %v1526 = vmul.f32 %v1494, 0.2
        %v1527 = vmax.f32 %v1463, %v1495
        %v1528 = vmax.f32 %v1464, %v1496
        %v1529 = vmax.f32 %v1465, %v1497
        %v1530 = vmax.f32 %v1466, %v1498
        %v1531 = vmax.f32 %v1467, %v1499
        %v1532 = vmax.f32 %v1468, %v1500
        %v1533 = vmax.f32 %v1469, %v1501
        %v1534 = vmax.f32 %v1470, %v1502
        %v1535 = vmax.f32 %v1471, %v1503
        %v1536 = vmax.f32 %v1472, %v1504
        %v1537 = vmax.f32 %v1473, %v1505
        %v1538 = vmax.f32 %v1474, %v1506
        %v1539 = vmax.f32 %v1475, %v1507
        %v1540 = vmax.f32 %v1476, %v1508
        %v1541 = vmax.f32 %v1477, %v1509
        %v1542 = vmax.f32 %v1478, %v1510
        %v1543 = vmax.f32 %v1479, %v1511
        %v1544 = vmax.f32 %v1480, %v1512
        %v1545 = vmax.f32 %v1481, %v1513
        %v1546 = vmax.f32 %v1482, %v1514
        %v1547 = vmax.f32 %v1483, %v1515
        %v1548 = vmax.f32 %v1484, %v1516
        %v1549 = vmax.f32 %v1485, %v1517
        %v1550 = vmax.f32 %v1486, %v1518
        %v1551 = vmax.f32 %v1487, %v1519
        %v1552 = vmax.f32 %v1488, %v1520
        %v1553 = vmax.f32 %v1489, %v1521
        %v1554 = vmax.f32 %v1490, %v1522
        %v1555 = vmax.f32 %v1491, %v1523
        %v1556 = vmax.f32 %v1492, %v1524
        %v1557 = vmax.f32 %v1493, %v1525
        %v1558 = vmax.f32 %v1494, %v1526
        %v1559 = vadd.f32 %v1527, %v1321
        %v1560 = vadd.f32 %v1528, %v1322
        %v1561 = vadd.f32 %v1529, %v1323
        %v1562 = vadd.f32 %v1530, %v1324
        %v1563 = vadd.f32 %v1531, %v1325
        %v1564 = vadd.f32 %v1532, %v1326
        %v1565 = vadd.f32 %v1533, %v1327
        %v1566 = vadd.f32 %v1534, %v1328
        %v1567 = vadd.f32 %v1535, %v1329
        %v1568 = vadd.f32 %v1536, %v1330
        %v1569 = vadd.f32 %v1537, %v1331
        %v1570 = vadd.f32 %v1538, %v1332
        %v1571 = vadd.f32 %v1539, %v1333
        %v1572 = vadd.f32 %v1540, %v1334
        %v1573 = vadd.f32 %v1541, %v1335
        %v1574 = vadd.f32 %v1542, %v1336
        %v1575 = vadd.f32 %v1543, %v1337
        %v1576 = vadd.f32 %v1544, %v1338
        %v1577 = vadd.f32 %v1545, %v1339
        %v1578 = vadd.f32 %v1546, %v1340
        %v1579 = vadd.f32 %v1547, %v1341
        %v1580 = vadd.f32 %v1548, %v1342
        %v1581 = vadd.f32 %v1549, %v1343
        %v1582 = vadd.f32 %v1550, %v1344
        %v1583 = vadd.f32 %v1551, %v1345
        %v1584 = vadd.f32 %v1552, %v1346
        %v1585 = vadd.f32 %v1553, %v1347
        %v1586 = vadd.f32 %v1554, %v1348
        %v1587 = vadd.f32 %v1555, %v1349
        %v1588 = vadd.f32 %v1556, %v1350
        %v1589 = vadd.f32 %v1557, %v1351
        %v1590 = vadd.f32 %v1558, %v1352
        %v1591 = vmax.f32 %v1559, %v1560
        %1592 = vmax.xlane.f32.xlu0 %v1591
        %v1593 = vpop.xlane.xlu0 %1592
        %v1594 = vmax.f32 %v1561, %v1562
        %1595 = vmax.xlane.f32.xlu0 %v1594
        %v1596 = vpop.xlane.xlu0 %1595
        %v1597 = vmax.f32 %v1563, %v1564
        %1598 = vmax.xlane.f32.xlu0 %v1597
        %v1599 = vpop.xlane.xlu0 %1598
        %v1600 = vmax.f32 %v1565, %v1566
        %1601 = vmax.xlane.f32.xlu0 %v1600
        %v1602 = vpop.xlane.xlu0 %1601
        %v1603 = vmax.f32 %v1567, %v1568
        %1604 = vmax.xlane.f32.xlu0 %v1603
        %v1605 = vpop.xlane.xlu0 %1604
        %v1606 = vmax.f32 %v1569, %v1570
        %1607 = vmax.xlane.f32.xlu0 %v1606
        %v1608 = vpop.xlane.xlu0 %1607
        %v1609 = vmax.f32 %v1571, %v1572
        %1610 = vmax.xlane.f32.xlu0 %v1609
        %v1611 = vpop.xlane.xlu0 %1610
        %v1612 = vmax.f32 %v1573, %v1574
        %1613 = vmax.xlane.f32.xlu0 %v1612
        %v1614 = vpop.xlane.xlu0 %1613
        %v1615 = vmax.f32 %v1575, %v1576
        %1616 = vmax.xlane.f32.xlu0 %v1615
        %v1617 = vpop.xlane.xlu0 %1616
        %v1618 = vmax.f32 %v1577, %v1578
        %1619 = vmax.xlane.f32.xlu0 %v1618
        %v1620 = vpop.xlane.xlu0 %1619
        %v1621 = vmax.f32 %v1579, %v1580
        %1622 = vmax.xlane.f32.xlu0 %v1621
        %v1623 = vpop.xlane.xlu0 %1622
        %v1624 = vmax.f32 %v1581, %v1582
        %1625 = vmax.xlane.f32.xlu0 %v1624
        %v1626 = vpop.xlane.xlu0 %1625
        %v1627 = vmax.f32 %v1583, %v1584
        %1628 = vmax.xlane.f32.xlu0 %v1627
        %v1629 = vpop.xlane.xlu0 %1628
        %v1630 = vmax.f32 %v1585, %v1586
        %1631 = vmax.xlane.f32.xlu0 %v1630
        %v1632 = vpop.xlane.xlu0 %1631
        %v1633 = vmax.f32 %v1587, %v1588
        %1634 = vmax.xlane.f32.xlu0 %v1633
        %v1635 = vpop.xlane.xlu0 %1634
        %v1636 = vmax.f32 %v1589, %v1590
        %1637 = vmax.xlane.f32.xlu0 %v1636
        %v1638 = vpop.xlane.xlu0 %1637
        %v1639 = vmax.f32 %v1593, -1e+20
        %v1640 = vmax.f32 %v1596, -1e+20
        %v1641 = vmax.f32 %v1599, -1e+20
        %v1642 = vmax.f32 %v1602, -1e+20
        %v1643 = vmax.f32 %v1605, -1e+20
        %v1644 = vmax.f32 %v1608, -1e+20
        %v1645 = vmax.f32 %v1611, -1e+20
        %v1646 = vmax.f32 %v1614, -1e+20
        %v1647 = vmax.f32 %v1617, -1e+20
        %v1648 = vmax.f32 %v1620, -1e+20
        %v1649 = vmax.f32 %v1623, -1e+20
        %v1650 = vmax.f32 %v1626, -1e+20
        %v1651 = vmax.f32 %v1629, -1e+20
        %v1652 = vmax.f32 %v1632, -1e+20
        %v1653 = vmax.f32 %v1635, -1e+20
        %v1654 = vmax.f32 %v1638, -1e+20
        %v1655 = vsub.f32 %v1559, %v1639
        %v1656 = vsub.f32 %v1560, %v1639
        %v1657 = vsub.f32 %v1561, %v1640
        %v1658 = vsub.f32 %v1562, %v1640
        %v1659 = vsub.f32 %v1563, %v1641
        %v1660 = vsub.f32 %v1564, %v1641
        %v1661 = vsub.f32 %v1565, %v1642
        %v1662 = vsub.f32 %v1566, %v1642
        %v1663 = vsub.f32 %v1567, %v1643
        %v1664 = vsub.f32 %v1568, %v1643
        %v1665 = vsub.f32 %v1569, %v1644
        %v1666 = vsub.f32 %v1570, %v1644
        %v1667 = vsub.f32 %v1571, %v1645
        %v1668 = vsub.f32 %v1572, %v1645
        %v1669 = vsub.f32 %v1573, %v1646
        %v1670 = vsub.f32 %v1574, %v1646
        %v1671 = vsub.f32 %v1575, %v1647
        %v1672 = vsub.f32 %v1576, %v1647
        %v1673 = vsub.f32 %v1577, %v1648
        %v1674 = vsub.f32 %v1578, %v1648
        %v1675 = vsub.f32 %v1579, %v1649
        %v1676 = vsub.f32 %v1580, %v1649
        %v1677 = vsub.f32 %v1581, %v1650
        %v1678 = vsub.f32 %v1582, %v1650
        %v1679 = vsub.f32 %v1583, %v1651
        %v1680 = vsub.f32 %v1584, %v1651
        %v1681 = vsub.f32 %v1585, %v1652
        %v1682 = vsub.f32 %v1586, %v1652
        %v1683 = vsub.f32 %v1587, %v1653
        %v1684 = vsub.f32 %v1588, %v1653
        %v1685 = vsub.f32 %v1589, %v1654
        %v1686 = vsub.f32 %v1590, %v1654
        %v1687 = vmul.f32 %v1655, 1.442695
        %v1688 = vpow.pop %v1687
        %v1689 = vmul.f32 %v1656, 1.442695
        %v1690 = vpow.pop %v1689
        %v1691 = vmul.f32 %v1657, 1.442695
        %v1692 = vpow.pop %v1691
        %v1693 = vmul.f32 %v1658, 1.442695
        %v1694 = vpow.pop %v1693
        %v1695 = vmul.f32 %v1659, 1.442695
        %v1696 = vpow.pop %v1695
        %v1697 = vmul.f32 %v1660, 1.442695
        %v1698 = vpow.pop %v1697
        %v1699 = vmul.f32 %v1661, 1.442695
        %v1700 = vpow.pop %v1699
        %v1701 = vmul.f32 %v1662, 1.442695
        %v1702 = vpow.pop %v1701
        %v1703 = vmul.f32 %v1663, 1.442695
        %v1704 = vpow.pop %v1703
        %v1705 = vmul.f32 %v1664, 1.442695
        %v1706 = vpow.pop %v1705
        %v1707 = vmul.f32 %v1665, 1.442695
        %v1708 = vpow.pop %v1707
        %v1709 = vmul.f32 %v1666, 1.442695
        %v1710 = vpow.pop %v1709
        %v1711 = vmul.f32 %v1667, 1.442695
        %v1712 = vpow.pop %v1711
        %v1713 = vmul.f32 %v1668, 1.442695
        %v1714 = vpow.pop %v1713
        %v1715 = vmul.f32 %v1669, 1.442695
        %v1716 = vpow.pop %v1715
        %v1717 = vmul.f32 %v1670, 1.442695
        %v1718 = vpow.pop %v1717
        %v1719 = vmul.f32 %v1671, 1.442695
        %v1720 = vpow.pop %v1719
        %v1721 = vmul.f32 %v1672, 1.442695
        %v1722 = vpow.pop %v1721
        %v1723 = vmul.f32 %v1673, 1.442695
        %v1724 = vpow.pop %v1723
        %v1725 = vmul.f32 %v1674, 1.442695
        %v1726 = vpow.pop %v1725
        %v1727 = vmul.f32 %v1675, 1.442695
        %v1728 = vpow.pop %v1727
        %v1729 = vmul.f32 %v1676, 1.442695
        %v1730 = vpow.pop %v1729
        %v1731 = vmul.f32 %v1677, 1.442695
        %v1732 = vpow.pop %v1731
        %v1733 = vmul.f32 %v1678, 1.442695
        %v1734 = vpow.pop %v1733
        %v1735 = vmul.f32 %v1679, 1.442695
        %v1736 = vpow.pop %v1735
        %v1737 = vmul.f32 %v1680, 1.442695
        %v1738 = vpow.pop %v1737
        %v1739 = vmul.f32 %v1681, 1.442695
        %v1740 = vpow.pop %v1739
        %v1741 = vmul.f32 %v1682, 1.442695
        %v1742 = vpow.pop %v1741
        %v1743 = vmul.f32 %v1683, 1.442695
        %v1744 = vpow.pop %v1743
        %v1745 = vmul.f32 %v1684, 1.442695
        %v1746 = vpow.pop %v1745
        %v1747 = vmul.f32 %v1685, 1.442695
        %v1748 = vpow.pop %v1747
        %v1749 = vmul.f32 %v1686, 1.442695
        %v1750 = vpow.pop %v1749
        %v1751 = vadd.f32 %v1688, %v1690
        %1752 = vadd.xlane.f32.xlu0 %v1751
        %v1753 = vpop.xlane.xlu0 %1752
        %v1754 = vadd.f32 %v1692, %v1694
        %1755 = vadd.xlane.f32.xlu0 %v1754
        %v1756 = vpop.xlane.xlu0 %1755
        %v1757 = vadd.f32 %v1696, %v1698
        %1758 = vadd.xlane.f32.xlu0 %v1757
        %v1759 = vpop.xlane.xlu0 %1758
        %v1760 = vadd.f32 %v1700, %v1702
        %1761 = vadd.xlane.f32.xlu0 %v1760
        %v1762 = vpop.xlane.xlu0 %1761
        %v1763 = vadd.f32 %v1704, %v1706
        %1764 = vadd.xlane.f32.xlu0 %v1763
        %v1765 = vpop.xlane.xlu0 %1764
        %v1766 = vadd.f32 %v1708, %v1710
        %1767 = vadd.xlane.f32.xlu0 %v1766
        %v1768 = vpop.xlane.xlu0 %1767
        %v1769 = vadd.f32 %v1712, %v1714
        %1770 = vadd.xlane.f32.xlu0 %v1769
        %v1771 = vpop.xlane.xlu0 %1770
        %v1772 = vadd.f32 %v1716, %v1718
        %1773 = vadd.xlane.f32.xlu0 %v1772
        %v1774 = vpop.xlane.xlu0 %1773
        %v1775 = vadd.f32 %v1720, %v1722
        %1776 = vadd.xlane.f32.xlu0 %v1775
        %v1777 = vpop.xlane.xlu0 %1776
        %v1778 = vadd.f32 %v1724, %v1726
        %1779 = vadd.xlane.f32.xlu0 %v1778
        %v1780 = vpop.xlane.xlu0 %1779
        %v1781 = vadd.f32 %v1728, %v1730
        %1782 = vadd.xlane.f32.xlu0 %v1781
        %v1783 = vpop.xlane.xlu0 %1782
        %v1784 = vadd.f32 %v1732, %v1734
        %1785 = vadd.xlane.f32.xlu0 %v1784
        %v1786 = vpop.xlane.xlu0 %1785
        %v1787 = vadd.f32 %v1736, %v1738
        %1788 = vadd.xlane.f32.xlu0 %v1787
        %v1789 = vpop.xlane.xlu0 %1788
        %v1790 = vadd.f32 %v1740, %v1742
        %1791 = vadd.xlane.f32.xlu0 %v1790
        %v1792 = vpop.xlane.xlu0 %1791
        %v1793 = vadd.f32 %v1744, %v1746
        %1794 = vadd.xlane.f32.xlu0 %v1793
        %v1795 = vpop.xlane.xlu0 %1794
        %v1796 = vadd.f32 %v1748, %v1750
        %1797 = vadd.xlane.f32.xlu0 %v1796
        %v1798 = vpop.xlane.xlu0 %1797
        %vm1799 = vcmp.gt.f32.partialorder %v1753, 0.0
        %vm1800 = vcmp.gt.f32.partialorder %v1756, 0.0
        %vm1801 = vcmp.gt.f32.partialorder %v1759, 0.0
        %vm1802 = vcmp.gt.f32.partialorder %v1762, 0.0
        %vm1803 = vcmp.gt.f32.partialorder %v1765, 0.0
        %vm1804 = vcmp.gt.f32.partialorder %v1768, 0.0
        %vm1805 = vcmp.gt.f32.partialorder %v1771, 0.0
        %vm1806 = vcmp.gt.f32.partialorder %v1774, 0.0
        %vm1807 = vcmp.gt.f32.partialorder %v1777, 0.0
        %vm1808 = vcmp.gt.f32.partialorder %v1780, 0.0
        %vm1809 = vcmp.gt.f32.partialorder %v1783, 0.0
        %vm1810 = vcmp.gt.f32.partialorder %v1786, 0.0
        %vm1811 = vcmp.gt.f32.partialorder %v1789, 0.0
        %vm1812 = vcmp.gt.f32.partialorder %v1792, 0.0
        %vm1813 = vcmp.gt.f32.partialorder %v1795, 0.0
        %vm1814 = vcmp.gt.f32.partialorder %v1798, 0.0
        %v1815 = vsel %vm1799, %v1753, 1.0
        %v1816 = vsel %vm1800, %v1756, 1.0
        %v1817 = vsel %vm1801, %v1759, 1.0
        %v1818 = vsel %vm1802, %v1762, 1.0
        %v1819 = vsel %vm1803, %v1765, 1.0
        %v1820 = vsel %vm1804, %v1768, 1.0
        %v1821 = vsel %vm1805, %v1771, 1.0
        %v1822 = vsel %vm1806, %v1774, 1.0
        %v1823 = vsel %vm1807, %v1777, 1.0
        %v1824 = vsel %vm1808, %v1780, 1.0
        %v1825 = vsel %vm1809, %v1783, 1.0
        %v1826 = vsel %vm1810, %v1786, 1.0
        %v1827 = vsel %vm1811, %v1789, 1.0
        %v1828 = vsel %vm1812, %v1792, 1.0
        %v1829 = vsel %vm1813, %v1795, 1.0
        %v1830 = vsel %vm1814, %v1798, 1.0
        %v1831 = vrcp.pop %v1815
        %v1832 = vmul.f32 1.0, %v1831
        %v1833 = vrcp.pop %v1816
        %v1834 = vmul.f32 1.0, %v1833
        %v1835 = vrcp.pop %v1817
        %v1836 = vmul.f32 1.0, %v1835
        %v1837 = vrcp.pop %v1818
        %v1838 = vmul.f32 1.0, %v1837
        %v1839 = vrcp.pop %v1819
        %v1840 = vmul.f32 1.0, %v1839
        %v1841 = vrcp.pop %v1820
        %v1842 = vmul.f32 1.0, %v1841
        %v1843 = vrcp.pop %v1821
        %v1844 = vmul.f32 1.0, %v1843
        %v1845 = vrcp.pop %v1822
        %v1846 = vmul.f32 1.0, %v1845
        %v1847 = vrcp.pop %v1823
        %v1848 = vmul.f32 1.0, %v1847
        %v1849 = vrcp.pop %v1824
        %v1850 = vmul.f32 1.0, %v1849
        %v1851 = vrcp.pop %v1825
        %v1852 = vmul.f32 1.0, %v1851
        %v1853 = vrcp.pop %v1826
        %v1854 = vmul.f32 1.0, %v1853
        %v1855 = vrcp.pop %v1827
        %v1856 = vmul.f32 1.0, %v1855
        %v1857 = vrcp.pop %v1828
        %v1858 = vmul.f32 1.0, %v1857
        %v1859 = vrcp.pop %v1829
        %v1860 = vmul.f32 1.0, %v1859
        %v1861 = vrcp.pop %v1830
        %v1862 = vmul.f32 1.0, %v1861
        %v1863 = vld [vmem:[#allocation2] sm:$0xff]
        %v1864 = vld [vmem:[#allocation2 + $0x8] sm:$0xff]
        %v1865 = vld [vmem:[#allocation2 + $0x10] sm:$0xff]
        %v1866 = vld [vmem:[#allocation2 + $0x18] sm:$0xff]
        %v1867 = vld [vmem:[#allocation2 + $0x20] sm:$0xff]
        %v1868 = vld [vmem:[#allocation2 + $0x28] sm:$0xff]
        %v1869 = vld [vmem:[#allocation2 + $0x30] sm:$0xff]
        %v1870 = vld [vmem:[#allocation2 + $0x38] sm:$0xff]
        %v1871 = vld [vmem:[#allocation2 + $0x40] sm:$0xff]
        %v1872 = vld [vmem:[#allocation2 + $0x48] sm:$0xff]
        %v1873 = vld [vmem:[#allocation2 + $0x50] sm:$0xff]
        %v1874 = vld [vmem:[#allocation2 + $0x58] sm:$0xff]
        %v1875 = vld [vmem:[#allocation2 + $0x60] sm:$0xff]
        %v1876 = vld [vmem:[#allocation2 + $0x68] sm:$0xff]
        %v1877 = vld [vmem:[#allocation2 + $0x70] sm:$0xff]
        %v1878 = vld [vmem:[#allocation2 + $0x78] sm:$0xff]
        %v1879 = vld [vmem:[#allocation2 + $0x80] sm:$0xff]
        %v1880 = vld [vmem:[#allocation2 + $0x88] sm:$0xff]
        %v1881 = vld [vmem:[#allocation2 + $0x90] sm:$0xff]
        %v1882 = vld [vmem:[#allocation2 + $0x98] sm:$0xff]
        %v1883 = vld [vmem:[#allocation2 + $0xa0] sm:$0xff]
        %v1884 = vld [vmem:[#allocation2 + $0xa8] sm:$0xff]
        %v1885 = vld [vmem:[#allocation2 + $0xb0] sm:$0xff]
        %v1886 = vld [vmem:[#allocation2 + $0xb8] sm:$0xff]
        %v1887 = vld [vmem:[#allocation2 + $0xc0] sm:$0xff]
        %v1888 = vld [vmem:[#allocation2 + $0xc8] sm:$0xff]
        %v1889 = vld [vmem:[#allocation2 + $0xd0] sm:$0xff]
        %v1890 = vld [vmem:[#allocation2 + $0xd8] sm:$0xff]
        %v1891 = vld [vmem:[#allocation2 + $0xe0] sm:$0xff]
        %v1892 = vld [vmem:[#allocation2 + $0xe8] sm:$0xff]
        %v1893 = vld [vmem:[#allocation2 + $0xf0] sm:$0xff]
        %v1894 = vld [vmem:[#allocation2 + $0xf8] sm:$0xff]
        %1895 = vmatprep.subr.mxu0 0.0
        %1896 = vmatpush1.msra.mxu0 %v1863
        %1897 = vmatprep.subr.mxu0 0.0
        %1898 = vmatpush1.msra.mxu0 %v1864
        %1899 = vmatprep.subr.mxu0 0.0
        %1900 = vmatpush1.msra.mxu0 %v1865
        %1901 = vmatprep.subr.mxu0 0.0
        %1902 = vmatpush1.msra.mxu0 %v1866
        %1903 = vmatprep.subr.mxu0 0.0
        %1904 = vmatpush1.msra.mxu0 %v1867
        %1905 = vmatprep.subr.mxu0 0.0
        %1906 = vmatpush1.msra.mxu0 %v1868
        %1907 = vmatprep.subr.mxu0 0.0
        %1908 = vmatpush1.msra.mxu0 %v1869
        %1909 = vmatprep.subr.mxu0 0.0
        %1910 = vmatpush1.msra.mxu0 %v1870
        %1911 = vmatprep.subr.mxu0 0.0
        %1912 = vmatpush1.msra.mxu0 %v1871
        %1913 = vmatprep.subr.mxu0 0.0
        %1914 = vmatpush1.msra.mxu0 %v1872
        %1915 = vmatprep.subr.mxu0 0.0
        %1916 = vmatpush1.msra.mxu0 %v1873
        %1917 = vmatprep.subr.mxu0 0.0
        %1918 = vmatpush1.msra.mxu0 %v1874
        %1919 = vmatprep.subr.mxu0 0.0
        %1920 = vmatpush1.msra.mxu0 %v1875
        %1921 = vmatprep.subr.mxu0 0.0
        %1922 = vmatpush1.msra.mxu0 %v1876
        %1923 = vmatprep.subr.mxu0 0.0
        %1924 = vmatpush1.msra.mxu0 %v1877
        %1925 = vmatprep.subr.mxu0 0.0
        %1926 = vmatpush1.msra.mxu0 %v1878
        %1927 = vmatprep.subr.mxu0 0.0
        %1928 = vmatpush1.msra.mxu0 %v1879
        %1929 = vmatprep.subr.mxu0 0.0
        %1930 = vmatpush1.msra.mxu0 %v1880
        %1931 = vmatprep.subr.mxu0 0.0
        %1932 = vmatpush1.msra.mxu0 %v1881
        %1933 = vmatprep.subr.mxu0 0.0
        %1934 = vmatpush1.msra.mxu0 %v1882
        %1935 = vmatprep.subr.mxu0 0.0
        %1936 = vmatpush1.msra.mxu0 %v1883
        %1937 = vmatprep.subr.mxu0 0.0
        %1938 = vmatpush1.msra.mxu0 %v1884
        %1939 = vmatprep.subr.mxu0 0.0
        %1940 = vmatpush1.msra.mxu0 %v1885
        %1941 = vmatprep.subr.mxu0 0.0
        %1942 = vmatpush1.msra.mxu0 %v1886
        %1943 = vmatprep.subr.mxu0 0.0
        %1944 = vmatpush1.msra.mxu0 %v1887
        %1945 = vmatprep.subr.mxu0 0.0
        %1946 = vmatpush1.msra.mxu0 %v1888
        %1947 = vmatprep.subr.mxu0 0.0
        %1948 = vmatpush1.msra.mxu0 %v1889
        %1949 = vmatprep.subr.mxu0 0.0
        %1950 = vmatpush1.msra.mxu0 %v1890
        %1951 = vmatprep.subr.mxu0 0.0
        %1952 = vmatpush1.msra.mxu0 %v1891
        %1953 = vmatprep.subr.mxu0 0.0
        %1954 = vmatpush1.msra.mxu0 %v1892
        %1955 = vmatprep.subr.mxu0 0.0
        %1956 = vmatpush1.msra.mxu0 %v1893
        %1957 = vmatprep.subr.mxu0 0.0
        %1958 = vmatpush1.msra.mxu0 %v1894
        %1959 = vmatprep.mubr.f32.mxu0 %v1690
        %1960 = vmatmul.mubr.f32.gmra.mrb[0].mxu0 %v1688
        %v1961 = vpop.f32.mrb[0].mxu0
        %v1962 = vadd.f32 0.0, %v1961
        %v1963 = vpop.f32.mrb[0].mxu0
        %1964 = vmatprep.mubr.f32.mxu0 %v1694
        %1965 = vmatmul.mubr.f32.gmra.mrb[0].mxu0 %v1692
        %v1966 = vpop.f32.mrb[0].mxu0
        %v1967 = vadd.f32 0.0, %v1966
        %v1968 = vpop.f32.mrb[0].mxu0
        %1969 = vmatprep.mubr.f32.mxu0 %v1698
        %1970 = vmatmul.mubr.f32.gmra.mrb[0].mxu0 %v1696
        %v1971 = vpop.f32.mrb[0].mxu0
        %v1972 = vadd.f32 0.0, %v1971
        %v1973 = vpop.f32.mrb[0].mxu0
        %1974 = vmatprep.mubr.f32.mxu0 %v1702
        %1975 = vmatmul.mubr.f32.gmra.mrb[0].mxu0 %v1700
        %v1976 = vpop.f32.mrb[0].mxu0
        %v1977 = vadd.f32 0.0, %v1976
        %v1978 = vpop.f32.mrb[0].mxu0
        %1979 = vmatprep.mubr.f32.mxu0 %v1706
        %1980 = vmatmul.mubr.f32.gmra.mrb[0].mxu0 %v1704
        %v1981 = vpop.f32.mrb[0].mxu0
        %v1982 = vadd.f32 0.0, %v1981
        %v1983 = vpop.f32.mrb[0].mxu0
        %1984 = vmatprep.mubr.f32.mxu0 %v1710
        %1985 = vmatmul.mubr.f32.gmra.mrb[0].mxu0 %v1708
        %v1986 = vpop.f32.mrb[0].mxu0
        %v1987 = vadd.f32 0.0, %v1986
        %v1988 = vpop.f32.mrb[0].mxu0
        %1989 = vmatprep.mubr.f32.mxu0 %v1714
        %1990 = vmatmul.mubr.f32.gmra.mrb[0].mxu0 %v1712
        %v1991 = vpop.f32.mrb[0].mxu0
        %v1992 = vadd.f32 0.0, %v1991
        %v1993 = vpop.f32.mrb[0].mxu0
        %1994 = vmatprep.mubr.f32.mxu0 %v1718
        %1995 = vmatmul.mubr.f32.gmra.mrb[0].mxu0 %v1716
        %v1996 = vpop.f32.mrb[0].mxu0
        %v1997 = vadd.f32 0.0, %v1996
        %v1998 = vpop.f32.mrb[0].mxu0
        %1999 = vmatprep.mubr.f32.mxu0 %v1722
        %2000 = vmatmul.mubr.f32.gmra.mrb[0].mxu0 %v1720
        %v2001 = vpop.f32.mrb[0].mxu0
        %v2002 = vadd.f32 0.0, %v2001
        %v2003 = vpop.f32.mrb[0].mxu0
        %2004 = vmatprep.mubr.f32.mxu0 %v1726
        %2005 = vmatmul.mubr.f32.gmra.mrb[0].mxu0 %v1724
        %v2006 = vpop.f32.mrb[0].mxu0
        %v2007 = vadd.f32 0.0, %v2006
        %v2008 = vpop.f32.mrb[0].mxu0
        %2009 = vmatprep.mubr.f32.mxu0 %v1730
        %2010 = vmatmul.mubr.f32.gmra.mrb[0].mxu0 %v1728
        %v2011 = vpop.f32.mrb[0].mxu0
        %v2012 = vadd.f32 0.0, %v2011
        %v2013 = vpop.f32.mrb[0].mxu0
        %2014 = vmatprep.mubr.f32.mxu0 %v1734
        %2015 = vmatmul.mubr.f32.gmra.mrb[0].mxu0 %v1732
        %v2016 = vpop.f32.mrb[0].mxu0
        %v2017 = vadd.f32 0.0, %v2016
        %v2018 = vpop.f32.mrb[0].mxu0
        %2019 = vmatprep.mubr.f32.mxu0 %v1738
        %2020 = vmatmul.mubr.f32.gmra.mrb[0].mxu0 %v1736
        %v2021 = vpop.f32.mrb[0].mxu0
        %v2022 = vadd.f32 0.0, %v2021
        %v2023 = vpop.f32.mrb[0].mxu0
        %2024 = vmatprep.mubr.f32.mxu0 %v1742
        %2025 = vmatmul.mubr.f32.gmra.mrb[0].mxu0 %v1740
        %v2026 = vpop.f32.mrb[0].mxu0
        %v2027 = vadd.f32 0.0, %v2026
        %v2028 = vpop.f32.mrb[0].mxu0
        %2029 = vmatprep.mubr.f32.mxu0 %v1746
        %2030 = vmatmul.mubr.f32.gmra.mrb[0].mxu0 %v1744
        %v2031 = vpop.f32.mrb[0].mxu0
        %v2032 = vadd.f32 0.0, %v2031
        %v2033 = vpop.f32.mrb[0].mxu0
        %2034 = vmatprep.mubr.f32.mxu0 %v1750
        %2035 = vmatmul.mubr.f32.gmra.mrb[0].mxu0 %v1748
        %v2036 = vpop.f32.mrb[0].mxu0
        %v2037 = vadd.f32 0.0, %v2036
        %v2038 = vpop.f32.mrb[0].mxu0
        %2039 = vdwg.mxu0
        %v2040 = vmul.f32 %v1962, %v1832
        %v2041 = vmul.f32 %v1967, %v1834
        %v2042 = vmul.f32 %v1972, %v1836
        %v2043 = vmul.f32 %v1977, %v1838
        %v2044 = vmul.f32 %v1982, %v1840
        %v2045 = vmul.f32 %v1987, %v1842
        %v2046 = vmul.f32 %v1992, %v1844
        %v2047 = vmul.f32 %v1997, %v1846
        %v2048 = vmul.f32 %v2002, %v1848
        %v2049 = vmul.f32 %v2007, %v1850
        %v2050 = vmul.f32 %v2012, %v1852
        %v2051 = vmul.f32 %v2017, %v1854
        %v2052 = vmul.f32 %v2022, %v1856
        %v2053 = vmul.f32 %v2027, %v1858
        %v2054 = vmul.f32 %v2032, %v1860
        %v2055 = vmul.f32 %v2037, %v1862
        %s2056 = scalar_lea.vmem [#allocation4], 1
        %v2057 = vld [vmem:[%s2056] ss:$4 sm:$0x3]
        %2058 = vset.pattern.permute.xlu0 1
        %2059 = vperm.xlu0 %2058, %v1355
        %v2060 = vpop.permute.xlu0 %2059
        %2062 = vset.pattern.permute.xlu0 1
        %2063 = vperm.xlu0 %2062, %v1356
        %v2064 = vpop.permute.xlu0 %2063
        %2066 = vset.pattern.permute.xlu0 1
        %2067 = vperm.xlu0 %2066, %v1357
        %v2068 = vpop.permute.xlu0 %2067
        %2070 = vset.pattern.permute.xlu0 1
        %2071 = vperm.xlu0 %2070, %v1358
        %v2072 = vpop.permute.xlu0 %2071
        %2074 = vset.pattern.permute.xlu0 1
        %2075 = vperm.xlu0 %2074, %v1359
        %v2076 = vpop.permute.xlu0 %2075
        %2078 = vset.pattern.permute.xlu0 1
        %2079 = vperm.xlu0 %2078, %v1360
        %v2080 = vpop.permute.xlu0 %2079
        %2082 = vset.pattern.permute.xlu0 1
        %2083 = vperm.xlu0 %2082, %v1361
        %v2084 = vpop.permute.xlu0 %2083
        %2086 = vset.pattern.permute.xlu0 1
        %2087 = vperm.xlu0 %2086, %v1362
        %v2088 = vpop.permute.xlu0 %2087
        %2090 = vset.pattern.permute.xlu0 1
        %2091 = vperm.xlu0 %2090, %v1363
        %v2092 = vpop.permute.xlu0 %2091
        %2094 = vset.pattern.permute.xlu0 1
        %2095 = vperm.xlu0 %2094, %v1364
        %v2096 = vpop.permute.xlu0 %2095
        %2098 = vset.pattern.permute.xlu0 1
        %2099 = vperm.xlu0 %2098, %v1365
        %v2100 = vpop.permute.xlu0 %2099
        %2102 = vset.pattern.permute.xlu0 1
        %2103 = vperm.xlu0 %2102, %v1366
        %v2104 = vpop.permute.xlu0 %2103
        %2106 = vset.pattern.permute.xlu0 1
        %2107 = vperm.xlu0 %2106, %v1367
        %v2108 = vpop.permute.xlu0 %2107
        %2110 = vset.pattern.permute.xlu0 1
        %2111 = vperm.xlu0 %2110, %v1368
        %v2112 = vpop.permute.xlu0 %2111
        %2114 = vset.pattern.permute.xlu0 1
        %2115 = vperm.xlu0 %2114, %v1369
        %v2116 = vpop.permute.xlu0 %2115
        %2118 = vset.pattern.permute.xlu0 1
        %2119 = vperm.xlu0 %2118, %v1370
        %v2120 = vpop.permute.xlu0 %2119
        %v2123 = vlaneseq
        %v2124 = vshrl.u32 %v2123, 7
        %v2125 = vsub.s32 0, %v2124
        %v2126 = vrot.slane %v2057, %v2125
        %v2127 = vlaneseq
        %v2128 = vshrl.u32 %v2127, 7
        %v2129 = vsub.s32 1, %v2128
        %v2130 = vrot.slane %v2057, %v2129
        %v2133 = vadd.f32 %v2060, %v2126
        %v2134 = vadd.f32 %v2060, %v2130
        %v2135 = vadd.f32 %v2064, %v2126
        %v2136 = vadd.f32 %v2064, %v2130
        %v2137 = vadd.f32 %v2068, %v2126
        %v2138 = vadd.f32 %v2068, %v2130
        %v2139 = vadd.f32 %v2072, %v2126
        %v2140 = vadd.f32 %v2072, %v2130
        %v2141 = vadd.f32 %v2076, %v2126
        %v2142 = vadd.f32 %v2076, %v2130
        %v2143 = vadd.f32 %v2080, %v2126
        %v2144 = vadd.f32 %v2080, %v2130
        %v2145 = vadd.f32 %v2084, %v2126
        %v2146 = vadd.f32 %v2084, %v2130
        %v2147 = vadd.f32 %v2088, %v2126
        %v2148 = vadd.f32 %v2088, %v2130
        %v2149 = vadd.f32 %v2092, %v2126
        %v2150 = vadd.f32 %v2092, %v2130
        %v2151 = vadd.f32 %v2096, %v2126
        %v2152 = vadd.f32 %v2096, %v2130
        %v2153 = vadd.f32 %v2100, %v2126
        %v2154 = vadd.f32 %v2100, %v2130
        %v2155 = vadd.f32 %v2104, %v2126
        %v2156 = vadd.f32 %v2104, %v2130
        %v2157 = vadd.f32 %v2108, %v2126
        %v2158 = vadd.f32 %v2108, %v2130
        %v2159 = vadd.f32 %v2112, %v2126
        %v2160 = vadd.f32 %v2112, %v2130
        %v2161 = vadd.f32 %v2116, %v2126
        %v2162 = vadd.f32 %v2116, %v2130
        %v2163 = vadd.f32 %v2120, %v2126
        %v2164 = vadd.f32 %v2120, %v2130
        %v2165 = vmul.f32 %v2133, 0.2
        %v2166 = vmul.f32 %v2134, 0.2
        %v2167 = vmul.f32 %v2135, 0.2
        %v2168 = vmul.f32 %v2136, 0.2
        %v2169 = vmul.f32 %v2137, 0.2
        %v2170 = vmul.f32 %v2138, 0.2
        %v2171 = vmul.f32 %v2139, 0.2
        %v2172 = vmul.f32 %v2140, 0.2
        %v2173 = vmul.f32 %v2141, 0.2
        %v2174 = vmul.f32 %v2142, 0.2
        %v2175 = vmul.f32 %v2143, 0.2
        %v2176 = vmul.f32 %v2144, 0.2
        %v2177 = vmul.f32 %v2145, 0.2
        %v2178 = vmul.f32 %v2146, 0.2
        %v2179 = vmul.f32 %v2147, 0.2
        %v2180 = vmul.f32 %v2148, 0.2
        %v2181 = vmul.f32 %v2149, 0.2
        %v2182 = vmul.f32 %v2150, 0.2
        %v2183 = vmul.f32 %v2151, 0.2
        %v2184 = vmul.f32 %v2152, 0.2
        %v2185 = vmul.f32 %v2153, 0.2
        %v2186 = vmul.f32 %v2154, 0.2
        %v2187 = vmul.f32 %v2155, 0.2
        %v2188 = vmul.f32 %v2156, 0.2
        %v2189 = vmul.f32 %v2157, 0.2
        %v2190 = vmul.f32 %v2158, 0.2
        %v2191 = vmul.f32 %v2159, 0.2
        %v2192 = vmul.f32 %v2160, 0.2
        %v2193 = vmul.f32 %v2161, 0.2
        %v2194 = vmul.f32 %v2162, 0.2
        %v2195 = vmul.f32 %v2163, 0.2
        %v2196 = vmul.f32 %v2164, 0.2
        %v2197 = vmax.f32 %v2133, %v2165
        %v2198 = vmax.f32 %v2134, %v2166
        %v2199 = vmax.f32 %v2135, %v2167
        %v2200 = vmax.f32 %v2136, %v2168
        %v2201 = vmax.f32 %v2137, %v2169
        %v2202 = vmax.f32 %v2138, %v2170
        %v2203 = vmax.f32 %v2139, %v2171
        %v2204 = vmax.f32 %v2140, %v2172
        %v2205 = vmax.f32 %v2141, %v2173
        %v2206 = vmax.f32 %v2142, %v2174
        %v2207 = vmax.f32 %v2143, %v2175
        %v2208 = vmax.f32 %v2144, %v2176
        %v2209 = vmax.f32 %v2145, %v2177
        %v2210 = vmax.f32 %v2146, %v2178
        %v2211 = vmax.f32 %v2147, %v2179
        %v2212 = vmax.f32 %v2148, %v2180
        %v2213 = vmax.f32 %v2149, %v2181
        %v2214 = vmax.f32 %v2150, %v2182
        %v2215 = vmax.f32 %v2151, %v2183
        %v2216 = vmax.f32 %v2152, %v2184
        %v2217 = vmax.f32 %v2153, %v2185
        %v2218 = vmax.f32 %v2154, %v2186
        %v2219 = vmax.f32 %v2155, %v2187
        %v2220 = vmax.f32 %v2156, %v2188
        %v2221 = vmax.f32 %v2157, %v2189
        %v2222 = vmax.f32 %v2158, %v2190
        %v2223 = vmax.f32 %v2159, %v2191
        %v2224 = vmax.f32 %v2160, %v2192
        %v2225 = vmax.f32 %v2161, %v2193
        %v2226 = vmax.f32 %v2162, %v2194
        %v2227 = vmax.f32 %v2163, %v2195
        %v2228 = vmax.f32 %v2164, %v2196
        %v2229 = vadd.f32 %v2197, %v1321
        %v2230 = vadd.f32 %v2198, %v1322
        %v2231 = vadd.f32 %v2199, %v1323
        %v2232 = vadd.f32 %v2200, %v1324
        %v2233 = vadd.f32 %v2201, %v1325
        %v2234 = vadd.f32 %v2202, %v1326
        %v2235 = vadd.f32 %v2203, %v1327
        %v2236 = vadd.f32 %v2204, %v1328
        %v2237 = vadd.f32 %v2205, %v1329
        %v2238 = vadd.f32 %v2206, %v1330
        %v2239 = vadd.f32 %v2207, %v1331
        %v2240 = vadd.f32 %v2208, %v1332
        %v2241 = vadd.f32 %v2209, %v1333
        %v2242 = vadd.f32 %v2210, %v1334
        %v2243 = vadd.f32 %v2211, %v1335
        %v2244 = vadd.f32 %v2212, %v1336
        %v2245 = vadd.f32 %v2213, %v1337
        %v2246 = vadd.f32 %v2214, %v1338
        %v2247 = vadd.f32 %v2215, %v1339
        %v2248 = vadd.f32 %v2216, %v1340
        %v2249 = vadd.f32 %v2217, %v1341
        %v2250 = vadd.f32 %v2218, %v1342
        %v2251 = vadd.f32 %v2219, %v1343
        %v2252 = vadd.f32 %v2220, %v1344
        %v2253 = vadd.f32 %v2221, %v1345
        %v2254 = vadd.f32 %v2222, %v1346
        %v2255 = vadd.f32 %v2223, %v1347
        %v2256 = vadd.f32 %v2224, %v1348
        %v2257 = vadd.f32 %v2225, %v1349
        %v2258 = vadd.f32 %v2226, %v1350
        %v2259 = vadd.f32 %v2227, %v1351
        %v2260 = vadd.f32 %v2228, %v1352
        %v2261 = vmax.f32 %v2229, %v2230
        %2262 = vmax.xlane.f32.xlu0 %v2261
        %v2263 = vpop.xlane.xlu0 %2262
        %v2264 = vmax.f32 %v2231, %v2232
        %2265 = vmax.xlane.f32.xlu0 %v2264
        %v2266 = vpop.xlane.xlu0 %2265
        %v2267 = vmax.f32 %v2233, %v2234
        %2268 = vmax.xlane.f32.xlu0 %v2267
        %v2269 = vpop.xlane.xlu0 %2268
        %v2270 = vmax.f32 %v2235, %v2236
        %2271 = vmax.xlane.f32.xlu0 %v2270
        %v2272 = vpop.xlane.xlu0 %2271
        %v2273 = vmax.f32 %v2237, %v2238
        %2274 = vmax.xlane.f32.xlu0 %v2273
        %v2275 = vpop.xlane.xlu0 %2274
        %v2276 = vmax.f32 %v2239, %v2240
        %2277 = vmax.xlane.f32.xlu0 %v2276
        %v2278 = vpop.xlane.xlu0 %2277
        %v2279 = vmax.f32 %v2241, %v2242
        %2280 = vmax.xlane.f32.xlu0 %v2279
        %v2281 = vpop.xlane.xlu0 %2280
        %v2282 = vmax.f32 %v2243, %v2244
        %2283 = vmax.xlane.f32.xlu0 %v2282
        %v2284 = vpop.xlane.xlu0 %2283
        %v2285 = vmax.f32 %v2245, %v2246
        %2286 = vmax.xlane.f32.xlu0 %v2285
        %v2287 = vpop.xlane.xlu0 %2286
        %v2288 = vmax.f32 %v2247, %v2248
        %2289 = vmax.xlane.f32.xlu0 %v2288
        %v2290 = vpop.xlane.xlu0 %2289
        %v2291 = vmax.f32 %v2249, %v2250
        %2292 = vmax.xlane.f32.xlu0 %v2291
        %v2293 = vpop.xlane.xlu0 %2292
        %v2294 = vmax.f32 %v2251, %v2252
        %2295 = vmax.xlane.f32.xlu0 %v2294
        %v2296 = vpop.xlane.xlu0 %2295
        %v2297 = vmax.f32 %v2253, %v2254
        %2298 = vmax.xlane.f32.xlu0 %v2297
        %v2299 = vpop.xlane.xlu0 %2298
        %v2300 = vmax.f32 %v2255, %v2256
        %2301 = vmax.xlane.f32.xlu0 %v2300
        %v2302 = vpop.xlane.xlu0 %2301
        %v2303 = vmax.f32 %v2257, %v2258
        %2304 = vmax.xlane.f32.xlu0 %v2303
        %v2305 = vpop.xlane.xlu0 %2304
        %v2306 = vmax.f32 %v2259, %v2260
        %2307 = vmax.xlane.f32.xlu0 %v2306
        %v2308 = vpop.xlane.xlu0 %2307
        %v2309 = vmax.f32 %v2263, -1e+20
        %v2310 = vmax.f32 %v2266, -1e+20
        %v2311 = vmax.f32 %v2269, -1e+20
        %v2312 = vmax.f32 %v2272, -1e+20
        %v2313 = vmax.f32 %v2275, -1e+20
        %v2314 = vmax.f32 %v2278, -1e+20
        %v2315 = vmax.f32 %v2281, -1e+20
        %v2316 = vmax.f32 %v2284, -1e+20
        %v2317 = vmax.f32 %v2287, -1e+20
        %v2318 = vmax.f32 %v2290, -1e+20
        %v2319 = vmax.f32 %v2293, -1e+20
        %v2320 = vmax.f32 %v2296, -1e+20
        %v2321 = vmax.f32 %v2299, -1e+20
        %v2322 = vmax.f32 %v2302, -1e+20
        %v2323 = vmax.f32 %v2305, -1e+20
        %v2324 = vmax.f32 %v2308, -1e+20
        %v2325 = vsub.f32 %v2229, %v2309
        %v2326 = vsub.f32 %v2230, %v2309
        %v2327 = vsub.f32 %v2231, %v2310
        %v2328 = vsub.f32 %v2232, %v2310
        %v2329 = vsub.f32 %v2233, %v2311
        %v2330 = vsub.f32 %v2234, %v2311
        %v2331 = vsub.f32 %v2235, %v2312
        %v2332 = vsub.f32 %v2236, %v2312
        %v2333 = vsub.f32 %v2237, %v2313
        %v2334 = vsub.f32 %v2238, %v2313
        %v2335 = vsub.f32 %v2239, %v2314
        %v2336 = vsub.f32 %v2240, %v2314
        %v2337 = vsub.f32 %v2241, %v2315
        %v2338 = vsub.f32 %v2242, %v2315
        %v2339 = vsub.f32 %v2243, %v2316
        %v2340 = vsub.f32 %v2244, %v2316
        %v2341 = vsub.f32 %v2245, %v2317
        %v2342 = vsub.f32 %v2246, %v2317
        %v2343 = vsub.f32 %v2247, %v2318
        %v2344 = vsub.f32 %v2248, %v2318
        %v2345 = vsub.f32 %v2249, %v2319
        %v2346 = vsub.f32 %v2250, %v2319
        %v2347 = vsub.f32 %v2251, %v2320
        %v2348 = vsub.f32 %v2252, %v2320
        %v2349 = vsub.f32 %v2253, %v2321
        %v2350 = vsub.f32 %v2254, %v2321
        %v2351 = vsub.f32 %v2255, %v2322
        %v2352 = vsub.f32 %v2256, %v2322
        %v2353 = vsub.f32 %v2257, %v2323
        %v2354 = vsub.f32 %v2258, %v2323
        %v2355 = vsub.f32 %v2259, %v2324
        %v2356 = vsub.f32 %v2260, %v2324
        %v2357 = vmul.f32 %v2325, 1.442695
        %v2358 = vpow.pop %v2357
        %v2359 = vmul.f32 %v2326, 1.442695
        %v2360 = vpow.pop %v2359
        %v2361 = vmul.f32 %v2327, 1.442695
        %v2362 = vpow.pop %v2361
        %v2363 = vmul.f32 %v2328, 1.442695
        %v2364 = vpow.pop %v2363
        %v2365 = vmul.f32 %v2329, 1.442695
        %v2366 = vpow.pop %v2365
        %v2367 = vmul.f32 %v2330, 1.442695
        %v2368 = vpow.pop %v2367
        %v2369 = vmul.f32 %v2331, 1.442695
        %v2370 = vpow.pop %v2369
        %v2371 = vmul.f32 %v2332, 1.442695
        %v2372 = vpow.pop %v2371
        %v2373 = vmul.f32 %v2333, 1.442695
        %v2374 = vpow.pop %v2373
        %v2375 = vmul.f32 %v2334, 1.442695
        %v2376 = vpow.pop %v2375
        %v2377 = vmul.f32 %v2335, 1.442695
        %v2378 = vpow.pop %v2377
        %v2379 = vmul.f32 %v2336, 1.442695
        %v2380 = vpow.pop %v2379
        %v2381 = vmul.f32 %v2337, 1.442695
        %v2382 = vpow.pop %v2381
        %v2383 = vmul.f32 %v2338, 1.442695
        %v2384 = vpow.pop %v2383
        %v2385 = vmul.f32 %v2339, 1.442695
        %v2386 = vpow.pop %v2385
        %v2387 = vmul.f32 %v2340, 1.442695
        %v2388 = vpow.pop %v2387
        %v2389 = vmul.f32 %v2341, 1.442695
        %v2390 = vpow.pop %v2389
        %v2391 = vmul.f32 %v2342, 1.442695
        %v2392 = vpow.pop %v2391
        %v2393 = vmul.f32 %v2343, 1.442695
        %v2394 = vpow.pop %v2393
        %v2395 = vmul.f32 %v2344, 1.442695
        %v2396 = vpow.pop %v2395
        %v2397 = vmul.f32 %v2345, 1.442695
        %v2398 = vpow.pop %v2397
        %v2399 = vmul.f32 %v2346, 1.442695
        %v2400 = vpow.pop %v2399
        %v2401 = vmul.f32 %v2347, 1.442695
        %v2402 = vpow.pop %v2401
        %v2403 = vmul.f32 %v2348, 1.442695
        %v2404 = vpow.pop %v2403
        %v2405 = vmul.f32 %v2349, 1.442695
        %v2406 = vpow.pop %v2405
        %v2407 = vmul.f32 %v2350, 1.442695
        %v2408 = vpow.pop %v2407
        %v2409 = vmul.f32 %v2351, 1.442695
        %v2410 = vpow.pop %v2409
        %v2411 = vmul.f32 %v2352, 1.442695
        %v2412 = vpow.pop %v2411
        %v2413 = vmul.f32 %v2353, 1.442695
        %v2414 = vpow.pop %v2413
        %v2415 = vmul.f32 %v2354, 1.442695
        %v2416 = vpow.pop %v2415
        %v2417 = vmul.f32 %v2355, 1.442695
        %v2418 = vpow.pop %v2417
        %v2419 = vmul.f32 %v2356, 1.442695
        %v2420 = vpow.pop %v2419
        %v2421 = vadd.f32 %v2358, %v2360
        %2422 = vadd.xlane.f32.xlu0 %v2421
        %v2423 = vpop.xlane.xlu0 %2422
        %v2424 = vadd.f32 %v2362, %v2364
        %2425 = vadd.xlane.f32.xlu0 %v2424
        %v2426 = vpop.xlane.xlu0 %2425
        %v2427 = vadd.f32 %v2366, %v2368
        %2428 = vadd.xlane.f32.xlu0 %v2427
        %v2429 = vpop.xlane.xlu0 %2428
        %v2430 = vadd.f32 %v2370, %v2372
        %2431 = vadd.xlane.f32.xlu0 %v2430
        %v2432 = vpop.xlane.xlu0 %2431
        %v2433 = vadd.f32 %v2374, %v2376
        %2434 = vadd.xlane.f32.xlu0 %v2433
        %v2435 = vpop.xlane.xlu0 %2434
        %v2436 = vadd.f32 %v2378, %v2380
        %2437 = vadd.xlane.f32.xlu0 %v2436
        %v2438 = vpop.xlane.xlu0 %2437
        %v2439 = vadd.f32 %v2382, %v2384
        %2440 = vadd.xlane.f32.xlu0 %v2439
        %v2441 = vpop.xlane.xlu0 %2440
        %v2442 = vadd.f32 %v2386, %v2388
        %2443 = vadd.xlane.f32.xlu0 %v2442
        %v2444 = vpop.xlane.xlu0 %2443
        %v2445 = vadd.f32 %v2390, %v2392
        %2446 = vadd.xlane.f32.xlu0 %v2445
        %v2447 = vpop.xlane.xlu0 %2446
        %v2448 = vadd.f32 %v2394, %v2396
        %2449 = vadd.xlane.f32.xlu0 %v2448
        %v2450 = vpop.xlane.xlu0 %2449
        %v2451 = vadd.f32 %v2398, %v2400
        %2452 = vadd.xlane.f32.xlu0 %v2451
        %v2453 = vpop.xlane.xlu0 %2452
        %v2454 = vadd.f32 %v2402, %v2404
        %2455 = vadd.xlane.f32.xlu0 %v2454
        %v2456 = vpop.xlane.xlu0 %2455
        %v2457 = vadd.f32 %v2406, %v2408
        %2458 = vadd.xlane.f32.xlu0 %v2457
        %v2459 = vpop.xlane.xlu0 %2458
        %v2460 = vadd.f32 %v2410, %v2412
        %2461 = vadd.xlane.f32.xlu0 %v2460
        %v2462 = vpop.xlane.xlu0 %2461
        %v2463 = vadd.f32 %v2414, %v2416
        %2464 = vadd.xlane.f32.xlu0 %v2463
        %v2465 = vpop.xlane.xlu0 %2464
        %v2466 = vadd.f32 %v2418, %v2420
        %2467 = vadd.xlane.f32.xlu0 %v2466
        %v2468 = vpop.xlane.xlu0 %2467
        %vm2469 = vcmp.gt.f32.partialorder %v2423, 0.0
        %vm2470 = vcmp.gt.f32.partialorder %v2426, 0.0
        %vm2471 = vcmp.gt.f32.partialorder %v2429, 0.0
        %vm2472 = vcmp.gt.f32.partialorder %v2432, 0.0
        %vm2473 = vcmp.gt.f32.partialorder %v2435, 0.0
        %vm2474 = vcmp.gt.f32.partialorder %v2438, 0.0
        %vm2475 = vcmp.gt.f32.partialorder %v2441, 0.0
        %vm2476 = vcmp.gt.f32.partialorder %v2444, 0.0
        %vm2477 = vcmp.gt.f32.partialorder %v2447, 0.0
        %vm2478 = vcmp.gt.f32.partialorder %v2450, 0.0
        %vm2479 = vcmp.gt.f32.partialorder %v2453, 0.0
        %vm2480 = vcmp.gt.f32.partialorder %v2456, 0.0
        %vm2481 = vcmp.gt.f32.partialorder %v2459, 0.0
        %vm2482 = vcmp.gt.f32.partialorder %v2462, 0.0
        %vm2483 = vcmp.gt.f32.partialorder %v2465, 0.0
        %vm2484 = vcmp.gt.f32.partialorder %v2468, 0.0
        %v2485 = vsel %vm2469, %v2423, 1.0
        %v2486 = vsel %vm2470, %v2426, 1.0
        %v2487 = vsel %vm2471, %v2429, 1.0
        %v2488 = vsel %vm2472, %v2432, 1.0
        %v2489 = vsel %vm2473, %v2435, 1.0
        %v2490 = vsel %vm2474, %v2438, 1.0
        %v2491 = vsel %vm2475, %v2441, 1.0
        %v2492 = vsel %vm2476, %v2444, 1.0
        %v2493 = vsel %vm2477, %v2447, 1.0
        %v2494 = vsel %vm2478, %v2450, 1.0
        %v2495 = vsel %vm2479, %v2453, 1.0
        %v2496 = vsel %vm2480, %v2456, 1.0
        %v2497 = vsel %vm2481, %v2459, 1.0
        %v2498 = vsel %vm2482, %v2462, 1.0
        %v2499 = vsel %vm2483, %v2465, 1.0
        %v2500 = vsel %vm2484, %v2468, 1.0
        %v2501 = vrcp.pop %v2485
        %v2502 = vmul.f32 1.0, %v2501
        %v2503 = vrcp.pop %v2486
        %v2504 = vmul.f32 1.0, %v2503
        %v2505 = vrcp.pop %v2487
        %v2506 = vmul.f32 1.0, %v2505
        %v2507 = vrcp.pop %v2488
        %v2508 = vmul.f32 1.0, %v2507
        %v2509 = vrcp.pop %v2489
        %v2510 = vmul.f32 1.0, %v2509
        %v2511 = vrcp.pop %v2490
        %v2512 = vmul.f32 1.0, %v2511
        %v2513 = vrcp.pop %v2491
        %v2514 = vmul.f32 1.0, %v2513
        %v2515 = vrcp.pop %v2492
        %v2516 = vmul.f32 1.0, %v2515
        %v2517 = vrcp.pop %v2493
        %v2518 = vmul.f32 1.0, %v2517
        %v2519 = vrcp.pop %v2494
        %v2520 = vmul.f32 1.0, %v2519
        %v2521 = vrcp.pop %v2495
        %v2522 = vmul.f32 1.0, %v2521
        %v2523 = vrcp.pop %v2496
        %v2524 = vmul.f32 1.0, %v2523
        %v2525 = vrcp.pop %v2497
        %v2526 = vmul.f32 1.0, %v2525
        %v2527 = vrcp.pop %v2498
        %v2528 = vmul.f32 1.0, %v2527
        %v2529 = vrcp.pop %v2499
        %v2530 = vmul.f32 1.0, %v2529
        %v2531 = vrcp.pop %v2500
        %v2532 = vmul.f32 1.0, %v2531
        %2565 = vrot.lane.b32.xlu0 %v1863, 120
        %v2566 = vpop.permute.xlu0 %2565
        %2567 = vrot.lane.b32.xlu0 %v1864, 120
        %v2568 = vpop.permute.xlu0 %2567
        %2569 = vrot.lane.b32.xlu0 %v1865, 120
        %v2570 = vpop.permute.xlu0 %2569
        %2571 = vrot.lane.b32.xlu0 %v1866, 120
        %v2572 = vpop.permute.xlu0 %2571
        %2573 = vrot.lane.b32.xlu0 %v1867, 120
        %v2574 = vpop.permute.xlu0 %2573
        %2575 = vrot.lane.b32.xlu0 %v1868, 120
        %v2576 = vpop.permute.xlu0 %2575
        %2577 = vrot.lane.b32.xlu0 %v1869, 120
        %v2578 = vpop.permute.xlu0 %2577
        %2579 = vrot.lane.b32.xlu0 %v1870, 120
        %v2580 = vpop.permute.xlu0 %2579
        %2581 = vrot.lane.b32.xlu0 %v1871, 120
        %v2582 = vpop.permute.xlu0 %2581
        %2583 = vrot.lane.b32.xlu0 %v1872, 120
        %v2584 = vpop.permute.xlu0 %2583
        %2585 = vrot.lane.b32.xlu0 %v1873, 120
        %v2586 = vpop.permute.xlu0 %2585
        %2587 = vrot.lane.b32.xlu0 %v1874, 120
        %v2588 = vpop.permute.xlu0 %2587
        %2589 = vrot.lane.b32.xlu0 %v1875, 120
        %v2590 = vpop.permute.xlu0 %2589
        %2591 = vrot.lane.b32.xlu0 %v1876, 120
        %v2592 = vpop.permute.xlu0 %2591
        %2593 = vrot.lane.b32.xlu0 %v1877, 120
        %v2594 = vpop.permute.xlu0 %2593
        %2595 = vrot.lane.b32.xlu0 %v1878, 120
        %v2596 = vpop.permute.xlu0 %2595
        %2597 = vrot.lane.b32.xlu0 %v1879, 120
        %v2598 = vpop.permute.xlu0 %2597
        %2599 = vrot.lane.b32.xlu0 %v1880, 120
        %v2600 = vpop.permute.xlu0 %2599
        %2601 = vrot.lane.b32.xlu0 %v1881, 120
        %v2602 = vpop.permute.xlu0 %2601
        %2603 = vrot.lane.b32.xlu0 %v1882, 120
        %v2604 = vpop.permute.xlu0 %2603
        %2605 = vrot.lane.b32.xlu0 %v1883, 120
        %v2606 = vpop.permute.xlu0 %2605
        %2607 = vrot.lane.b32.xlu0 %v1884, 120
        %v2608 = vpop.permute.xlu0 %2607
        %2609 = vrot.lane.b32.xlu0 %v1885, 120
        %v2610 = vpop.permute.xlu0 %2609
        %2611 = vrot.lane.b32.xlu0 %v1886, 120
        %v2612 = vpop.permute.xlu0 %2611
        %2613 = vrot.lane.b32.xlu0 %v1887, 120
        %v2614 = vpop.permute.xlu0 %2613
        %2615 = vrot.lane.b32.xlu0 %v1888, 120
        %v2616 = vpop.permute.xlu0 %2615
        %2617 = vrot.lane.b32.xlu0 %v1889, 120
        %v2618 = vpop.permute.xlu0 %2617
        %2619 = vrot.lane.b32.xlu0 %v1890, 120
        %v2620 = vpop.permute.xlu0 %2619
        %2621 = vrot.lane.b32.xlu0 %v1891, 120
        %v2622 = vpop.permute.xlu0 %2621
        %2623 = vrot.lane.b32.xlu0 %v1892, 120
        %v2624 = vpop.permute.xlu0 %2623
        %2625 = vrot.lane.b32.xlu0 %v1893, 120
        %v2626 = vpop.permute.xlu0 %2625
        %2627 = vrot.lane.b32.xlu0 %v1894, 120
        %v2628 = vpop.permute.xlu0 %2627
        %2661 = vmatprep.subr.mxu0 0.0
        %2662 = vmatpush1.msra.mxu0 %v2566
        %2663 = vmatprep.subr.mxu0 0.0
        %2664 = vmatpush1.msra.mxu0 %v2568
        %2665 = vmatprep.subr.mxu0 0.0
        %2666 = vmatpush1.msra.mxu0 %v2570
        %2667 = vmatprep.subr.mxu0 0.0
        %2668 = vmatpush1.msra.mxu0 %v2572
        %2669 = vmatprep.subr.mxu0 0.0
        %2670 = vmatpush1.msra.mxu0 %v2574
        %2671 = vmatprep.subr.mxu0 0.0
        %2672 = vmatpush1.msra.mxu0 %v2576
        %2673 = vmatprep.subr.mxu0 0.0
        %2674 = vmatpush1.msra.mxu0 %v2578
        %2675 = vmatprep.subr.mxu0 0.0
        %2676 = vmatpush1.msra.mxu0 %v2580
        %2677 = vmatprep.subr.mxu0 0.0
        %2678 = vmatpush1.msra.mxu0 %v2582
        %2679 = vmatprep.subr.mxu0 0.0
        %2680 = vmatpush1.msra.mxu0 %v2584
        %2681 = vmatprep.subr.mxu0 0.0
        %2682 = vmatpush1.msra.mxu0 %v2586
        %2683 = vmatprep.subr.mxu0 0.0
        %2684 = vmatpush1.msra.mxu0 %v2588
        %2685 = vmatprep.subr.mxu0 0.0
        %2686 = vmatpush1.msra.mxu0 %v2590
        %2687 = vmatprep.subr.mxu0 0.0
        %2688 = vmatpush1.msra.mxu0 %v2592
        %2689 = vmatprep.subr.mxu0 0.0
        %2690 = vmatpush1.msra.mxu0 %v2594
        %2691 = vmatprep.subr.mxu0 0.0
        %2692 = vmatpush1.msra.mxu0 %v2596
        %2693 = vmatprep.subr.mxu0 0.0
        %2694 = vmatpush1.msra.mxu0 %v2598
        %2695 = vmatprep.subr.mxu0 0.0
        %2696 = vmatpush1.msra.mxu0 %v2600
        %2697 = vmatprep.subr.mxu0 0.0
        %2698 = vmatpush1.msra.mxu0 %v2602
        %2699 = vmatprep.subr.mxu0 0.0
        %2700 = vmatpush1.msra.mxu0 %v2604
        %2701 = vmatprep.subr.mxu0 0.0
        %2702 = vmatpush1.msra.mxu0 %v2606
        %2703 = vmatprep.subr.mxu0 0.0
        %2704 = vmatpush1.msra.mxu0 %v2608
        %2705 = vmatprep.subr.mxu0 0.0
        %2706 = vmatpush1.msra.mxu0 %v2610
        %2707 = vmatprep.subr.mxu0 0.0
        %2708 = vmatpush1.msra.mxu0 %v2612
        %2709 = vmatprep.subr.mxu0 0.0
        %2710 = vmatpush1.msra.mxu0 %v2614
        %2711 = vmatprep.subr.mxu0 0.0
        %2712 = vmatpush1.msra.mxu0 %v2616
        %2713 = vmatprep.subr.mxu0 0.0
        %2714 = vmatpush1.msra.mxu0 %v2618
        %2715 = vmatprep.subr.mxu0 0.0
        %2716 = vmatpush1.msra.mxu0 %v2620
        %2717 = vmatprep.subr.mxu0 0.0
        %2718 = vmatpush1.msra.mxu0 %v2622
        %2719 = vmatprep.subr.mxu0 0.0
        %2720 = vmatpush1.msra.mxu0 %v2624
        %2721 = vmatprep.subr.mxu0 0.0
        %2722 = vmatpush1.msra.mxu0 %v2626
        %2723 = vmatprep.subr.mxu0 0.0
        %2724 = vmatpush1.msra.mxu0 %v2628
        %2725 = vmatprep.mubr.f32.mxu0 %v2360
        %2726 = vmatmul.mubr.f32.gmra.mrb[0].mxu0 %v2358
        %v2727 = vpop.f32.mrb[0].mxu0
        %v2728 = vadd.f32 0.0, %v2727
        %v2729 = vpop.f32.mrb[0].mxu0
        %2730 = vmatprep.mubr.f32.mxu0 %v2364
        %2731 = vmatmul.mubr.f32.gmra.mrb[0].mxu0 %v2362
        %v2732 = vpop.f32.mrb[0].mxu0
        %v2733 = vadd.f32 0.0, %v2732
        %v2734 = vpop.f32.mrb[0].mxu0
        %2735 = vmatprep.mubr.f32.mxu0 %v2368
        %2736 = vmatmul.mubr.f32.gmra.mrb[0].mxu0 %v2366
        %v2737 = vpop.f32.mrb[0].mxu0
        %v2738 = vadd.f32 0.0, %v2737
        %v2739 = vpop.f32.mrb[0].mxu0
        %2740 = vmatprep.mubr.f32.mxu0 %v2372
        %2741 = vmatmul.mubr.f32.gmra.mrb[0].mxu0 %v2370
        %v2742 = vpop.f32.mrb[0].mxu0
        %v2743 = vadd.f32 0.0, %v2742
        %v2744 = vpop.f32.mrb[0].mxu0
        %2745 = vmatprep.mubr.f32.mxu0 %v2376
        %2746 = vmatmul.mubr.f32.gmra.mrb[0].mxu0 %v2374
        %v2747 = vpop.f32.mrb[0].mxu0
        %v2748 = vadd.f32 0.0, %v2747
        %v2749 = vpop.f32.mrb[0].mxu0
        %2750 = vmatprep.mubr.f32.mxu0 %v2380
        %2751 = vmatmul.mubr.f32.gmra.mrb[0].mxu0 %v2378
        %v2752 = vpop.f32.mrb[0].mxu0
        %v2753 = vadd.f32 0.0, %v2752
        %v2754 = vpop.f32.mrb[0].mxu0
        %2755 = vmatprep.mubr.f32.mxu0 %v2384
        %2756 = vmatmul.mubr.f32.gmra.mrb[0].mxu0 %v2382
        %v2757 = vpop.f32.mrb[0].mxu0
        %v2758 = vadd.f32 0.0, %v2757
        %v2759 = vpop.f32.mrb[0].mxu0
        %2760 = vmatprep.mubr.f32.mxu0 %v2388
        %2761 = vmatmul.mubr.f32.gmra.mrb[0].mxu0 %v2386
        %v2762 = vpop.f32.mrb[0].mxu0
        %v2763 = vadd.f32 0.0, %v2762
        %v2764 = vpop.f32.mrb[0].mxu0
        %2765 = vmatprep.mubr.f32.mxu0 %v2392
        %2766 = vmatmul.mubr.f32.gmra.mrb[0].mxu0 %v2390
        %v2767 = vpop.f32.mrb[0].mxu0
        %v2768 = vadd.f32 0.0, %v2767
        %v2769 = vpop.f32.mrb[0].mxu0
        %2770 = vmatprep.mubr.f32.mxu0 %v2396
        %2771 = vmatmul.mubr.f32.gmra.mrb[0].mxu0 %v2394
        %v2772 = vpop.f32.mrb[0].mxu0
        %v2773 = vadd.f32 0.0, %v2772
        %v2774 = vpop.f32.mrb[0].mxu0
        %2775 = vmatprep.mubr.f32.mxu0 %v2400
        %2776 = vmatmul.mubr.f32.gmra.mrb[0].mxu0 %v2398
        %v2777 = vpop.f32.mrb[0].mxu0
        %v2778 = vadd.f32 0.0, %v2777
        %v2779 = vpop.f32.mrb[0].mxu0
        %2780 = vmatprep.mubr.f32.mxu0 %v2404
        %2781 = vmatmul.mubr.f32.gmra.mrb[0].mxu0 %v2402
        %v2782 = vpop.f32.mrb[0].mxu0
        %v2783 = vadd.f32 0.0, %v2782
        %v2784 = vpop.f32.mrb[0].mxu0
        %2785 = vmatprep.mubr.f32.mxu0 %v2408
        %2786 = vmatmul.mubr.f32.gmra.mrb[0].mxu0 %v2406
        %v2787 = vpop.f32.mrb[0].mxu0
        %v2788 = vadd.f32 0.0, %v2787
        %v2789 = vpop.f32.mrb[0].mxu0
        %2790 = vmatprep.mubr.f32.mxu0 %v2412
        %2791 = vmatmul.mubr.f32.gmra.mrb[0].mxu0 %v2410
        %v2792 = vpop.f32.mrb[0].mxu0
        %v2793 = vadd.f32 0.0, %v2792
        %v2794 = vpop.f32.mrb[0].mxu0
        %2795 = vmatprep.mubr.f32.mxu0 %v2416
        %2796 = vmatmul.mubr.f32.gmra.mrb[0].mxu0 %v2414
        %v2797 = vpop.f32.mrb[0].mxu0
        %v2798 = vadd.f32 0.0, %v2797
        %v2799 = vpop.f32.mrb[0].mxu0
        %2800 = vmatprep.mubr.f32.mxu0 %v2420
        %2801 = vmatmul.mubr.f32.gmra.mrb[0].mxu0 %v2418
        %v2802 = vpop.f32.mrb[0].mxu0
        %v2803 = vadd.f32 0.0, %v2802
        %v2804 = vpop.f32.mrb[0].mxu0
        %2805 = vdwg.mxu0
        %v2806 = vmul.f32 %v2728, %v2502
        %v2807 = vmul.f32 %v2733, %v2504
        %v2808 = vmul.f32 %v2738, %v2506
        %v2809 = vmul.f32 %v2743, %v2508
        %v2810 = vmul.f32 %v2748, %v2510
        %v2811 = vmul.f32 %v2753, %v2512
        %v2812 = vmul.f32 %v2758, %v2514
        %v2813 = vmul.f32 %v2763, %v2516
        %v2814 = vmul.f32 %v2768, %v2518
        %v2815 = vmul.f32 %v2773, %v2520
        %v2816 = vmul.f32 %v2778, %v2522
        %v2817 = vmul.f32 %v2783, %v2524
        %v2818 = vmul.f32 %v2788, %v2526
        %v2819 = vmul.f32 %v2793, %v2528
        %v2820 = vmul.f32 %v2798, %v2530
        %v2821 = vmul.f32 %v2803, %v2532
        %s2822 = scalar_lea.vmem [#allocation4], 2
        %v2823 = vld [vmem:[%s2822] ss:$4 sm:$0x3]
        %2824 = vset.pattern.permute.xlu0 2
        %2825 = vperm.xlu0 %2824, %v1355
        %v2826 = vpop.permute.xlu0 %2825
        %2828 = vset.pattern.permute.xlu0 2
        %2829 = vperm.xlu0 %2828, %v1356
        %v2830 = vpop.permute.xlu0 %2829
        %2832 = vset.pattern.permute.xlu0 2
        %2833 = vperm.xlu0 %2832, %v1357
        %v2834 = vpop.permute.xlu0 %2833
        %2836 = vset.pattern.permute.xlu0 2
        %2837 = vperm.xlu0 %2836, %v1358
        %v2838 = vpop.permute.xlu0 %2837
        %2840 = vset.pattern.permute.xlu0 2
        %2841 = vperm.xlu0 %2840, %v1359
        %v2842 = vpop.permute.xlu0 %2841
        %2844 = vset.pattern.permute.xlu0 2
        %2845 = vperm.xlu0 %2844, %v1360
        %v2846 = vpop.permute.xlu0 %2845
        %2848 = vset.pattern.permute.xlu0 2
        %2849 = vperm.xlu0 %2848, %v1361
        %v2850 = vpop.permute.xlu0 %2849
        %2852 = vset.pattern.permute.xlu0 2
        %2853 = vperm.xlu0 %2852, %v1362
        %v2854 = vpop.permute.xlu0 %2853
        %2856 = vset.pattern.permute.xlu0 2
        %2857 = vperm.xlu0 %2856, %v1363
        %v2858 = vpop.permute.xlu0 %2857
        %2860 = vset.pattern.permute.xlu0 2
        %2861 = vperm.xlu0 %2860, %v1364
        %v2862 = vpop.permute.xlu0 %2861
        %2864 = vset.pattern.permute.xlu0 2
        %2865 = vperm.xlu0 %2864, %v1365
        %v2866 = vpop.permute.xlu0 %2865
        %2868 = vset.pattern.permute.xlu0 2
        %2869 = vperm.xlu0 %2868, %v1366
        %v2870 = vpop.permute.xlu0 %2869
        %2872 = vset.pattern.permute.xlu0 2
        %2873 = vperm.xlu0 %2872, %v1367
        %v2874 = vpop.permute.xlu0 %2873
        %2876 = vset.pattern.permute.xlu0 2
        %2877 = vperm.xlu0 %2876, %v1368
        %v2878 = vpop.permute.xlu0 %2877
        %2880 = vset.pattern.permute.xlu0 2
        %2881 = vperm.xlu0 %2880, %v1369
        %v2882 = vpop.permute.xlu0 %2881
        %2884 = vset.pattern.permute.xlu0 2
        %2885 = vperm.xlu0 %2884, %v1370
        %v2886 = vpop.permute.xlu0 %2885
        %v2889 = vlaneseq
        %v2890 = vshrl.u32 %v2889, 7
        %v2891 = vsub.s32 0, %v2890
        %v2892 = vrot.slane %v2823, %v2891
        %v2893 = vlaneseq
        %v2894 = vshrl.u32 %v2893, 7
        %v2895 = vsub.s32 1, %v2894
        %v2896 = vrot.slane %v2823, %v2895
        %v2899 = vadd.f32 %v2826, %v2892
        %v2900 = vadd.f32 %v2826, %v2896
        %v2901 = vadd.f32 %v2830, %v2892
        %v2902 = vadd.f32 %v2830, %v2896
        %v2903 = vadd.f32 %v2834, %v2892
        %v2904 = vadd.f32 %v2834, %v2896
        %v2905 = vadd.f32 %v2838, %v2892
        %v2906 = vadd.f32 %v2838, %v2896
        %v2907 = vadd.f32 %v2842, %v2892
        %v2908 = vadd.f32 %v2842, %v2896
        %v2909 = vadd.f32 %v2846, %v2892
        %v2910 = vadd.f32 %v2846, %v2896
        %v2911 = vadd.f32 %v2850, %v2892
        %v2912 = vadd.f32 %v2850, %v2896
        %v2913 = vadd.f32 %v2854, %v2892
        %v2914 = vadd.f32 %v2854, %v2896
        %v2915 = vadd.f32 %v2858, %v2892
        %v2916 = vadd.f32 %v2858, %v2896
        %v2917 = vadd.f32 %v2862, %v2892
        %v2918 = vadd.f32 %v2862, %v2896
        %v2919 = vadd.f32 %v2866, %v2892
        %v2920 = vadd.f32 %v2866, %v2896
        %v2921 = vadd.f32 %v2870, %v2892
        %v2922 = vadd.f32 %v2870, %v2896
        %v2923 = vadd.f32 %v2874, %v2892
        %v2924 = vadd.f32 %v2874, %v2896
        %v2925 = vadd.f32 %v2878, %v2892
        %v2926 = vadd.f32 %v2878, %v2896
        %v2927 = vadd.f32 %v2882, %v2892
        %v2928 = vadd.f32 %v2882, %v2896
        %v2929 = vadd.f32 %v2886, %v2892
        %v2930 = vadd.f32 %v2886, %v2896
        %v2931 = vmul.f32 %v2899, 0.2
        %v2932 = vmul.f32 %v2900, 0.2
        %v2933 = vmul.f32 %v2901, 0.2
        %v2934 = vmul.f32 %v2902, 0.2
        %v2935 = vmul.f32 %v2903, 0.2
        %v2936 = vmul.f32 %v2904, 0.2
        %v2937 = vmul.f32 %v2905, 0.2
        %v2938 = vmul.f32 %v2906, 0.2
        %v2939 = vmul.f32 %v2907, 0.2
        %v2940 = vmul.f32 %v2908, 0.2
        %v2941 = vmul.f32 %v2909, 0.2
        %v2942 = vmul.f32 %v2910, 0.2
        %v2943 = vmul.f32 %v2911, 0.2
        %v2944 = vmul.f32 %v2912, 0.2
        %v2945 = vmul.f32 %v2913, 0.2
        %v2946 = vmul.f32 %v2914, 0.2
        %v2947 = vmul.f32 %v2915, 0.2
        %v2948 = vmul.f32 %v2916, 0.2
        %v2949 = vmul.f32 %v2917, 0.2
        %v2950 = vmul.f32 %v2918, 0.2
        %v2951 = vmul.f32 %v2919, 0.2
        %v2952 = vmul.f32 %v2920, 0.2
        %v2953 = vmul.f32 %v2921, 0.2
        %v2954 = vmul.f32 %v2922, 0.2
        %v2955 = vmul.f32 %v2923, 0.2
        %v2956 = vmul.f32 %v2924, 0.2
        %v2957 = vmul.f32 %v2925, 0.2
        %v2958 = vmul.f32 %v2926, 0.2
        %v2959 = vmul.f32 %v2927, 0.2
        %v2960 = vmul.f32 %v2928, 0.2
        %v2961 = vmul.f32 %v2929, 0.2
        %v2962 = vmul.f32 %v2930, 0.2
        %v2963 = vmax.f32 %v2899, %v2931
        %v2964 = vmax.f32 %v2900, %v2932
        %v2965 = vmax.f32 %v2901, %v2933
        %v2966 = vmax.f32 %v2902, %v2934
        %v2967 = vmax.f32 %v2903, %v2935
        %v2968 = vmax.f32 %v2904, %v2936
        %v2969 = vmax.f32 %v2905, %v2937
        %v2970 = vmax.f32 %v2906, %v2938
        %v2971 = vmax.f32 %v2907, %v2939
        %v2972 = vmax.f32 %v2908, %v2940
        %v2973 = vmax.f32 %v2909, %v2941
        %v2974 = vmax.f32 %v2910, %v2942
        %v2975 = vmax.f32 %v2911, %v2943
        %v2976 = vmax.f32 %v2912, %v2944
        %v2977 = vmax.f32 %v2913, %v2945
        %v2978 = vmax.f32 %v2914, %v2946
        %v2979 = vmax.f32 %v2915, %v2947
        %v2980 = vmax.f32 %v2916, %v2948
        %v2981 = vmax.f32 %v2917, %v2949
        %v2982 = vmax.f32 %v2918, %v2950
        %v2983 = vmax.f32 %v2919, %v2951
        %v2984 = vmax.f32 %v2920, %v2952
        %v2985 = vmax.f32 %v2921, %v2953
        %v2986 = vmax.f32 %v2922, %v2954
        %v2987 = vmax.f32 %v2923, %v2955
        %v2988 = vmax.f32 %v2924, %v2956
        %v2989 = vmax.f32 %v2925, %v2957
        %v2990 = vmax.f32 %v2926, %v2958
        %v2991 = vmax.f32 %v2927, %v2959
        %v2992 = vmax.f32 %v2928, %v2960
        %v2993 = vmax.f32 %v2929, %v2961
        %v2994 = vmax.f32 %v2930, %v2962
        %v2995 = vadd.f32 %v2963, %v1321
        %v2996 = vadd.f32 %v2964, %v1322
        %v2997 = vadd.f32 %v2965, %v1323
        %v2998 = vadd.f32 %v2966, %v1324
        %v2999 = vadd.f32 %v2967, %v1325
        %v3000 = vadd.f32 %v2968, %v1326
        %v3001 = vadd.f32 %v2969, %v1327
        %v3002 = vadd.f32 %v2970, %v1328
        %v3003 = vadd.f32 %v2971, %v1329
        %v3004 = vadd.f32 %v2972, %v1330
        %v3005 = vadd.f32 %v2973, %v1331
        %v3006 = vadd.f32 %v2974, %v1332
        %v3007 = vadd.f32 %v2975, %v1333
        %v3008 = vadd.f32 %v2976, %v1334
        %v3009 = vadd.f32 %v2977, %v1335
        %v3010 = vadd.f32 %v2978, %v1336
        %v3011 = vadd.f32 %v2979, %v1337
        %v3012 = vadd.f32 %v2980, %v1338
        %v3013 = vadd.f32 %v2981, %v1339
        %v3014 = vadd.f32 %v2982, %v1340
        %v3015 = vadd.f32 %v2983, %v1341
        %v3016 = vadd.f32 %v2984, %v1342
        %v3017 = vadd.f32 %v2985, %v1343
        %v3018 = vadd.f32 %v2986, %v1344
        %v3019 = vadd.f32 %v2987, %v1345
        %v3020 = vadd.f32 %v2988, %v1346
        %v3021 = vadd.f32 %v2989, %v1347
        %v3022 = vadd.f32 %v2990, %v1348
        %v3023 = vadd.f32 %v2991, %v1349
        %v3024 = vadd.f32 %v2992, %v1350
        %v3025 = vadd.f32 %v2993, %v1351
        %v3026 = vadd.f32 %v2994, %v1352
        %v3027 = vmax.f32 %v2995, %v2996
        %3028 = vmax.xlane.f32.xlu0 %v3027
        %v3029 = vpop.xlane.xlu0 %3028
        %v3030 = vmax.f32 %v2997, %v2998
        %3031 = vmax.xlane.f32.xlu0 %v3030
        %v3032 = vpop.xlane.xlu0 %3031
        %v3033 = vmax.f32 %v2999, %v3000
        %3034 = vmax.xlane.f32.xlu0 %v3033
        %v3035 = vpop.xlane.xlu0 %3034
        %v3036 = vmax.f32 %v3001, %v3002
        %3037 = vmax.xlane.f32.xlu0 %v3036
        %v3038 = vpop.xlane.xlu0 %3037
        %v3039 = vmax.f32 %v3003, %v3004
        %3040 = vmax.xlane.f32.xlu0 %v3039
        %v3041 = vpop.xlane.xlu0 %3040
        %v3042 = vmax.f32 %v3005, %v3006
        %3043 = vmax.xlane.f32.xlu0 %v3042
        %v3044 = vpop.xlane.xlu0 %3043
        %v3045 = vmax.f32 %v3007, %v3008
        %3046 = vmax.xlane.f32.xlu0 %v3045
        %v3047 = vpop.xlane.xlu0 %3046
        %v3048 = vmax.f32 %v3009, %v3010
        %3049 = vmax.xlane.f32.xlu0 %v3048
        %v3050 = vpop.xlane.xlu0 %3049
        %v3051 = vmax.f32 %v3011, %v3012
        %3052 = vmax.xlane.f32.xlu0 %v3051
        %v3053 = vpop.xlane.xlu0 %3052
        %v3054 = vmax.f32 %v3013, %v3014
        %3055 = vmax.xlane.f32.xlu0 %v3054
        %v3056 = vpop.xlane.xlu0 %3055
        %v3057 = vmax.f32 %v3015, %v3016
        %3058 = vmax.xlane.f32.xlu0 %v3057
        %v3059 = vpop.xlane.xlu0 %3058
        %v3060 = vmax.f32 %v3017, %v3018
        %3061 = vmax.xlane.f32.xlu0 %v3060
        %v3062 = vpop.xlane.xlu0 %3061
        %v3063 = vmax.f32 %v3019, %v3020
        %3064 = vmax.xlane.f32.xlu0 %v3063
        %v3065 = vpop.xlane.xlu0 %3064
        %v3066 = vmax.f32 %v3021, %v3022
        %3067 = vmax.xlane.f32.xlu0 %v3066
        %v3068 = vpop.xlane.xlu0 %3067
        %v3069 = vmax.f32 %v3023, %v3024
        %3070 = vmax.xlane.f32.xlu0 %v3069
        %v3071 = vpop.xlane.xlu0 %3070
        %v3072 = vmax.f32 %v3025, %v3026
        %3073 = vmax.xlane.f32.xlu0 %v3072
        %v3074 = vpop.xlane.xlu0 %3073
        %v3075 = vmax.f32 %v3029, -1e+20
        %v3076 = vmax.f32 %v3032, -1e+20
        %v3077 = vmax.f32 %v3035, -1e+20
        %v3078 = vmax.f32 %v3038, -1e+20
        %v3079 = vmax.f32 %v3041, -1e+20
        %v3080 = vmax.f32 %v3044, -1e+20
        %v3081 = vmax.f32 %v3047, -1e+20
        %v3082 = vmax.f32 %v3050, -1e+20
        %v3083 = vmax.f32 %v3053, -1e+20
        %v3084 = vmax.f32 %v3056, -1e+20
        %v3085 = vmax.f32 %v3059, -1e+20
        %v3086 = vmax.f32 %v3062, -1e+20
        %v3087 = vmax.f32 %v3065, -1e+20
        %v3088 = vmax.f32 %v3068, -1e+20
        %v3089 = vmax.f32 %v3071, -1e+20
        %v3090 = vmax.f32 %v3074, -1e+20
        %v3091 = vsub.f32 %v2995, %v3075
        %v3092 = vsub.f32 %v2996, %v3075
        %v3093 = vsub.f32 %v2997, %v3076
        %v3094 = vsub.f32 %v2998, %v3076
        %v3095 = vsub.f32 %v2999, %v3077
        %v3096 = vsub.f32 %v3000, %v3077
        %v3097 = vsub.f32 %v3001, %v3078
        %v3098 = vsub.f32 %v3002, %v3078
        %v3099 = vsub.f32 %v3003, %v3079
        %v3100 = vsub.f32 %v3004, %v3079
        %v3101 = vsub.f32 %v3005, %v3080
        %v3102 = vsub.f32 %v3006, %v3080
        %v3103 = vsub.f32 %v3007, %v3081
        %v3104 = vsub.f32 %v3008, %v3081
        %v3105 = vsub.f32 %v3009, %v3082
        %v3106 = vsub.f32 %v3010, %v3082
        %v3107 = vsub.f32 %v3011, %v3083
        %v3108 = vsub.f32 %v3012, %v3083
        %v3109 = vsub.f32 %v3013, %v3084
        %v3110 = vsub.f32 %v3014, %v3084
        %v3111 = vsub.f32 %v3015, %v3085
        %v3112 = vsub.f32 %v3016, %v3085
        %v3113 = vsub.f32 %v3017, %v3086
        %v3114 = vsub.f32 %v3018, %v3086
        %v3115 = vsub.f32 %v3019, %v3087
        %v3116 = vsub.f32 %v3020, %v3087
        %v3117 = vsub.f32 %v3021, %v3088
        %v3118 = vsub.f32 %v3022, %v3088
        %v3119 = vsub.f32 %v3023, %v3089
        %v3120 = vsub.f32 %v3024, %v3089
        %v3121 = vsub.f32 %v3025, %v3090
        %v3122 = vsub.f32 %v3026, %v3090
        %v3123 = vmul.f32 %v3091, 1.442695
        %v3124 = vpow.pop %v3123
        %v3125 = vmul.f32 %v3092, 1.442695
        %v3126 = vpow.pop %v3125
        %v3127 = vmul.f32 %v3093, 1.442695
        %v3128 = vpow.pop %v3127
        %v3129 = vmul.f32 %v3094, 1.442695
        %v3130 = vpow.pop %v3129
        %v3131 = vmul.f32 %v3095, 1.442695
        %v3132 = vpow.pop %v3131
        %v3133 = vmul.f32 %v3096, 1.442695
        %v3134 = vpow.pop %v3133
        %v3135 = vmul.f32 %v3097, 1.442695
        %v3136 = vpow.pop %v3135
        %v3137 = vmul.f32 %v3098, 1.442695
        %v3138 = vpow.pop %v3137
        %v3139 = vmul.f32 %v3099, 1.442695
        %v3140 = vpow.pop %v3139
        %v3141 = vmul.f32 %v3100, 1.442695
        %v3142 = vpow.pop %v3141
        %v3143 = vmul.f32 %v3101, 1.442695
        %v3144 = vpow.pop %v3143
        %v3145 = vmul.f32 %v3102, 1.442695
        %v3146 = vpow.pop %v3145
        %v3147 = vmul.f32 %v3103, 1.442695
        %v3148 = vpow.pop %v3147
        %v3149 = vmul.f32 %v3104, 1.442695
        %v3150 = vpow.pop %v3149
        %v3151 = vmul.f32 %v3105, 1.442695
        %v3152 = vpow.pop %v3151
        %v3153 = vmul.f32 %v3106, 1.442695
        %v3154 = vpow.pop %v3153
        %v3155 = vmul.f32 %v3107, 1.442695
        %v3156 = vpow.pop %v3155
        %v3157 = vmul.f32 %v3108, 1.442695
        %v3158 = vpow.pop %v3157
        %v3159 = vmul.f32 %v3109, 1.442695
        %v3160 = vpow.pop %v3159
        %v3161 = vmul.f32 %v3110, 1.442695
        %v3162 = vpow.pop %v3161
        %v3163 = vmul.f32 %v3111, 1.442695
        %v3164 = vpow.pop %v3163
        %v3165 = vmul.f32 %v3112, 1.442695
        %v3166 = vpow.pop %v3165
        %v3167 = vmul.f32 %v3113, 1.442695
        %v3168 = vpow.pop %v3167
        %v3169 = vmul.f32 %v3114, 1.442695
        %v3170 = vpow.pop %v3169
        %v3171 = vmul.f32 %v3115, 1.442695
        %v3172 = vpow.pop %v3171
        %v3173 = vmul.f32 %v3116, 1.442695
        %v3174 = vpow.pop %v3173
        %v3175 = vmul.f32 %v3117, 1.442695
        %v3176 = vpow.pop %v3175
        %v3177 = vmul.f32 %v3118, 1.442695
        %v3178 = vpow.pop %v3177
        %v3179 = vmul.f32 %v3119, 1.442695
        %v3180 = vpow.pop %v3179
        %v3181 = vmul.f32 %v3120, 1.442695
        %v3182 = vpow.pop %v3181
        %v3183 = vmul.f32 %v3121, 1.442695
        %v3184 = vpow.pop %v3183
        %v3185 = vmul.f32 %v3122, 1.442695
        %v3186 = vpow.pop %v3185
        %v3187 = vadd.f32 %v3124, %v3126
        %3188 = vadd.xlane.f32.xlu0 %v3187
        %v3189 = vpop.xlane.xlu0 %3188
        %v3190 = vadd.f32 %v3128, %v3130
        %3191 = vadd.xlane.f32.xlu0 %v3190
        %v3192 = vpop.xlane.xlu0 %3191
        %v3193 = vadd.f32 %v3132, %v3134
        %3194 = vadd.xlane.f32.xlu0 %v3193
        %v3195 = vpop.xlane.xlu0 %3194
        %v3196 = vadd.f32 %v3136, %v3138
        %3197 = vadd.xlane.f32.xlu0 %v3196
        %v3198 = vpop.xlane.xlu0 %3197
        %v3199 = vadd.f32 %v3140, %v3142
        %3200 = vadd.xlane.f32.xlu0 %v3199
        %v3201 = vpop.xlane.xlu0 %3200
        %v3202 = vadd.f32 %v3144, %v3146
        %3203 = vadd.xlane.f32.xlu0 %v3202
        %v3204 = vpop.xlane.xlu0 %3203
        %v3205 = vadd.f32 %v3148, %v3150
        %3206 = vadd.xlane.f32.xlu0 %v3205
        %v3207 = vpop.xlane.xlu0 %3206
        %v3208 = vadd.f32 %v3152, %v3154
        %3209 = vadd.xlane.f32.xlu0 %v3208
        %v3210 = vpop.xlane.xlu0 %3209
        %v3211 = vadd.f32 %v3156, %v3158
        %3212 = vadd.xlane.f32.xlu0 %v3211
        %v3213 = vpop.xlane.xlu0 %3212
        %v3214 = vadd.f32 %v3160, %v3162
        %3215 = vadd.xlane.f32.xlu0 %v3214
        %v3216 = vpop.xlane.xlu0 %3215
        %v3217 = vadd.f32 %v3164, %v3166
        %3218 = vadd.xlane.f32.xlu0 %v3217
        %v3219 = vpop.xlane.xlu0 %3218
        %v3220 = vadd.f32 %v3168, %v3170
        %3221 = vadd.xlane.f32.xlu0 %v3220
        %v3222 = vpop.xlane.xlu0 %3221
        %v3223 = vadd.f32 %v3172, %v3174
        %3224 = vadd.xlane.f32.xlu0 %v3223
        %v3225 = vpop.xlane.xlu0 %3224
        %v3226 = vadd.f32 %v3176, %v3178
        %3227 = vadd.xlane.f32.xlu0 %v3226
        %v3228 = vpop.xlane.xlu0 %3227
        %v3229 = vadd.f32 %v3180, %v3182
        %3230 = vadd.xlane.f32.xlu0 %v3229
        %v3231 = vpop.xlane.xlu0 %3230
        %v3232 = vadd.f32 %v3184, %v3186
        %3233 = vadd.xlane.f32.xlu0 %v3232
        %v3234 = vpop.xlane.xlu0 %3233
        %vm3235 = vcmp.gt.f32.partialorder %v3189, 0.0
        %vm3236 = vcmp.gt.f32.partialorder %v3192, 0.0
        %vm3237 = vcmp.gt.f32.partialorder %v3195, 0.0
        %vm3238 = vcmp.gt.f32.partialorder %v3198, 0.0
        %vm3239 = vcmp.gt.f32.partialorder %v3201, 0.0
        %vm3240 = vcmp.gt.f32.partialorder %v3204, 0.0
        %vm3241 = vcmp.gt.f32.partialorder %v3207, 0.0
        %vm3242 = vcmp.gt.f32.partialorder %v3210, 0.0
        %vm3243 = vcmp.gt.f32.partialorder %v3213, 0.0
        %vm3244 = vcmp.gt.f32.partialorder %v3216, 0.0
        %vm3245 = vcmp.gt.f32.partialorder %v3219, 0.0
        %vm3246 = vcmp.gt.f32.partialorder %v3222, 0.0
        %vm3247 = vcmp.gt.f32.partialorder %v3225, 0.0
        %vm3248 = vcmp.gt.f32.partialorder %v3228, 0.0
        %vm3249 = vcmp.gt.f32.partialorder %v3231, 0.0
        %vm3250 = vcmp.gt.f32.partialorder %v3234, 0.0
        %v3251 = vsel %vm3235, %v3189, 1.0
        %v3252 = vsel %vm3236, %v3192, 1.0
        %v3253 = vsel %vm3237, %v3195, 1.0
        %v3254 = vsel %vm3238, %v3198, 1.0
        %v3255 = vsel %vm3239, %v3201, 1.0
        %v3256 = vsel %vm3240, %v3204, 1.0
        %v3257 = vsel %vm3241, %v3207, 1.0
        %v3258 = vsel %vm3242, %v3210, 1.0
        %v3259 = vsel %vm3243, %v3213, 1.0
        %v3260 = vsel %vm3244, %v3216, 1.0
        %v3261 = vsel %vm3245, %v3219, 1.0
        %v3262 = vsel %vm3246, %v3222, 1.0
        %v3263 = vsel %vm3247, %v3225, 1.0
        %v3264 = vsel %vm3248, %v3228, 1.0
        %v3265 = vsel %vm3249, %v3231, 1.0
        %v3266 = vsel %vm3250, %v3234, 1.0
        %v3267 = vrcp.pop %v3251
        %v3268 = vmul.f32 1.0, %v3267
        %v3269 = vrcp.pop %v3252
        %v3270 = vmul.f32 1.0, %v3269
        %v3271 = vrcp.pop %v3253
        %v3272 = vmul.f32 1.0, %v3271
        %v3273 = vrcp.pop %v3254
        %v3274 = vmul.f32 1.0, %v3273
        %v3275 = vrcp.pop %v3255
        %v3276 = vmul.f32 1.0, %v3275
        %v3277 = vrcp.pop %v3256
        %v3278 = vmul.f32 1.0, %v3277
        %v3279 = vrcp.pop %v3257
        %v3280 = vmul.f32 1.0, %v3279
        %v3281 = vrcp.pop %v3258
        %v3282 = vmul.f32 1.0, %v3281
        %v3283 = vrcp.pop %v3259
        %v3284 = vmul.f32 1.0, %v3283
        %v3285 = vrcp.pop %v3260
        %v3286 = vmul.f32 1.0, %v3285
        %v3287 = vrcp.pop %v3261
        %v3288 = vmul.f32 1.0, %v3287
        %v3289 = vrcp.pop %v3262
        %v3290 = vmul.f32 1.0, %v3289
        %v3291 = vrcp.pop %v3263
        %v3292 = vmul.f32 1.0, %v3291
        %v3293 = vrcp.pop %v3264
        %v3294 = vmul.f32 1.0, %v3293
        %v3295 = vrcp.pop %v3265
        %v3296 = vmul.f32 1.0, %v3295
        %v3297 = vrcp.pop %v3266
        %v3298 = vmul.f32 1.0, %v3297
        %3299 = vrot.lane.b32.xlu0 %v1863, 112
        %v3300 = vpop.permute.xlu0 %3299
        %3301 = vrot.lane.b32.xlu0 %v1864, 112
        %v3302 = vpop.permute.xlu0 %3301
        %3303 = vrot.lane.b32.xlu0 %v1865, 112
        %v3304 = vpop.permute.xlu0 %3303
        %3305 = vrot.lane.b32.xlu0 %v1866, 112
        %v3306 = vpop.permute.xlu0 %3305
        %3307 = vrot.lane.b32.xlu0 %v1867, 112
        %v3308 = vpop.permute.xlu0 %3307
        %3309 = vrot.lane.b32.xlu0 %v1868, 112
        %v3310 = vpop.permute.xlu0 %3309
        %3311 = vrot.lane.b32.xlu0 %v1869, 112
        %v3312 = vpop.permute.xlu0 %3311
        %3313 = vrot.lane.b32.xlu0 %v1870, 112
        %v3314 = vpop.permute.xlu0 %3313
        %3315 = vrot.lane.b32.xlu0 %v1871, 112
        %v3316 = vpop.permute.xlu0 %3315
        %3317 = vrot.lane.b32.xlu0 %v1872, 112
        %v3318 = vpop.permute.xlu0 %3317
        %3319 = vrot.lane.b32.xlu0 %v1873, 112
        %v3320 = vpop.permute.xlu0 %3319
        %3321 = vrot.lane.b32.xlu0 %v1874, 112
        %v3322 = vpop.permute.xlu0 %3321
        %3323 = vrot.lane.b32.xlu0 %v1875, 112
        %v3324 = vpop.permute.xlu0 %3323
        %3325 = vrot.lane.b32.xlu0 %v1876, 112
        %v3326 = vpop.permute.xlu0 %3325
        %3327 = vrot.lane.b32.xlu0 %v1877, 112
        %v3328 = vpop.permute.xlu0 %3327
        %3329 = vrot.lane.b32.xlu0 %v1878, 112
        %v3330 = vpop.permute.xlu0 %3329
        %3331 = vrot.lane.b32.xlu0 %v1879, 112
        %v3332 = vpop.permute.xlu0 %3331
        %3333 = vrot.lane.b32.xlu0 %v1880, 112
        %v3334 = vpop.permute.xlu0 %3333
        %3335 = vrot.lane.b32.xlu0 %v1881, 112
        %v3336 = vpop.permute.xlu0 %3335
        %3337 = vrot.lane.b32.xlu0 %v1882, 112
        %v3338 = vpop.permute.xlu0 %3337
        %3339 = vrot.lane.b32.xlu0 %v1883, 112
        %v3340 = vpop.permute.xlu0 %3339
        %3341 = vrot.lane.b32.xlu0 %v1884, 112
        %v3342 = vpop.permute.xlu0 %3341
        %3343 = vrot.lane.b32.xlu0 %v1885, 112
        %v3344 = vpop.permute.xlu0 %3343
        %3345 = vrot.lane.b32.xlu0 %v1886, 112
        %v3346 = vpop.permute.xlu0 %3345
        %3347 = vrot.lane.b32.xlu0 %v1887, 112
        %v3348 = vpop.permute.xlu0 %3347
        %3349 = vrot.lane.b32.xlu0 %v1888, 112
        %v3350 = vpop.permute.xlu0 %3349
        %3351 = vrot.lane.b32.xlu0 %v1889, 112
        %v3352 = vpop.permute.xlu0 %3351
        %3353 = vrot.lane.b32.xlu0 %v1890, 112
        %v3354 = vpop.permute.xlu0 %3353
        %3355 = vrot.lane.b32.xlu0 %v1891, 112
        %v3356 = vpop.permute.xlu0 %3355
        %3357 = vrot.lane.b32.xlu0 %v1892, 112
        %v3358 = vpop.permute.xlu0 %3357
        %3359 = vrot.lane.b32.xlu0 %v1893, 112
        %v3360 = vpop.permute.xlu0 %3359
        %3361 = vrot.lane.b32.xlu0 %v1894, 112
        %v3362 = vpop.permute.xlu0 %3361
        %3395 = vmatprep.subr.mxu0 0.0
        %3396 = vmatpush1.msra.mxu0 %v3300
        %3397 = vmatprep.subr.mxu0 0.0
        %3398 = vmatpush1.msra.mxu0 %v3302
        %3399 = vmatprep.subr.mxu0 0.0
        %3400 = vmatpush1.msra.mxu0 %v3304
        %3401 = vmatprep.subr.mxu0 0.0
        %3402 = vmatpush1.msra.mxu0 %v3306
        %3403 = vmatprep.subr.mxu0 0.0
        %3404 = vmatpush1.msra.mxu0 %v3308
        %3405 = vmatprep.subr.mxu0 0.0
        %3406 = vmatpush1.msra.mxu0 %v3310
        %3407 = vmatprep.subr.mxu0 0.0
        %3408 = vmatpush1.msra.mxu0 %v3312
        %3409 = vmatprep.subr.mxu0 0.0
        %3410 = vmatpush1.msra.mxu0 %v3314
        %3411 = vmatprep.subr.mxu0 0.0
        %3412 = vmatpush1.msra.mxu0 %v3316
        %3413 = vmatprep.subr.mxu0 0.0
        %3414 = vmatpush1.msra.mxu0 %v3318
        %3415 = vmatprep.subr.mxu0 0.0
        %3416 = vmatpush1.msra.mxu0 %v3320
        %3417 = vmatprep.subr.mxu0 0.0
        %3418 = vmatpush1.msra.mxu0 %v3322
        %3419 = vmatprep.subr.mxu0 0.0
        %3420 = vmatpush1.msra.mxu0 %v3324
        %3421 = vmatprep.subr.mxu0 0.0
        %3422 = vmatpush1.msra.mxu0 %v3326
        %3423 = vmatprep.subr.mxu0 0.0
        %3424 = vmatpush1.msra.mxu0 %v3328
        %3425 = vmatprep.subr.mxu0 0.0
        %3426 = vmatpush1.msra.mxu0 %v3330
        %3427 = vmatprep.subr.mxu0 0.0
        %3428 = vmatpush1.msra.mxu0 %v3332
        %3429 = vmatprep.subr.mxu0 0.0
        %3430 = vmatpush1.msra.mxu0 %v3334
        %3431 = vmatprep.subr.mxu0 0.0
        %3432 = vmatpush1.msra.mxu0 %v3336
        %3433 = vmatprep.subr.mxu0 0.0
        %3434 = vmatpush1.msra.mxu0 %v3338
        %3435 = vmatprep.subr.mxu0 0.0
        %3436 = vmatpush1.msra.mxu0 %v3340
        %3437 = vmatprep.subr.mxu0 0.0
        %3438 = vmatpush1.msra.mxu0 %v3342
        %3439 = vmatprep.subr.mxu0 0.0
        %3440 = vmatpush1.msra.mxu0 %v3344
        %3441 = vmatprep.subr.mxu0 0.0
        %3442 = vmatpush1.msra.mxu0 %v3346
        %3443 = vmatprep.subr.mxu0 0.0
        %3444 = vmatpush1.msra.mxu0 %v3348
        %3445 = vmatprep.subr.mxu0 0.0
        %3446 = vmatpush1.msra.mxu0 %v3350
        %3447 = vmatprep.subr.mxu0 0.0
        %3448 = vmatpush1.msra.mxu0 %v3352
        %3449 = vmatprep.subr.mxu0 0.0
        %3450 = vmatpush1.msra.mxu0 %v3354
        %3451 = vmatprep.subr.mxu0 0.0
        %3452 = vmatpush1.msra.mxu0 %v3356
        %3453 = vmatprep.subr.mxu0 0.0
        %3454 = vmatpush1.msra.mxu0 %v3358
        %3455 = vmatprep.subr.mxu0 0.0
        %3456 = vmatpush1.msra.mxu0 %v3360
        %3457 = vmatprep.subr.mxu0 0.0
        %3458 = vmatpush1.msra.mxu0 %v3362
        %3459 = vmatprep.mubr.f32.mxu0 %v3126
        %3460 = vmatmul.mubr.f32.gmra.mrb[0].mxu0 %v3124
        %v3461 = vpop.f32.mrb[0].mxu0
        %v3462 = vadd.f32 0.0, %v3461
        %v3463 = vpop.f32.mrb[0].mxu0
        %3464 = vmatprep.mubr.f32.mxu0 %v3130
        %3465 = vmatmul.mubr.f32.gmra.mrb[0].mxu0 %v3128
        %v3466 = vpop.f32.mrb[0].mxu0
        %v3467 = vadd.f32 0.0, %v3466
        %v3468 = vpop.f32.mrb[0].mxu0
        %3469 = vmatprep.mubr.f32.mxu0 %v3134
        %3470 = vmatmul.mubr.f32.gmra.mrb[0].mxu0 %v3132
        %v3471 = vpop.f32.mrb[0].mxu0
        %v3472 = vadd.f32 0.0, %v3471
        %v3473 = vpop.f32.mrb[0].mxu0
        %3474 = vmatprep.mubr.f32.mxu0 %v3138
        %3475 = vmatmul.mubr.f32.gmra.mrb[0].mxu0 %v3136
        %v3476 = vpop.f32.mrb[0].mxu0
        %v3477 = vadd.f32 0.0, %v3476
        %v3478 = vpop.f32.mrb[0].mxu0
        %3479 = vmatprep.mubr.f32.mxu0 %v3142
        %3480 = vmatmul.mubr.f32.gmra.mrb[0].mxu0 %v3140
        %v3481 = vpop.f32.mrb[0].mxu0
        %v3482 = vadd.f32 0.0, %v3481
        %v3483 = vpop.f32.mrb[0].mxu0
        %3484 = vmatprep.mubr.f32.mxu0 %v3146
        %3485 = vmatmul.mubr.f32.gmra.mrb[0].mxu0 %v3144
        %v3486 = vpop.f32.mrb[0].mxu0
        %v3487 = vadd.f32 0.0, %v3486
        %v3488 = vpop.f32.mrb[0].mxu0
        %3489 = vmatprep.mubr.f32.mxu0 %v3150
        %3490 = vmatmul.mubr.f32.gmra.mrb[0].mxu0 %v3148
        %v3491 = vpop.f32.mrb[0].mxu0
        %v3492 = vadd.f32 0.0, %v3491
        %v3493 = vpop.f32.mrb[0].mxu0
        %3494 = vmatprep.mubr.f32.mxu0 %v3154
        %3495 = vmatmul.mubr.f32.gmra.mrb[0].mxu0 %v3152
        %v3496 = vpop.f32.mrb[0].mxu0
        %v3497 = vadd.f32 0.0, %v3496
        %v3498 = vpop.f32.mrb[0].mxu0
        %3499 = vmatprep.mubr.f32.mxu0 %v3158
        %3500 = vmatmul.mubr.f32.gmra.mrb[0].mxu0 %v3156
        %v3501 = vpop.f32.mrb[0].mxu0
        %v3502 = vadd.f32 0.0, %v3501
        %v3503 = vpop.f32.mrb[0].mxu0
        %3504 = vmatprep.mubr.f32.mxu0 %v3162
        %3505 = vmatmul.mubr.f32.gmra.mrb[0].mxu0 %v3160
        %v3506 = vpop.f32.mrb[0].mxu0
        %v3507 = vadd.f32 0.0, %v3506
        %v3508 = vpop.f32.mrb[0].mxu0
        %3509 = vmatprep.mubr.f32.mxu0 %v3166
        %3510 = vmatmul.mubr.f32.gmra.mrb[0].mxu0 %v3164
        %v3511 = vpop.f32.mrb[0].mxu0
        %v3512 = vadd.f32 0.0, %v3511
        %v3513 = vpop.f32.mrb[0].mxu0
        %3514 = vmatprep.mubr.f32.mxu0 %v3170
        %3515 = vmatmul.mubr.f32.gmra.mrb[0].mxu0 %v3168
        %v3516 = vpop.f32.mrb[0].mxu0
        %v3517 = vadd.f32 0.0, %v3516
        %v3518 = vpop.f32.mrb[0].mxu0
        %3519 = vmatprep.mubr.f32.mxu0 %v3174
        %3520 = vmatmul.mubr.f32.gmra.mrb[0].mxu0 %v3172
        %v3521 = vpop.f32.mrb[0].mxu0
        %v3522 = vadd.f32 0.0, %v3521
        %v3523 = vpop.f32.mrb[0].mxu0
        %3524 = vmatprep.mubr.f32.mxu0 %v3178
        %3525 = vmatmul.mubr.f32.gmra.mrb[0].mxu0 %v3176
        %v3526 = vpop.f32.mrb[0].mxu0
        %v3527 = vadd.f32 0.0, %v3526
        %v3528 = vpop.f32.mrb[0].mxu0
        %3529 = vmatprep.mubr.f32.mxu0 %v3182
        %3530 = vmatmul.mubr.f32.gmra.mrb[0].mxu0 %v3180
        %v3531 = vpop.f32.mrb[0].mxu0
        %v3532 = vadd.f32 0.0, %v3531
        %v3533 = vpop.f32.mrb[0].mxu0
        %3534 = vmatprep.mubr.f32.mxu0 %v3186
        %3535 = vmatmul.mubr.f32.gmra.mrb[0].mxu0 %v3184
        %v3536 = vpop.f32.mrb[0].mxu0
        %v3537 = vadd.f32 0.0, %v3536
        %v3538 = vpop.f32.mrb[0].mxu0
        %3539 = vdwg.mxu0
        %v3540 = vmul.f32 %v3462, %v3268
        %v3541 = vmul.f32 %v3467, %v3270
        %v3542 = vmul.f32 %v3472, %v3272
        %v3543 = vmul.f32 %v3477, %v3274
        %v3544 = vmul.f32 %v3482, %v3276
        %v3545 = vmul.f32 %v3487, %v3278
        %v3546 = vmul.f32 %v3492, %v3280
        %v3547 = vmul.f32 %v3497, %v3282
        %v3548 = vmul.f32 %v3502, %v3284
        %v3549 = vmul.f32 %v3507, %v3286
        %v3550 = vmul.f32 %v3512, %v3288
        %v3551 = vmul.f32 %v3517, %v3290
        %v3552 = vmul.f32 %v3522, %v3292
        %v3553 = vmul.f32 %v3527, %v3294
        %v3554 = vmul.f32 %v3532, %v3296
        %v3555 = vmul.f32 %v3537, %v3298
        %s3556 = scalar_lea.vmem [#allocation4], 3
        %v3557 = vld [vmem:[%s3556] ss:$4 sm:$0x3]
        %3558 = vset.pattern.permute.xlu0 3
        %3559 = vperm.xlu0 %3558, %v1355
        %v3560 = vpop.permute.xlu0 %3559
        %3562 = vset.pattern.permute.xlu0 3
        %3563 = vperm.xlu0 %3562, %v1356
        %v3564 = vpop.permute.xlu0 %3563
        %3566 = vset.pattern.permute.xlu0 3
        %3567 = vperm.xlu0 %3566, %v1357
        %v3568 = vpop.permute.xlu0 %3567
        %3570 = vset.pattern.permute.xlu0 3
        %3571 = vperm.xlu0 %3570, %v1358
        %v3572 = vpop.permute.xlu0 %3571
        %3574 = vset.pattern.permute.xlu0 3
        %3575 = vperm.xlu0 %3574, %v1359
        %v3576 = vpop.permute.xlu0 %3575
        %3578 = vset.pattern.permute.xlu0 3
        %3579 = vperm.xlu0 %3578, %v1360
        %v3580 = vpop.permute.xlu0 %3579
        %3582 = vset.pattern.permute.xlu0 3
        %3583 = vperm.xlu0 %3582, %v1361
        %v3584 = vpop.permute.xlu0 %3583
        %3586 = vset.pattern.permute.xlu0 3
        %3587 = vperm.xlu0 %3586, %v1362
        %v3588 = vpop.permute.xlu0 %3587
        %3590 = vset.pattern.permute.xlu0 3
        %3591 = vperm.xlu0 %3590, %v1363
        %v3592 = vpop.permute.xlu0 %3591
        %3594 = vset.pattern.permute.xlu0 3
        %3595 = vperm.xlu0 %3594, %v1364
        %v3596 = vpop.permute.xlu0 %3595
        %3598 = vset.pattern.permute.xlu0 3
        %3599 = vperm.xlu0 %3598, %v1365
        %v3600 = vpop.permute.xlu0 %3599
        %3602 = vset.pattern.permute.xlu0 3
        %3603 = vperm.xlu0 %3602, %v1366
        %v3604 = vpop.permute.xlu0 %3603
        %3606 = vset.pattern.permute.xlu0 3
        %3607 = vperm.xlu0 %3606, %v1367
        %v3608 = vpop.permute.xlu0 %3607
        %3610 = vset.pattern.permute.xlu0 3
        %3611 = vperm.xlu0 %3610, %v1368
        %v3612 = vpop.permute.xlu0 %3611
        %3614 = vset.pattern.permute.xlu0 3
        %3615 = vperm.xlu0 %3614, %v1369
        %v3616 = vpop.permute.xlu0 %3615
        %3618 = vset.pattern.permute.xlu0 3
        %3619 = vperm.xlu0 %3618, %v1370
        %v3620 = vpop.permute.xlu0 %3619
        %v3623 = vlaneseq
        %v3624 = vshrl.u32 %v3623, 7
        %v3625 = vsub.s32 0, %v3624
        %v3626 = vrot.slane %v3557, %v3625
        %v3627 = vlaneseq
        %v3628 = vshrl.u32 %v3627, 7
        %v3629 = vsub.s32 1, %v3628
        %v3630 = vrot.slane %v3557, %v3629
        %v3633 = vadd.f32 %v3560, %v3626
        %v3634 = vadd.f32 %v3560, %v3630
        %v3635 = vadd.f32 %v3564, %v3626
        %v3636 = vadd.f32 %v3564, %v3630
        %v3637 = vadd.f32 %v3568, %v3626
        %v3638 = vadd.f32 %v3568, %v3630
        %v3639 = vadd.f32 %v3572, %v3626
        %v3640 = vadd.f32 %v3572, %v3630
        %v3641 = vadd.f32 %v3576, %v3626
        %v3642 = vadd.f32 %v3576, %v3630
        %v3643 = vadd.f32 %v3580, %v3626
        %v3644 = vadd.f32 %v3580, %v3630
        %v3645 = vadd.f32 %v3584, %v3626
        %v3646 = vadd.f32 %v3584, %v3630
        %v3647 = vadd.f32 %v3588, %v3626
        %v3648 = vadd.f32 %v3588, %v3630
        %v3649 = vadd.f32 %v3592, %v3626
        %v3650 = vadd.f32 %v3592, %v3630
        %v3651 = vadd.f32 %v3596, %v3626
        %v3652 = vadd.f32 %v3596, %v3630
        %v3653 = vadd.f32 %v3600, %v3626
        %v3654 = vadd.f32 %v3600, %v3630
        %v3655 = vadd.f32 %v3604, %v3626
        %v3656 = vadd.f32 %v3604, %v3630
        %v3657 = vadd.f32 %v3608, %v3626
        %v3658 = vadd.f32 %v3608, %v3630
        %v3659 = vadd.f32 %v3612, %v3626
        %v3660 = vadd.f32 %v3612, %v3630
        %v3661 = vadd.f32 %v3616, %v3626
        %v3662 = vadd.f32 %v3616, %v3630
        %v3663 = vadd.f32 %v3620, %v3626
        %v3664 = vadd.f32 %v3620, %v3630
        %v3665 = vmul.f32 %v3633, 0.2
        %v3666 = vmul.f32 %v3634, 0.2
        %v3667 = vmul.f32 %v3635, 0.2
        %v3668 = vmul.f32 %v3636, 0.2
        %v3669 = vmul.f32 %v3637, 0.2
        %v3670 = vmul.f32 %v3638, 0.2
        %v3671 = vmul.f32 %v3639, 0.2
        %v3672 = vmul.f32 %v3640, 0.2
        %v3673 = vmul.f32 %v3641, 0.2
        %v3674 = vmul.f32 %v3642, 0.2
        %v3675 = vmul.f32 %v3643, 0.2
        %v3676 = vmul.f32 %v3644, 0.2
        %v3677 = vmul.f32 %v3645, 0.2
        %v3678 = vmul.f32 %v3646, 0.2
        %v3679 = vmul.f32 %v3647, 0.2
        %v3680 = vmul.f32 %v3648, 0.2
        %v3681 = vmul.f32 %v3649, 0.2
        %v3682 = vmul.f32 %v3650, 0.2
        %v3683 = vmul.f32 %v3651, 0.2
        %v3684 = vmul.f32 %v3652, 0.2
        %v3685 = vmul.f32 %v3653, 0.2
        %v3686 = vmul.f32 %v3654, 0.2
        %v3687 = vmul.f32 %v3655, 0.2
        %v3688 = vmul.f32 %v3656, 0.2
        %v3689 = vmul.f32 %v3657, 0.2
        %v3690 = vmul.f32 %v3658, 0.2
        %v3691 = vmul.f32 %v3659, 0.2
        %v3692 = vmul.f32 %v3660, 0.2
        %v3693 = vmul.f32 %v3661, 0.2
        %v3694 = vmul.f32 %v3662, 0.2
        %v3695 = vmul.f32 %v3663, 0.2
        %v3696 = vmul.f32 %v3664, 0.2
        %v3697 = vmax.f32 %v3633, %v3665
        %v3698 = vmax.f32 %v3634, %v3666
        %v3699 = vmax.f32 %v3635, %v3667
        %v3700 = vmax.f32 %v3636, %v3668
        %v3701 = vmax.f32 %v3637, %v3669
        %v3702 = vmax.f32 %v3638, %v3670
        %v3703 = vmax.f32 %v3639, %v3671
        %v3704 = vmax.f32 %v3640, %v3672
        %v3705 = vmax.f32 %v3641, %v3673
        %v3706 = vmax.f32 %v3642, %v3674
        %v3707 = vmax.f32 %v3643, %v3675
        %v3708 = vmax.f32 %v3644, %v3676
        %v3709 = vmax.f32 %v3645, %v3677
        %v3710 = vmax.f32 %v3646, %v3678
        %v3711 = vmax.f32 %v3647, %v3679
        %v3712 = vmax.f32 %v3648, %v3680
        %v3713 = vmax.f32 %v3649, %v3681
        %v3714 = vmax.f32 %v3650, %v3682
        %v3715 = vmax.f32 %v3651, %v3683
        %v3716 = vmax.f32 %v3652, %v3684
        %v3717 = vmax.f32 %v3653, %v3685
        %v3718 = vmax.f32 %v3654, %v3686
        %v3719 = vmax.f32 %v3655, %v3687
        %v3720 = vmax.f32 %v3656, %v3688
        %v3721 = vmax.f32 %v3657, %v3689
        %v3722 = vmax.f32 %v3658, %v3690
        %v3723 = vmax.f32 %v3659, %v3691
        %v3724 = vmax.f32 %v3660, %v3692
        %v3725 = vmax.f32 %v3661, %v3693
        %v3726 = vmax.f32 %v3662, %v3694
        %v3727 = vmax.f32 %v3663, %v3695
        %v3728 = vmax.f32 %v3664, %v3696
        %v3729 = vadd.f32 %v3697, %v1321
        %v3730 = vadd.f32 %v3698, %v1322
        %v3731 = vadd.f32 %v3699, %v1323
        %v3732 = vadd.f32 %v3700, %v1324
        %v3733 = vadd.f32 %v3701, %v1325
        %v3734 = vadd.f32 %v3702, %v1326
        %v3735 = vadd.f32 %v3703, %v1327
        %v3736 = vadd.f32 %v3704, %v1328
        %v3737 = vadd.f32 %v3705, %v1329
        %v3738 = vadd.f32 %v3706, %v1330
        %v3739 = vadd.f32 %v3707, %v1331
        %v3740 = vadd.f32 %v3708, %v1332
        %v3741 = vadd.f32 %v3709, %v1333
        %v3742 = vadd.f32 %v3710, %v1334
        %v3743 = vadd.f32 %v3711, %v1335
        %v3744 = vadd.f32 %v3712, %v1336
        %v3745 = vadd.f32 %v3713, %v1337
        %v3746 = vadd.f32 %v3714, %v1338
        %v3747 = vadd.f32 %v3715, %v1339
        %v3748 = vadd.f32 %v3716, %v1340
        %v3749 = vadd.f32 %v3717, %v1341
        %v3750 = vadd.f32 %v3718, %v1342
        %v3751 = vadd.f32 %v3719, %v1343
        %v3752 = vadd.f32 %v3720, %v1344
        %v3753 = vadd.f32 %v3721, %v1345
        %v3754 = vadd.f32 %v3722, %v1346
        %v3755 = vadd.f32 %v3723, %v1347
        %v3756 = vadd.f32 %v3724, %v1348
        %v3757 = vadd.f32 %v3725, %v1349
        %v3758 = vadd.f32 %v3726, %v1350
        %v3759 = vadd.f32 %v3727, %v1351
        %v3760 = vadd.f32 %v3728, %v1352
        %v3761 = vmax.f32 %v3729, %v3730
        %3762 = vmax.xlane.f32.xlu0 %v3761
        %v3763 = vpop.xlane.xlu0 %3762
        %v3764 = vmax.f32 %v3731, %v3732
        %3765 = vmax.xlane.f32.xlu0 %v3764
        %v3766 = vpop.xlane.xlu0 %3765
        %v3767 = vmax.f32 %v3733, %v3734
        %3768 = vmax.xlane.f32.xlu0 %v3767
        %v3769 = vpop.xlane.xlu0 %3768
        %v3770 = vmax.f32 %v3735, %v3736
        %3771 = vmax.xlane.f32.xlu0 %v3770
        %v3772 = vpop.xlane.xlu0 %3771
        %v3773 = vmax.f32 %v3737, %v3738
        %3774 = vmax.xlane.f32.xlu0 %v3773
        %v3775 = vpop.xlane.xlu0 %3774
        %v3776 = vmax.f32 %v3739, %v3740
        %3777 = vmax.xlane.f32.xlu0 %v3776
        %v3778 = vpop.xlane.xlu0 %3777
        %v3779 = vmax.f32 %v3741, %v3742
        %3780 = vmax.xlane.f32.xlu0 %v3779
        %v3781 = vpop.xlane.xlu0 %3780
        %v3782 = vmax.f32 %v3743, %v3744
        %3783 = vmax.xlane.f32.xlu0 %v3782
        %v3784 = vpop.xlane.xlu0 %3783
        %v3785 = vmax.f32 %v3745, %v3746
        %3786 = vmax.xlane.f32.xlu0 %v3785
        %v3787 = vpop.xlane.xlu0 %3786
        %v3788 = vmax.f32 %v3747, %v3748
        %3789 = vmax.xlane.f32.xlu0 %v3788
        %v3790 = vpop.xlane.xlu0 %3789
        %v3791 = vmax.f32 %v3749, %v3750
        %3792 = vmax.xlane.f32.xlu0 %v3791
        %v3793 = vpop.xlane.xlu0 %3792
        %v3794 = vmax.f32 %v3751, %v3752
        %3795 = vmax.xlane.f32.xlu0 %v3794
        %v3796 = vpop.xlane.xlu0 %3795
        %v3797 = vmax.f32 %v3753, %v3754
        %3798 = vmax.xlane.f32.xlu0 %v3797
        %v3799 = vpop.xlane.xlu0 %3798
        %v3800 = vmax.f32 %v3755, %v3756
        %3801 = vmax.xlane.f32.xlu0 %v3800
        %v3802 = vpop.xlane.xlu0 %3801
        %v3803 = vmax.f32 %v3757, %v3758
        %3804 = vmax.xlane.f32.xlu0 %v3803
        %v3805 = vpop.xlane.xlu0 %3804
        %v3806 = vmax.f32 %v3759, %v3760
        %3807 = vmax.xlane.f32.xlu0 %v3806
        %v3808 = vpop.xlane.xlu0 %3807
        %v3809 = vmax.f32 %v3763, -1e+20
        %v3810 = vmax.f32 %v3766, -1e+20
        %v3811 = vmax.f32 %v3769, -1e+20
        %v3812 = vmax.f32 %v3772, -1e+20
        %v3813 = vmax.f32 %v3775, -1e+20
        %v3814 = vmax.f32 %v3778, -1e+20
        %v3815 = vmax.f32 %v3781, -1e+20
        %v3816 = vmax.f32 %v3784, -1e+20
        %v3817 = vmax.f32 %v3787, -1e+20
        %v3818 = vmax.f32 %v3790, -1e+20
        %v3819 = vmax.f32 %v3793, -1e+20
        %v3820 = vmax.f32 %v3796, -1e+20
        %v3821 = vmax.f32 %v3799, -1e+20
        %v3822 = vmax.f32 %v3802, -1e+20
        %v3823 = vmax.f32 %v3805, -1e+20
        %v3824 = vmax.f32 %v3808, -1e+20
        %v3825 = vsub.f32 %v3729, %v3809
        %v3826 = vsub.f32 %v3730, %v3809
        %v3827 = vsub.f32 %v3731, %v3810
        %v3828 = vsub.f32 %v3732, %v3810
        %v3829 = vsub.f32 %v3733, %v3811
        %v3830 = vsub.f32 %v3734, %v3811
        %v3831 = vsub.f32 %v3735, %v3812
        %v3832 = vsub.f32 %v3736, %v3812
        %v3833 = vsub.f32 %v3737, %v3813
        %v3834 = vsub.f32 %v3738, %v3813
        %v3835 = vsub.f32 %v3739, %v3814
        %v3836 = vsub.f32 %v3740, %v3814
        %v3837 = vsub.f32 %v3741, %v3815
        %v3838 = vsub.f32 %v3742, %v3815
        %v3839 = vsub.f32 %v3743, %v3816
        %v3840 = vsub.f32 %v3744, %v3816
        %v3841 = vsub.f32 %v3745, %v3817
        %v3842 = vsub.f32 %v3746, %v3817
        %v3843 = vsub.f32 %v3747, %v3818
        %v3844 = vsub.f32 %v3748, %v3818
        %v3845 = vsub.f32 %v3749, %v3819
        %v3846 = vsub.f32 %v3750, %v3819
        %v3847 = vsub.f32 %v3751, %v3820
        %v3848 = vsub.f32 %v3752, %v3820
        %v3849 = vsub.f32 %v3753, %v3821
        %v3850 = vsub.f32 %v3754, %v3821
        %v3851 = vsub.f32 %v3755, %v3822
        %v3852 = vsub.f32 %v3756, %v3822
        %v3853 = vsub.f32 %v3757, %v3823
        %v3854 = vsub.f32 %v3758, %v3823
        %v3855 = vsub.f32 %v3759, %v3824
        %v3856 = vsub.f32 %v3760, %v3824
        %v3857 = vmul.f32 %v3825, 1.442695
        %v3858 = vpow.pop %v3857
        %v3859 = vmul.f32 %v3826, 1.442695
        %v3860 = vpow.pop %v3859
        %v3861 = vmul.f32 %v3827, 1.442695
        %v3862 = vpow.pop %v3861
        %v3863 = vmul.f32 %v3828, 1.442695
        %v3864 = vpow.pop %v3863
        %v3865 = vmul.f32 %v3829, 1.442695
        %v3866 = vpow.pop %v3865
        %v3867 = vmul.f32 %v3830, 1.442695
        %v3868 = vpow.pop %v3867
        %v3869 = vmul.f32 %v3831, 1.442695
        %v3870 = vpow.pop %v3869
        %v3871 = vmul.f32 %v3832, 1.442695
        %v3872 = vpow.pop %v3871
        %v3873 = vmul.f32 %v3833, 1.442695
        %v3874 = vpow.pop %v3873
        %v3875 = vmul.f32 %v3834, 1.442695
        %v3876 = vpow.pop %v3875
        %v3877 = vmul.f32 %v3835, 1.442695
        %v3878 = vpow.pop %v3877
        %v3879 = vmul.f32 %v3836, 1.442695
        %v3880 = vpow.pop %v3879
        %v3881 = vmul.f32 %v3837, 1.442695
        %v3882 = vpow.pop %v3881
        %v3883 = vmul.f32 %v3838, 1.442695
        %v3884 = vpow.pop %v3883
        %v3885 = vmul.f32 %v3839, 1.442695
        %v3886 = vpow.pop %v3885
        %v3887 = vmul.f32 %v3840, 1.442695
        %v3888 = vpow.pop %v3887
        %v3889 = vmul.f32 %v3841, 1.442695
        %v3890 = vpow.pop %v3889
        %v3891 = vmul.f32 %v3842, 1.442695
        %v3892 = vpow.pop %v3891
        %v3893 = vmul.f32 %v3843, 1.442695
        %v3894 = vpow.pop %v3893
        %v3895 = vmul.f32 %v3844, 1.442695
        %v3896 = vpow.pop %v3895
        %v3897 = vmul.f32 %v3845, 1.442695
        %v3898 = vpow.pop %v3897
        %v3899 = vmul.f32 %v3846, 1.442695
        %v3900 = vpow.pop %v3899
        %v3901 = vmul.f32 %v3847, 1.442695
        %v3902 = vpow.pop %v3901
        %v3903 = vmul.f32 %v3848, 1.442695
        %v3904 = vpow.pop %v3903
        %v3905 = vmul.f32 %v3849, 1.442695
        %v3906 = vpow.pop %v3905
        %v3907 = vmul.f32 %v3850, 1.442695
        %v3908 = vpow.pop %v3907
        %v3909 = vmul.f32 %v3851, 1.442695
        %v3910 = vpow.pop %v3909
        %v3911 = vmul.f32 %v3852, 1.442695
        %v3912 = vpow.pop %v3911
        %v3913 = vmul.f32 %v3853, 1.442695
        %v3914 = vpow.pop %v3913
        %v3915 = vmul.f32 %v3854, 1.442695
        %v3916 = vpow.pop %v3915
        %v3917 = vmul.f32 %v3855, 1.442695
        %v3918 = vpow.pop %v3917
        %v3919 = vmul.f32 %v3856, 1.442695
        %v3920 = vpow.pop %v3919
        %v3921 = vadd.f32 %v3858, %v3860
        %3922 = vadd.xlane.f32.xlu0 %v3921
        %v3923 = vpop.xlane.xlu0 %3922
        %v3924 = vadd.f32 %v3862, %v3864
        %3925 = vadd.xlane.f32.xlu0 %v3924
        %v3926 = vpop.xlane.xlu0 %3925
        %v3927 = vadd.f32 %v3866, %v3868
        %3928 = vadd.xlane.f32.xlu0 %v3927
        %v3929 = vpop.xlane.xlu0 %3928
        %v3930 = vadd.f32 %v3870, %v3872
        %3931 = vadd.xlane.f32.xlu0 %v3930
        %v3932 = vpop.xlane.xlu0 %3931
        %v3933 = vadd.f32 %v3874, %v3876
        %3934 = vadd.xlane.f32.xlu0 %v3933
        %v3935 = vpop.xlane.xlu0 %3934
        %v3936 = vadd.f32 %v3878, %v3880
        %3937 = vadd.xlane.f32.xlu0 %v3936
        %v3938 = vpop.xlane.xlu0 %3937
        %v3939 = vadd.f32 %v3882, %v3884
        %3940 = vadd.xlane.f32.xlu0 %v3939
        %v3941 = vpop.xlane.xlu0 %3940
        %v3942 = vadd.f32 %v3886, %v3888
        %3943 = vadd.xlane.f32.xlu0 %v3942
        %v3944 = vpop.xlane.xlu0 %3943
        %v3945 = vadd.f32 %v3890, %v3892
        %3946 = vadd.xlane.f32.xlu0 %v3945
        %v3947 = vpop.xlane.xlu0 %3946
        %v3948 = vadd.f32 %v3894, %v3896
        %3949 = vadd.xlane.f32.xlu0 %v3948
        %v3950 = vpop.xlane.xlu0 %3949
        %v3951 = vadd.f32 %v3898, %v3900
        %3952 = vadd.xlane.f32.xlu0 %v3951
        %v3953 = vpop.xlane.xlu0 %3952
        %v3954 = vadd.f32 %v3902, %v3904
        %3955 = vadd.xlane.f32.xlu0 %v3954
        %v3956 = vpop.xlane.xlu0 %3955
        %v3957 = vadd.f32 %v3906, %v3908
        %3958 = vadd.xlane.f32.xlu0 %v3957
        %v3959 = vpop.xlane.xlu0 %3958
        %v3960 = vadd.f32 %v3910, %v3912
        %3961 = vadd.xlane.f32.xlu0 %v3960
        %v3962 = vpop.xlane.xlu0 %3961
        %v3963 = vadd.f32 %v3914, %v3916
        %3964 = vadd.xlane.f32.xlu0 %v3963
        %v3965 = vpop.xlane.xlu0 %3964
        %v3966 = vadd.f32 %v3918, %v3920
        %3967 = vadd.xlane.f32.xlu0 %v3966
        %v3968 = vpop.xlane.xlu0 %3967
        %vm3969 = vcmp.gt.f32.partialorder %v3923, 0.0
        %vm3970 = vcmp.gt.f32.partialorder %v3926, 0.0
        %vm3971 = vcmp.gt.f32.partialorder %v3929, 0.0
        %vm3972 = vcmp.gt.f32.partialorder %v3932, 0.0
        %vm3973 = vcmp.gt.f32.partialorder %v3935, 0.0
        %vm3974 = vcmp.gt.f32.partialorder %v3938, 0.0
        %vm3975 = vcmp.gt.f32.partialorder %v3941, 0.0
        %vm3976 = vcmp.gt.f32.partialorder %v3944, 0.0
        %vm3977 = vcmp.gt.f32.partialorder %v3947, 0.0
        %vm3978 = vcmp.gt.f32.partialorder %v3950, 0.0
        %vm3979 = vcmp.gt.f32.partialorder %v3953, 0.0
        %vm3980 = vcmp.gt.f32.partialorder %v3956, 0.0
        %vm3981 = vcmp.gt.f32.partialorder %v3959, 0.0
        %vm3982 = vcmp.gt.f32.partialorder %v3962, 0.0
        %vm3983 = vcmp.gt.f32.partialorder %v3965, 0.0
        %vm3984 = vcmp.gt.f32.partialorder %v3968, 0.0
        %v3985 = vsel %vm3969, %v3923, 1.0
        %v3986 = vsel %vm3970, %v3926, 1.0
        %v3987 = vsel %vm3971, %v3929, 1.0
        %v3988 = vsel %vm3972, %v3932, 1.0
        %v3989 = vsel %vm3973, %v3935, 1.0
        %v3990 = vsel %vm3974, %v3938, 1.0
        %v3991 = vsel %vm3975, %v3941, 1.0
        %v3992 = vsel %vm3976, %v3944, 1.0
        %v3993 = vsel %vm3977, %v3947, 1.0
        %v3994 = vsel %vm3978, %v3950, 1.0
        %v3995 = vsel %vm3979, %v3953, 1.0
        %v3996 = vsel %vm3980, %v3956, 1.0
        %v3997 = vsel %vm3981, %v3959, 1.0
        %v3998 = vsel %vm3982, %v3962, 1.0
        %v3999 = vsel %vm3983, %v3965, 1.0
        %v4000 = vsel %vm3984, %v3968, 1.0
        %v4001 = vrcp.pop %v3985
        %v4002 = vmul.f32 1.0, %v4001
        %v4003 = vrcp.pop %v3986
        %v4004 = vmul.f32 1.0, %v4003
        %v4005 = vrcp.pop %v3987
        %v4006 = vmul.f32 1.0, %v4005
        %v4007 = vrcp.pop %v3988
        %v4008 = vmul.f32 1.0, %v4007
        %v4009 = vrcp.pop %v3989
        %v4010 = vmul.f32 1.0, %v4009
        %v4011 = vrcp.pop %v3990
        %v4012 = vmul.f32 1.0, %v4011
        %v4013 = vrcp.pop %v3991
        %v4014 = vmul.f32 1.0, %v4013
        %v4015 = vrcp.pop %v3992
        %v4016 = vmul.f32 1.0, %v4015
        %v4017 = vrcp.pop %v3993
        %v4018 = vmul.f32 1.0, %v4017
        %v4019 = vrcp.pop %v3994
        %v4020 = vmul.f32 1.0, %v4019
        %v4021 = vrcp.pop %v3995
        %v4022 = vmul.f32 1.0, %v4021
        %v4023 = vrcp.pop %v3996
        %v4024 = vmul.f32 1.0, %v4023
        %v4025 = vrcp.pop %v3997
        %v4026 = vmul.f32 1.0, %v4025
        %v4027 = vrcp.pop %v3998
        %v4028 = vmul.f32 1.0, %v4027
        %v4029 = vrcp.pop %v3999
        %v4030 = vmul.f32 1.0, %v4029
        %v4031 = vrcp.pop %v4000
        %v4032 = vmul.f32 1.0, %v4031
        %4033 = vrot.lane.b32.xlu0 %v1863, 104
        %v4034 = vpop.permute.xlu0 %4033
        %4035 = vrot.lane.b32.xlu0 %v1864, 104
        %v4036 = vpop.permute.xlu0 %4035
        %4037 = vrot.lane.b32.xlu0 %v1865, 104
        %v4038 = vpop.permute.xlu0 %4037
        %4039 = vrot.lane.b32.xlu0 %v1866, 104
        %v4040 = vpop.permute.xlu0 %4039
        %4041 = vrot.lane.b32.xlu0 %v1867, 104
        %v4042 = vpop.permute.xlu0 %4041
        %4043 = vrot.lane.b32.xlu0 %v1868, 104
        %v4044 = vpop.permute.xlu0 %4043
        %4045 = vrot.lane.b32.xlu0 %v1869, 104
        %v4046 = vpop.permute.xlu0 %4045
        %4047 = vrot.lane.b32.xlu0 %v1870, 104
        %v4048 = vpop.permute.xlu0 %4047
        %4049 = vrot.lane.b32.xlu0 %v1871, 104
        %v4050 = vpop.permute.xlu0 %4049
        %4051 = vrot.lane.b32.xlu0 %v1872, 104
        %v4052 = vpop.permute.xlu0 %4051
        %4053 = vrot.lane.b32.xlu0 %v1873, 104
        %v4054 = vpop.permute.xlu0 %4053
        %4055 = vrot.lane.b32.xlu0 %v1874, 104
        %v4056 = vpop.permute.xlu0 %4055
        %4057 = vrot.lane.b32.xlu0 %v1875, 104
        %v4058 = vpop.permute.xlu0 %4057
        %4059 = vrot.lane.b32.xlu0 %v1876, 104
        %v4060 = vpop.permute.xlu0 %4059
        %4061 = vrot.lane.b32.xlu0 %v1877, 104
        %v4062 = vpop.permute.xlu0 %4061
        %4063 = vrot.lane.b32.xlu0 %v1878, 104
        %v4064 = vpop.permute.xlu0 %4063
        %4065 = vrot.lane.b32.xlu0 %v1879, 104
        %v4066 = vpop.permute.xlu0 %4065
        %4067 = vrot.lane.b32.xlu0 %v1880, 104
        %v4068 = vpop.permute.xlu0 %4067
        %4069 = vrot.lane.b32.xlu0 %v1881, 104
        %v4070 = vpop.permute.xlu0 %4069
        %4071 = vrot.lane.b32.xlu0 %v1882, 104
        %v4072 = vpop.permute.xlu0 %4071
        %4073 = vrot.lane.b32.xlu0 %v1883, 104
        %v4074 = vpop.permute.xlu0 %4073
        %4075 = vrot.lane.b32.xlu0 %v1884, 104
        %v4076 = vpop.permute.xlu0 %4075
        %4077 = vrot.lane.b32.xlu0 %v1885, 104
        %v4078 = vpop.permute.xlu0 %4077
        %4079 = vrot.lane.b32.xlu0 %v1886, 104
        %v4080 = vpop.permute.xlu0 %4079
        %4081 = vrot.lane.b32.xlu0 %v1887, 104
        %v4082 = vpop.permute.xlu0 %4081
        %4083 = vrot.lane.b32.xlu0 %v1888, 104
        %v4084 = vpop.permute.xlu0 %4083
        %4085 = vrot.lane.b32.xlu0 %v1889, 104
        %v4086 = vpop.permute.xlu0 %4085
        %4087 = vrot.lane.b32.xlu0 %v1890, 104
        %v4088 = vpop.permute.xlu0 %4087
        %4089 = vrot.lane.b32.xlu0 %v1891, 104
        %v4090 = vpop.permute.xlu0 %4089
        %4091 = vrot.lane.b32.xlu0 %v1892, 104
        %v4092 = vpop.permute.xlu0 %4091
        %4093 = vrot.lane.b32.xlu0 %v1893, 104
        %v4094 = vpop.permute.xlu0 %4093
        %4095 = vrot.lane.b32.xlu0 %v1894, 104
        %v4096 = vpop.permute.xlu0 %4095
        %4129 = vmatprep.subr.mxu0 0.0
        %4130 = vmatpush1.msra.mxu0 %v4034
        %4131 = vmatprep.subr.mxu0 0.0
        %4132 = vmatpush1.msra.mxu0 %v4036
        %4133 = vmatprep.subr.mxu0 0.0
        %4134 = vmatpush1.msra.mxu0 %v4038
        %4135 = vmatprep.subr.mxu0 0.0
        %4136 = vmatpush1.msra.mxu0 %v4040
        %4137 = vmatprep.subr.mxu0 0.0
        %4138 = vmatpush1.msra.mxu0 %v4042
        %4139 = vmatprep.subr.mxu0 0.0
        %4140 = vmatpush1.msra.mxu0 %v4044
        %4141 = vmatprep.subr.mxu0 0.0
        %4142 = vmatpush1.msra.mxu0 %v4046
        %4143 = vmatprep.subr.mxu0 0.0
        %4144 = vmatpush1.msra.mxu0 %v4048
        %4145 = vmatprep.subr.mxu0 0.0
        %4146 = vmatpush1.msra.mxu0 %v4050
        %4147 = vmatprep.subr.mxu0 0.0
        %4148 = vmatpush1.msra.mxu0 %v4052
        %4149 = vmatprep.subr.mxu0 0.0
        %4150 = vmatpush1.msra.mxu0 %v4054
        %4151 = vmatprep.subr.mxu0 0.0
        %4152 = vmatpush1.msra.mxu0 %v4056
        %4153 = vmatprep.subr.mxu0 0.0
        %4154 = vmatpush1.msra.mxu0 %v4058
        %4155 = vmatprep.subr.mxu0 0.0
        %4156 = vmatpush1.msra.mxu0 %v4060
        %4157 = vmatprep.subr.mxu0 0.0
        %4158 = vmatpush1.msra.mxu0 %v4062
        %4159 = vmatprep.subr.mxu0 0.0
        %4160 = vmatpush1.msra.mxu0 %v4064
        %4161 = vmatprep.subr.mxu0 0.0
        %4162 = vmatpush1.msra.mxu0 %v4066
        %4163 = vmatprep.subr.mxu0 0.0
        %4164 = vmatpush1.msra.mxu0 %v4068
        %4165 = vmatprep.subr.mxu0 0.0
        %4166 = vmatpush1.msra.mxu0 %v4070
        %4167 = vmatprep.subr.mxu0 0.0
        %4168 = vmatpush1.msra.mxu0 %v4072
        %4169 = vmatprep.subr.mxu0 0.0
        %4170 = vmatpush1.msra.mxu0 %v4074
        %4171 = vmatprep.subr.mxu0 0.0
        %4172 = vmatpush1.msra.mxu0 %v4076
        %4173 = vmatprep.subr.mxu0 0.0
        %4174 = vmatpush1.msra.mxu0 %v4078
        %4175 = vmatprep.subr.mxu0 0.0
        %4176 = vmatpush1.msra.mxu0 %v4080
        %4177 = vmatprep.subr.mxu0 0.0
        %4178 = vmatpush1.msra.mxu0 %v4082
        %4179 = vmatprep.subr.mxu0 0.0
        %4180 = vmatpush1.msra.mxu0 %v4084
        %4181 = vmatprep.subr.mxu0 0.0
        %4182 = vmatpush1.msra.mxu0 %v4086
        %4183 = vmatprep.subr.mxu0 0.0
        %4184 = vmatpush1.msra.mxu0 %v4088
        %4185 = vmatprep.subr.mxu0 0.0
        %4186 = vmatpush1.msra.mxu0 %v4090
        %4187 = vmatprep.subr.mxu0 0.0
        %4188 = vmatpush1.msra.mxu0 %v4092
        %4189 = vmatprep.subr.mxu0 0.0
        %4190 = vmatpush1.msra.mxu0 %v4094
        %4191 = vmatprep.subr.mxu0 0.0
        %4192 = vmatpush1.msra.mxu0 %v4096
        %4193 = vmatprep.mubr.f32.mxu0 %v3860
        %4194 = vmatmul.mubr.f32.gmra.mrb[0].mxu0 %v3858
        %v4195 = vpop.f32.mrb[0].mxu0
        %v4196 = vadd.f32 0.0, %v4195
        %v4197 = vpop.f32.mrb[0].mxu0
        %4198 = vmatprep.mubr.f32.mxu0 %v3864
        %4199 = vmatmul.mubr.f32.gmra.mrb[0].mxu0 %v3862
        %v4200 = vpop.f32.mrb[0].mxu0
        %v4201 = vadd.f32 0.0, %v4200
        %v4202 = vpop.f32.mrb[0].mxu0
        %4203 = vmatprep.mubr.f32.mxu0 %v3868
        %4204 = vmatmul.mubr.f32.gmra.mrb[0].mxu0 %v3866
        %v4205 = vpop.f32.mrb[0].mxu0
        %v4206 = vadd.f32 0.0, %v4205
        %v4207 = vpop.f32.mrb[0].mxu0
        %4208 = vmatprep.mubr.f32.mxu0 %v3872
        %4209 = vmatmul.mubr.f32.gmra.mrb[0].mxu0 %v3870
        %v4210 = vpop.f32.mrb[0].mxu0
        %v4211 = vadd.f32 0.0, %v4210
        %v4212 = vpop.f32.mrb[0].mxu0
        %4213 = vmatprep.mubr.f32.mxu0 %v3876
        %4214 = vmatmul.mubr.f32.gmra.mrb[0].mxu0 %v3874
        %v4215 = vpop.f32.mrb[0].mxu0
        %v4216 = vadd.f32 0.0, %v4215
        %v4217 = vpop.f32.mrb[0].mxu0
        %4218 = vmatprep.mubr.f32.mxu0 %v3880
        %4219 = vmatmul.mubr.f32.gmra.mrb[0].mxu0 %v3878
        %v4220 = vpop.f32.mrb[0].mxu0
        %v4221 = vadd.f32 0.0, %v4220
        %v4222 = vpop.f32.mrb[0].mxu0
        %4223 = vmatprep.mubr.f32.mxu0 %v3884
        %4224 = vmatmul.mubr.f32.gmra.mrb[0].mxu0 %v3882
        %v4225 = vpop.f32.mrb[0].mxu0
        %v4226 = vadd.f32 0.0, %v4225
        %v4227 = vpop.f32.mrb[0].mxu0
        %4228 = vmatprep.mubr.f32.mxu0 %v3888
        %4229 = vmatmul.mubr.f32.gmra.mrb[0].mxu0 %v3886
        %v4230 = vpop.f32.mrb[0].mxu0
        %v4231 = vadd.f32 0.0, %v4230
        %v4232 = vpop.f32.mrb[0].mxu0
        %4233 = vmatprep.mubr.f32.mxu0 %v3892
        %4234 = vmatmul.mubr.f32.gmra.mrb[0].mxu0 %v3890
        %v4235 = vpop.f32.mrb[0].mxu0
        %v4236 = vadd.f32 0.0, %v4235
        %v4237 = vpop.f32.mrb[0].mxu0
        %4238 = vmatprep.mubr.f32.mxu0 %v3896
        %4239 = vmatmul.mubr.f32.gmra.mrb[0].mxu0 %v3894
        %v4240 = vpop.f32.mrb[0].mxu0
        %v4241 = vadd.f32 0.0, %v4240
        %v4242 = vpop.f32.mrb[0].mxu0
        %4243 = vmatprep.mubr.f32.mxu0 %v3900
        %4244 = vmatmul.mubr.f32.gmra.mrb[0].mxu0 %v3898
        %v4245 = vpop.f32.mrb[0].mxu0
        %v4246 = vadd.f32 0.0, %v4245
        %v4247 = vpop.f32.mrb[0].mxu0
        %4248 = vmatprep.mubr.f32.mxu0 %v3904
        %4249 = vmatmul.mubr.f32.gmra.mrb[0].mxu0 %v3902
        %v4250 = vpop.f32.mrb[0].mxu0
        %v4251 = vadd.f32 0.0, %v4250
        %v4252 = vpop.f32.mrb[0].mxu0
        %4253 = vmatprep.mubr.f32.mxu0 %v3908
        %4254 = vmatmul.mubr.f32.gmra.mrb[0].mxu0 %v3906
        %v4255 = vpop.f32.mrb[0].mxu0
        %v4256 = vadd.f32 0.0, %v4255
        %v4257 = vpop.f32.mrb[0].mxu0
        %4258 = vmatprep.mubr.f32.mxu0 %v3912
        %4259 = vmatmul.mubr.f32.gmra.mrb[0].mxu0 %v3910
        %v4260 = vpop.f32.mrb[0].mxu0
        %v4261 = vadd.f32 0.0, %v4260
        %v4262 = vpop.f32.mrb[0].mxu0
        %4263 = vmatprep.mubr.f32.mxu0 %v3916
        %4264 = vmatmul.mubr.f32.gmra.mrb[0].mxu0 %v3914
        %v4265 = vpop.f32.mrb[0].mxu0
        %v4266 = vadd.f32 0.0, %v4265
        %v4267 = vpop.f32.mrb[0].mxu0
        %4268 = vmatprep.mubr.f32.mxu0 %v3920
        %4269 = vmatmul.mubr.f32.gmra.mrb[0].mxu0 %v3918
        %v4270 = vpop.f32.mrb[0].mxu0
        %v4271 = vadd.f32 0.0, %v4270
        %v4272 = vpop.f32.mrb[0].mxu0
        %4273 = vdwg.mxu0
        %v4274 = vmul.f32 %v4196, %v4002
        %v4275 = vmul.f32 %v4201, %v4004
        %v4276 = vmul.f32 %v4206, %v4006
        %v4277 = vmul.f32 %v4211, %v4008
        %v4278 = vmul.f32 %v4216, %v4010
        %v4279 = vmul.f32 %v4221, %v4012
        %v4280 = vmul.f32 %v4226, %v4014
        %v4281 = vmul.f32 %v4231, %v4016
        %v4282 = vmul.f32 %v4236, %v4018
        %v4283 = vmul.f32 %v4241, %v4020
        %v4284 = vmul.f32 %v4246, %v4022
        %v4285 = vmul.f32 %v4251, %v4024
        %v4286 = vmul.f32 %v4256, %v4026
        %v4287 = vmul.f32 %v4261, %v4028
        %v4288 = vmul.f32 %v4266, %v4030
        %v4289 = vmul.f32 %v4271, %v4032
        %4306 = vrot.lane.b32.xlu0 %v2806, 8
        %v4307 = vpop.permute.xlu0 %4306
        %4308 = vrot.lane.b32.xlu0 %v2807, 8
        %v4309 = vpop.permute.xlu0 %4308
        %4310 = vrot.lane.b32.xlu0 %v2808, 8
        %v4311 = vpop.permute.xlu0 %4310
        %4312 = vrot.lane.b32.xlu0 %v2809, 8
        %v4313 = vpop.permute.xlu0 %4312
        %4314 = vrot.lane.b32.xlu0 %v2810, 8
        %v4315 = vpop.permute.xlu0 %4314
        %4316 = vrot.lane.b32.xlu0 %v2811, 8
        %v4317 = vpop.permute.xlu0 %4316
        %4318 = vrot.lane.b32.xlu0 %v2812, 8
        %v4319 = vpop.permute.xlu0 %4318
        %4320 = vrot.lane.b32.xlu0 %v2813, 8
        %v4321 = vpop.permute.xlu0 %4320
        %4322 = vrot.lane.b32.xlu0 %v2814, 8
        %v4323 = vpop.permute.xlu0 %4322
        %4324 = vrot.lane.b32.xlu0 %v2815, 8
        %v4325 = vpop.permute.xlu0 %4324
        %4326 = vrot.lane.b32.xlu0 %v2816, 8
        %v4327 = vpop.permute.xlu0 %4326
        %4328 = vrot.lane.b32.xlu0 %v2817, 8
        %v4329 = vpop.permute.xlu0 %4328
        %4330 = vrot.lane.b32.xlu0 %v2818, 8
        %v4331 = vpop.permute.xlu0 %4330
        %4332 = vrot.lane.b32.xlu0 %v2819, 8
        %v4333 = vpop.permute.xlu0 %4332
        %4334 = vrot.lane.b32.xlu0 %v2820, 8
        %v4335 = vpop.permute.xlu0 %4334
        %4336 = vrot.lane.b32.xlu0 %v2821, 8
        %v4337 = vpop.permute.xlu0 %4336
        %4370 = vrot.lane.b32.xlu0 %v3540, 16
        %v4371 = vpop.permute.xlu0 %4370
        %4372 = vrot.lane.b32.xlu0 %v3541, 16
        %v4373 = vpop.permute.xlu0 %4372
        %4374 = vrot.lane.b32.xlu0 %v3542, 16
        %v4375 = vpop.permute.xlu0 %4374
        %4376 = vrot.lane.b32.xlu0 %v3543, 16
        %v4377 = vpop.permute.xlu0 %4376
        %4378 = vrot.lane.b32.xlu0 %v3544, 16
        %v4379 = vpop.permute.xlu0 %4378
        %4380 = vrot.lane.b32.xlu0 %v3545, 16
        %v4381 = vpop.permute.xlu0 %4380
        %4382 = vrot.lane.b32.xlu0 %v3546, 16
        %v4383 = vpop.permute.xlu0 %4382
        %4384 = vrot.lane.b32.xlu0 %v3547, 16
        %v4385 = vpop.permute.xlu0 %4384
        %4386 = vrot.lane.b32.xlu0 %v3548, 16
        %v4387 = vpop.permute.xlu0 %4386
        %4388 = vrot.lane.b32.xlu0 %v3549, 16
        %v4389 = vpop.permute.xlu0 %4388
        %4390 = vrot.lane.b32.xlu0 %v3550, 16
        %v4391 = vpop.permute.xlu0 %4390
        %4392 = vrot.lane.b32.xlu0 %v3551, 16
        %v4393 = vpop.permute.xlu0 %4392
        %4394 = vrot.lane.b32.xlu0 %v3552, 16
        %v4395 = vpop.permute.xlu0 %4394
        %4396 = vrot.lane.b32.xlu0 %v3553, 16
        %v4397 = vpop.permute.xlu0 %4396
        %4398 = vrot.lane.b32.xlu0 %v3554, 16
        %v4399 = vpop.permute.xlu0 %4398
        %4400 = vrot.lane.b32.xlu0 %v3555, 16
        %v4401 = vpop.permute.xlu0 %4400
        %4434 = vrot.lane.b32.xlu0 %v4274, 24
        %v4435 = vpop.permute.xlu0 %4434
        %4436 = vrot.lane.b32.xlu0 %v4275, 24
        %v4437 = vpop.permute.xlu0 %4436
        %4438 = vrot.lane.b32.xlu0 %v4276, 24
        %v4439 = vpop.permute.xlu0 %4438
        %4440 = vrot.lane.b32.xlu0 %v4277, 24
        %v4441 = vpop.permute.xlu0 %4440
        %4442 = vrot.lane.b32.xlu0 %v4278, 24
        %v4443 = vpop.permute.xlu0 %4442
        %4444 = vrot.lane.b32.xlu0 %v4279, 24
        %v4445 = vpop.permute.xlu0 %4444
        %4446 = vrot.lane.b32.xlu0 %v4280, 24
        %v4447 = vpop.permute.xlu0 %4446
        %4448 = vrot.lane.b32.xlu0 %v4281, 24
        %v4449 = vpop.permute.xlu0 %4448
        %4450 = vrot.lane.b32.xlu0 %v4282, 24
        %v4451 = vpop.permute.xlu0 %4450
        %4452 = vrot.lane.b32.xlu0 %v4283, 24
        %v4453 = vpop.permute.xlu0 %4452
        %4454 = vrot.lane.b32.xlu0 %v4284, 24
        %v4455 = vpop.permute.xlu0 %4454
        %4456 = vrot.lane.b32.xlu0 %v4285, 24
        %v4457 = vpop.permute.xlu0 %4456
        %4458 = vrot.lane.b32.xlu0 %v4286, 24
        %v4459 = vpop.permute.xlu0 %4458
        %4460 = vrot.lane.b32.xlu0 %v4287, 24
        %v4461 = vpop.permute.xlu0 %4460
        %4462 = vrot.lane.b32.xlu0 %v4288, 24
        %v4463 = vpop.permute.xlu0 %4462
        %4464 = vrot.lane.b32.xlu0 %v4289, 24
        %v4465 = vpop.permute.xlu0 %4464
        %vm4482 = vcmask 64512
        %v4483 = vsel %vm4482, %v2040, %v4307
        %v4484 = vsel %vm4482, %v2041, %v4309
        %v4485 = vsel %vm4482, %v2042, %v4311
        %v4486 = vsel %vm4482, %v2043, %v4313
        %v4487 = vsel %vm4482, %v2044, %v4315
        %v4488 = vsel %vm4482, %v2045, %v4317
        %v4489 = vsel %vm4482, %v2046, %v4319
        %v4490 = vsel %vm4482, %v2047, %v4321
        %v4491 = vsel %vm4482, %v2048, %v4323
        %v4492 = vsel %vm4482, %v2049, %v4325
        %v4493 = vsel %vm4482, %v2050, %v4327
        %v4494 = vsel %vm4482, %v2051, %v4329
        %v4495 = vsel %vm4482, %v2052, %v4331
        %v4496 = vsel %vm4482, %v2053, %v4333
        %v4497 = vsel %vm4482, %v2054, %v4335
        %v4498 = vsel %vm4482, %v2055, %v4337
        %vm4499 = vcmask 130048
        %v4500 = vsel %vm4499, %v4483, %v4371
        %v4501 = vsel %vm4499, %v4484, %v4373
        %v4502 = vsel %vm4499, %v4485, %v4375
        %v4503 = vsel %vm4499, %v4486, %v4377
        %v4504 = vsel %vm4499, %v4487, %v4379
        %v4505 = vsel %vm4499, %v4488, %v4381
        %v4506 = vsel %vm4499, %v4489, %v4383
        %v4507 = vsel %vm4499, %v4490, %v4385
        %v4508 = vsel %vm4499, %v4491, %v4387
        %v4509 = vsel %vm4499, %v4492, %v4389
        %v4510 = vsel %vm4499, %v4493, %v4391
        %v4511 = vsel %vm4499, %v4494, %v4393
        %v4512 = vsel %vm4499, %v4495, %v4395
        %v4513 = vsel %vm4499, %v4496, %v4397
        %v4514 = vsel %vm4499, %v4497, %v4399
        %v4515 = vsel %vm4499, %v4498, %v4401
        %vm4516 = vcmask 195584
        %v4517 = vsel %vm4516, %v4500, %v4435
        %v4518 = vsel %vm4516, %v4501, %v4437
        %v4519 = vsel %vm4516, %v4502, %v4439
        %v4520 = vsel %vm4516, %v4503, %v4441
        %v4521 = vsel %vm4516, %v4504, %v4443
        %v4522 = vsel %vm4516, %v4505, %v4445
        %v4523 = vsel %vm4516, %v4506, %v4447
        %v4524 = vsel %vm4516, %v4507, %v4449
        %v4525 = vsel %vm4516, %v4508, %v4451
        %v4526 = vsel %vm4516, %v4509, %v4453
        %v4527 = vsel %vm4516, %v4510, %v4455
        %v4528 = vsel %vm4516, %v4511, %v4457
        %v4529 = vsel %vm4516, %v4512, %v4459
        %v4530 = vsel %vm4516, %v4513, %v4461
        %v4531 = vsel %vm4516, %v4514, %v4463
        %v4532 = vsel %vm4516, %v4515, %v4465
        %vm4533 = vcmask 261120
        %v4534 = vsel %vm4533, %v4517, 0.0
        %v4535 = vsel %vm4533, %v4518, 0.0
        %v4536 = vsel %vm4533, %v4519, 0.0
        %v4537 = vsel %vm4533, %v4520, 0.0
        %v4538 = vsel %vm4533, %v4521, 0.0
        %v4539 = vsel %vm4533, %v4522, 0.0
        %v4540 = vsel %vm4533, %v4523, 0.0
        %v4541 = vsel %vm4533, %v4524, 0.0
        %v4542 = vsel %vm4533, %v4525, 0.0
        %v4543 = vsel %vm4533, %v4526, 0.0
        %v4544 = vsel %vm4533, %v4527, 0.0
        %v4545 = vsel %vm4533, %v4528, 0.0
        %v4546 = vsel %vm4533, %v4529, 0.0
        %v4547 = vsel %vm4533, %v4530, 0.0
        %v4548 = vsel %vm4533, %v4531, 0.0
        %v4549 = vsel %vm4533, %v4532, 0.0
        %v4550 = vld [vmem:[%s478] sm:$0x1]
        %v4552 = vlaneseq
        %v4553 = vshrl.u32 %v4552, 7
        %v4554 = vsub.s32 0, %v4553
        %v4555 = vrot.slane %v4550, %v4554
        %v4557 = vadd.f32 %v4534, %v4555
        %v4558 = vadd.f32 %v4535, %v4555
        %v4559 = vadd.f32 %v4536, %v4555
        %v4560 = vadd.f32 %v4537, %v4555
        %v4561 = vadd.f32 %v4538, %v4555
        %v4562 = vadd.f32 %v4539, %v4555
        %v4563 = vadd.f32 %v4540, %v4555
        %v4564 = vadd.f32 %v4541, %v4555
        %v4565 = vadd.f32 %v4542, %v4555
        %v4566 = vadd.f32 %v4543, %v4555
        %v4567 = vadd.f32 %v4544, %v4555
        %v4568 = vadd.f32 %v4545, %v4555
        %v4569 = vadd.f32 %v4546, %v4555
        %v4570 = vadd.f32 %v4547, %v4555
        %v4571 = vadd.f32 %v4548, %v4555
        %v4572 = vadd.f32 %v4549, %v4555
        %vm4573 = vcmp.gt.f32.partialorder %v4557, 0.0
        %vm4574 = vcmp.gt.f32.partialorder %v4558, 0.0
        %vm4575 = vcmp.gt.f32.partialorder %v4559, 0.0
        %vm4576 = vcmp.gt.f32.partialorder %v4560, 0.0
        %vm4577 = vcmp.gt.f32.partialorder %v4561, 0.0
        %vm4578 = vcmp.gt.f32.partialorder %v4562, 0.0
        %vm4579 = vcmp.gt.f32.partialorder %v4563, 0.0
        %vm4580 = vcmp.gt.f32.partialorder %v4564, 0.0
        %vm4581 = vcmp.gt.f32.partialorder %v4565, 0.0
        %vm4582 = vcmp.gt.f32.partialorder %v4566, 0.0
        %vm4583 = vcmp.gt.f32.partialorder %v4567, 0.0
        %vm4584 = vcmp.gt.f32.partialorder %v4568, 0.0
        %vm4585 = vcmp.gt.f32.partialorder %v4569, 0.0
        %vm4586 = vcmp.gt.f32.partialorder %v4570, 0.0
        %vm4587 = vcmp.gt.f32.partialorder %v4571, 0.0
        %vm4588 = vcmp.gt.f32.partialorder %v4572, 0.0
        %v4589 = vmin.f32 %v4557, 0.0
        %v4590 = vmin.f32 %v4558, 0.0
        %v4591 = vmin.f32 %v4559, 0.0
        %v4592 = vmin.f32 %v4560, 0.0
        %v4593 = vmin.f32 %v4561, 0.0
        %v4594 = vmin.f32 %v4562, 0.0
        %v4595 = vmin.f32 %v4563, 0.0
        %v4596 = vmin.f32 %v4564, 0.0
        %v4597 = vmin.f32 %v4565, 0.0
        %v4598 = vmin.f32 %v4566, 0.0
        %v4599 = vmin.f32 %v4567, 0.0
        %v4600 = vmin.f32 %v4568, 0.0
        %v4601 = vmin.f32 %v4569, 0.0
        %v4602 = vmin.f32 %v4570, 0.0
        %v4603 = vmin.f32 %v4571, 0.0
        %v4604 = vmin.f32 %v4572, 0.0
        %v4605 = vmul.f32 %v4589, 1.442695
        %v4606 = vpow.pop %v4605
        %v4607 = vmul.f32 %v4590, 1.442695
        %v4608 = vpow.pop %v4607
        %v4609 = vmul.f32 %v4591, 1.442695
        %v4610 = vpow.pop %v4609
        %v4611 = vmul.f32 %v4592, 1.442695
        %v4612 = vpow.pop %v4611
        %v4613 = vmul.f32 %v4593, 1.442695
        %v4614 = vpow.pop %v4613
        %v4615 = vmul.f32 %v4594, 1.442695
        %v4616 = vpow.pop %v4615
        %v4617 = vmul.f32 %v4595, 1.442695
        %v4618 = vpow.pop %v4617
        %v4619 = vmul.f32 %v4596, 1.442695
        %v4620 = vpow.pop %v4619
        %v4621 = vmul.f32 %v4597, 1.442695
        %v4622 = vpow.pop %v4621
        %v4623 = vmul.f32 %v4598, 1.442695
        %v4624 = vpow.pop %v4623
        %v4625 = vmul.f32 %v4599, 1.442695
        %v4626 = vpow.pop %v4625
        %v4627 = vmul.f32 %v4600, 1.442695
        %v4628 = vpow.pop %v4627
        %v4629 = vmul.f32 %v4601, 1.442695
        %v4630 = vpow.pop %v4629
        %v4631 = vmul.f32 %v4602, 1.442695
        %v4632 = vpow.pop %v4631
        %v4633 = vmul.f32 %v4603, 1.442695
        %v4634 = vpow.pop %v4633
        %v4635 = vmul.f32 %v4604, 1.442695
        %v4636 = vpow.pop %v4635
        %v4637 = vsub.f32 %v4606, 1.0
        %v4638 = vsub.f32 %v4608, 1.0
        %v4639 = vsub.f32 %v4610, 1.0
        %v4640 = vsub.f32 %v4612, 1.0
        %v4641 = vsub.f32 %v4614, 1.0
        %v4642 = vsub.f32 %v4616, 1.0
        %v4643 = vsub.f32 %v4618, 1.0
        %v4644 = vsub.f32 %v4620, 1.0
        %v4645 = vsub.f32 %v4622, 1.0
        %v4646 = vsub.f32 %v4624, 1.0
        %v4647 = vsub.f32 %v4626, 1.0
        %v4648 = vsub.f32 %v4628, 1.0
        %v4649 = vsub.f32 %v4630, 1.0
        %v4650 = vsub.f32 %v4632, 1.0
        %v4651 = vsub.f32 %v4634, 1.0
        %v4652 = vsub.f32 %v4636, 1.0
        %v4653 = vsel %vm4573, %v4557, %v4637
        %v4654 = vsel %vm4574, %v4558, %v4638
        %v4655 = vsel %vm4575, %v4559, %v4639
        %v4656 = vsel %vm4576, %v4560, %v4640
        %v4657 = vsel %vm4577, %v4561, %v4641
        %v4658 = vsel %vm4578, %v4562, %v4642
        %v4659 = vsel %vm4579, %v4563, %v4643
        %v4660 = vsel %vm4580, %v4564, %v4644
        %v4661 = vsel %vm4581, %v4565, %v4645
        %v4662 = vsel %vm4582, %v4566, %v4646
        %v4663 = vsel %vm4583, %v4567, %v4647
        %v4664 = vsel %vm4584, %v4568, %v4648
        %v4665 = vsel %vm4585, %v4569, %v4649
        %v4666 = vsel %vm4586, %v4570, %v4650
        %v4667 = vsel %vm4587, %v4571, %v4651
        %v4668 = vsel %vm4588, %v4572, %v4652
        %4669 = vst [vmem:[%s454] sm:$0xff] %v4653
        %4670 = vst [vmem:[%s454 + $0x8] sm:$0xff] %v4654
        %4671 = vst [vmem:[%s454 + $0x10] sm:$0xff] %v4655
        %4672 = vst [vmem:[%s454 + $0x18] sm:$0xff] %v4656
        %4673 = vst [vmem:[%s454 + $0x20] sm:$0xff] %v4657
        %4674 = vst [vmem:[%s454 + $0x28] sm:$0xff] %v4658
        %4675 = vst [vmem:[%s454 + $0x30] sm:$0xff] %v4659
        %4676 = vst [vmem:[%s454 + $0x38] sm:$0xff] %v4660
        %4677 = vst [vmem:[%s454 + $0x40] sm:$0xff] %v4661
        %4678 = vst [vmem:[%s454 + $0x48] sm:$0xff] %v4662
        %4679 = vst [vmem:[%s454 + $0x50] sm:$0xff] %v4663
        %4680 = vst [vmem:[%s454 + $0x58] sm:$0xff] %v4664
        %4681 = vst [vmem:[%s454 + $0x60] sm:$0xff] %v4665
        %4682 = vst [vmem:[%s454 + $0x68] sm:$0xff] %v4666
        %4683 = vst [vmem:[%s454 + $0x70] sm:$0xff] %v4667
        %4684 = vst [vmem:[%s454 + $0x78] sm:$0xff] %v4668
        %v4685 = vlaneseq
        %v4686 = vshrl.u32 %v4685, 7
        %v4687 = vadd.s32 %v4686, 8
        %v4688 = vadd.s32 %v4686, 16
        %v4689 = vadd.s32 %v4686, 24
        %v4690 = vadd.s32 %v4686, 32
        %v4691 = vadd.s32 %v4686, 40
        %v4692 = vadd.s32 %v4686, 48
        %v4693 = vadd.s32 %v4686, 56
        %v4694 = vadd.s32 %v4686, 64
        %v4695 = vadd.s32 %v4686, 72
        %v4696 = vadd.s32 %v4686, 80
        %v4697 = vadd.s32 %v4686, 88
        %v4698 = vadd.s32 %v4686, 96
        %v4699 = vadd.s32 %v4686, 104
        %v4700 = vadd.s32 %v4686, 112
        %v4701 = vadd.s32 %v4686, 120
        %v4702 = vstv %s1353
        %v4703 = vadd.s32 %v4686, %v4702
        %v4704 = vadd.s32 %v4687, %v4702
        %v4705 = vadd.s32 %v4688, %v4702
        %v4706 = vadd.s32 %v4689, %v4702
        %v4707 = vadd.s32 %v4690, %v4702
        %v4708 = vadd.s32 %v4691, %v4702
        %v4709 = vadd.s32 %v4692, %v4702
        %v4710 = vadd.s32 %v4693, %v4702
        %v4711 = vadd.s32 %v4694, %v4702
        %v4712 = vadd.s32 %v4695, %v4702
        %v4713 = vadd.s32 %v4696, %v4702
        %v4714 = vadd.s32 %v4697, %v4702
        %v4715 = vadd.s32 %v4698, %v4702
        %v4716 = vadd.s32 %v4699, %v4702
        %v4717 = vadd.s32 %v4700, %v4702
        %v4718 = vadd.s32 %v4701, %v4702
        %vm4719 = vcmp.lt.s32.totalorder %v4703, 200
        %vm4720 = vcmp.lt.s32.totalorder %v4704, 200
        %vm4721 = vcmp.lt.s32.totalorder %v4705, 200
        %vm4722 = vcmp.lt.s32.totalorder %v4706, 200
        %vm4723 = vcmp.lt.s32.totalorder %v4707, 200
        %vm4724 = vcmp.lt.s32.totalorder %v4708, 200
        %vm4725 = vcmp.lt.s32.totalorder %v4709, 200
        %vm4726 = vcmp.lt.s32.totalorder %v4710, 200
        %vm4727 = vcmp.lt.s32.totalorder %v4711, 200
        %vm4728 = vcmp.lt.s32.totalorder %v4712, 200
        %vm4729 = vcmp.lt.s32.totalorder %v4713, 200
        %vm4730 = vcmp.lt.s32.totalorder %v4714, 200
        %vm4731 = vcmp.lt.s32.totalorder %v4715, 200
        %vm4732 = vcmp.lt.s32.totalorder %v4716, 200
        %vm4733 = vcmp.lt.s32.totalorder %v4717, 200
        %vm4734 = vcmp.lt.s32.totalorder %v4718, 200
        %v4735 = vsel %vm4719, 1, 0
        %v4736 = vsel %vm4720, 1, 0
        %v4737 = vsel %vm4721, 1, 0
        %v4738 = vsel %vm4722, 1, 0
        %v4739 = vsel %vm4723, 1, 0
        %v4740 = vsel %vm4724, 1, 0
        %v4741 = vsel %vm4725, 1, 0
        %v4742 = vsel %vm4726, 1, 0
        %v4743 = vsel %vm4727, 1, 0
        %v4744 = vsel %vm4728, 1, 0
        %v4745 = vsel %vm4729, 1, 0
        %v4746 = vsel %vm4730, 1, 0
        %v4747 = vsel %vm4731, 1, 0
        %v4748 = vsel %vm4732, 1, 0
        %v4749 = vsel %vm4733, 1, 0
        %v4750 = vsel %vm4734, 1, 0
        %v4751 = vcvt.s32.f32 %v4735
        %v4752 = vcvt.s32.f32 %v4736
        %v4753 = vcvt.s32.f32 %v4737
        %v4754 = vcvt.s32.f32 %v4738
        %v4755 = vcvt.s32.f32 %v4739
        %v4756 = vcvt.s32.f32 %v4740
        %v4757 = vcvt.s32.f32 %v4741
        %v4758 = vcvt.s32.f32 %v4742
        %v4759 = vcvt.s32.f32 %v4743
        %v4760 = vcvt.s32.f32 %v4744
        %v4761 = vcvt.s32.f32 %v4745
        %v4762 = vcvt.s32.f32 %v4746
        %v4763 = vcvt.s32.f32 %v4747
        %v4764 = vcvt.s32.f32 %v4748
        %v4765 = vcvt.s32.f32 %v4749
        %v4766 = vcvt.s32.f32 %v4750
        %v4767 = vld [vmem:[%s7] sm:$0xff]
        %v4768 = vld [vmem:[%s7 + $0x8] sm:$0xff]
        %v4769 = vld [vmem:[%s7 + $0x10] sm:$0xff]
        %v4770 = vld [vmem:[%s7 + $0x18] sm:$0xff]
        %v4771 = vld [vmem:[%s7 + $0x20] sm:$0xff]
        %v4772 = vld [vmem:[%s7 + $0x28] sm:$0xff]
        %v4773 = vld [vmem:[%s7 + $0x30] sm:$0xff]
        %v4774 = vld [vmem:[%s7 + $0x38] sm:$0xff]
        %v4775 = vld [vmem:[%s7 + $0x40] sm:$0xff]
        %v4776 = vld [vmem:[%s7 + $0x48] sm:$0xff]
        %v4777 = vld [vmem:[%s7 + $0x50] sm:$0xff]
        %v4778 = vld [vmem:[%s7 + $0x58] sm:$0xff]
        %v4779 = vld [vmem:[%s7 + $0x60] sm:$0xff]
        %v4780 = vld [vmem:[%s7 + $0x68] sm:$0xff]
        %v4781 = vld [vmem:[%s7 + $0x70] sm:$0xff]
        %v4782 = vld [vmem:[%s7 + $0x78] sm:$0xff]
        %v4783 = vld [vmem:[%s8] sm:$0x1]
        %v4785 = vlaneseq
        %v4786 = vshrl.u32 %v4785, 7
        %v4787 = vsub.s32 0, %v4786
        %v4788 = vrot.slane %v4783, %v4787
        %4790 = vmatprep.subr.mxu0 0.0
        %4791 = vmatpush1.msra.mxu0 %v4767
        %4792 = vmatprep.subr.mxu0 0.0
        %4793 = vmatpush1.msra.mxu0 %v4768
        %4794 = vmatprep.subr.mxu0 0.0
        %4795 = vmatpush1.msra.mxu0 %v4769
        %4796 = vmatprep.subr.mxu0 0.0
        %4797 = vmatpush1.msra.mxu0 %v4770
        %4798 = vmatprep.subr.mxu0 0.0
        %4799 = vmatpush1.msra.mxu0 %v4771
        %4800 = vmatprep.subr.mxu0 0.0
        %4801 = vmatpush1.msra.mxu0 %v4772
        %4802 = vmatprep.subr.mxu0 0.0
        %4803 = vmatpush1.msra.mxu0 %v4773
        %4804 = vmatprep.subr.mxu0 0.0
        %4805 = vmatpush1.msra.mxu0 %v4774
        %4806 = vmatprep.subr.mxu0 0.0
        %4807 = vmatpush1.msra.mxu0 %v4775
        %4808 = vmatprep.subr.mxu0 0.0
        %4809 = vmatpush1.msra.mxu0 %v4776
        %4810 = vmatprep.subr.mxu0 0.0
        %4811 = vmatpush1.msra.mxu0 %v4777
        %4812 = vmatprep.subr.mxu0 0.0
        %4813 = vmatpush1.msra.mxu0 %v4778
        %4814 = vmatprep.subr.mxu0 0.0
        %4815 = vmatpush1.msra.mxu0 %v4779
        %4816 = vmatprep.subr.mxu0 0.0
        %4817 = vmatpush1.msra.mxu0 %v4780
        %4818 = vmatprep.subr.mxu0 0.0
        %4819 = vmatpush1.msra.mxu0 %v4781
        %4820 = vmatprep.subr.mxu0 0.0
        %4821 = vmatpush1.msra.mxu0 %v4782
        %4822 = vmatprep.subr.mxu0 0.0
        %4823 = vmatpush1.msra.mxu0 0.0
        %4824 = vmatprep.subr.mxu0 0.0
        %4825 = vmatpush1.msra.mxu0 0.0
        %4826 = vmatprep.subr.mxu0 0.0
        %4827 = vmatpush1.msra.mxu0 0.0
        %4828 = vmatprep.subr.mxu0 0.0
        %4829 = vmatpush1.msra.mxu0 0.0
        %4830 = vmatprep.subr.mxu0 0.0
        %4831 = vmatpush1.msra.mxu0 0.0
        %4832 = vmatprep.subr.mxu0 0.0
        %4833 = vmatpush1.msra.mxu0 0.0
        %4834 = vmatprep.subr.mxu0 0.0
        %4835 = vmatpush1.msra.mxu0 0.0
        %4836 = vmatprep.subr.mxu0 0.0
        %4837 = vmatpush1.msra.mxu0 0.0
        %4838 = vmatprep.subr.mxu0 0.0
        %4839 = vmatpush1.msra.mxu0 0.0
        %4840 = vmatprep.subr.mxu0 0.0
        %4841 = vmatpush1.msra.mxu0 0.0
        %4842 = vmatprep.subr.mxu0 0.0
        %4843 = vmatpush1.msra.mxu0 0.0
        %4844 = vmatprep.subr.mxu0 0.0
        %4845 = vmatpush1.msra.mxu0 0.0
        %4846 = vmatprep.subr.mxu0 0.0
        %4847 = vmatpush1.msra.mxu0 0.0
        %4848 = vmatprep.subr.mxu0 0.0
        %4849 = vmatpush1.msra.mxu0 0.0
        %4850 = vmatprep.subr.mxu0 0.0
        %4851 = vmatpush1.msra.mxu0 0.0
        %4852 = vmatprep.subr.mxu0 0.0
        %4853 = vmatpush1.msra.mxu0 0.0
        %4854 = vmatprep.mubr.f32.mxu0 0.0
        %4855 = vmatmul.mubr.f32.gmra.mrb[0].mxu0 %v4653
        %v4856 = vpop.f32.mrb[0].mxu0
        %v4857 = vadd.f32 %v4788, %v4856
        %v4858 = vpop.f32.mrb[0].mxu0
        %4859 = vmatprep.mubr.f32.mxu0 0.0
        %4860 = vmatmul.mubr.f32.gmra.mrb[0].mxu0 %v4654
        %v4861 = vpop.f32.mrb[0].mxu0
        %v4862 = vadd.f32 %v4788, %v4861
        %v4863 = vpop.f32.mrb[0].mxu0
        %4864 = vmatprep.mubr.f32.mxu0 0.0
        %4865 = vmatmul.mubr.f32.gmra.mrb[0].mxu0 %v4655
        %v4866 = vpop.f32.mrb[0].mxu0
        %v4867 = vadd.f32 %v4788, %v4866
        %v4868 = vpop.f32.mrb[0].mxu0
        %4869 = vmatprep.mubr.f32.mxu0 0.0
        %4870 = vmatmul.mubr.f32.gmra.mrb[0].mxu0 %v4656
        %v4871 = vpop.f32.mrb[0].mxu0
        %v4872 = vadd.f32 %v4788, %v4871
        %v4873 = vpop.f32.mrb[0].mxu0
        %4874 = vmatprep.mubr.f32.mxu0 0.0
        %4875 = vmatmul.mubr.f32.gmra.mrb[0].mxu0 %v4657
        %v4876 = vpop.f32.mrb[0].mxu0
        %v4877 = vadd.f32 %v4788, %v4876
        %v4878 = vpop.f32.mrb[0].mxu0
        %4879 = vmatprep.mubr.f32.mxu0 0.0
        %4880 = vmatmul.mubr.f32.gmra.mrb[0].mxu0 %v4658
        %v4881 = vpop.f32.mrb[0].mxu0
        %v4882 = vadd.f32 %v4788, %v4881
        %v4883 = vpop.f32.mrb[0].mxu0
        %4884 = vmatprep.mubr.f32.mxu0 0.0
        %4885 = vmatmul.mubr.f32.gmra.mrb[0].mxu0 %v4659
        %v4886 = vpop.f32.mrb[0].mxu0
        %v4887 = vadd.f32 %v4788, %v4886
        %v4888 = vpop.f32.mrb[0].mxu0
        %4889 = vmatprep.mubr.f32.mxu0 0.0
        %4890 = vmatmul.mubr.f32.gmra.mrb[0].mxu0 %v4660
        %v4891 = vpop.f32.mrb[0].mxu0
        %v4892 = vadd.f32 %v4788, %v4891
        %v4893 = vpop.f32.mrb[0].mxu0
        %4894 = vmatprep.mubr.f32.mxu0 0.0
        %4895 = vmatmul.mubr.f32.gmra.mrb[0].mxu0 %v4661
        %v4896 = vpop.f32.mrb[0].mxu0
        %v4897 = vadd.f32 %v4788, %v4896
        %v4898 = vpop.f32.mrb[0].mxu0
        %4899 = vmatprep.mubr.f32.mxu0 0.0
        %4900 = vmatmul.mubr.f32.gmra.mrb[0].mxu0 %v4662
        %v4901 = vpop.f32.mrb[0].mxu0
        %v4902 = vadd.f32 %v4788, %v4901
        %v4903 = vpop.f32.mrb[0].mxu0
        %4904 = vmatprep.mubr.f32.mxu0 0.0
        %4905 = vmatmul.mubr.f32.gmra.mrb[0].mxu0 %v4663
        %v4906 = vpop.f32.mrb[0].mxu0
        %v4907 = vadd.f32 %v4788, %v4906
        %v4908 = vpop.f32.mrb[0].mxu0
        %4909 = vmatprep.mubr.f32.mxu0 0.0
        %4910 = vmatmul.mubr.f32.gmra.mrb[0].mxu0 %v4664
        %v4911 = vpop.f32.mrb[0].mxu0
        %v4912 = vadd.f32 %v4788, %v4911
        %v4913 = vpop.f32.mrb[0].mxu0
        %4914 = vmatprep.mubr.f32.mxu0 0.0
        %4915 = vmatmul.mubr.f32.gmra.mrb[0].mxu0 %v4665
        %v4916 = vpop.f32.mrb[0].mxu0
        %v4917 = vadd.f32 %v4788, %v4916
        %v4918 = vpop.f32.mrb[0].mxu0
        %4919 = vmatprep.mubr.f32.mxu0 0.0
        %4920 = vmatmul.mubr.f32.gmra.mrb[0].mxu0 %v4666
        %v4921 = vpop.f32.mrb[0].mxu0
        %v4922 = vadd.f32 %v4788, %v4921
        %v4923 = vpop.f32.mrb[0].mxu0
        %4924 = vmatprep.mubr.f32.mxu0 0.0
        %4925 = vmatmul.mubr.f32.gmra.mrb[0].mxu0 %v4667
        %v4926 = vpop.f32.mrb[0].mxu0
        %v4927 = vadd.f32 %v4788, %v4926
        %v4928 = vpop.f32.mrb[0].mxu0
        %4929 = vmatprep.mubr.f32.mxu0 0.0
        %4930 = vmatmul.mubr.f32.gmra.mrb[0].mxu0 %v4668
        %v4931 = vpop.f32.mrb[0].mxu0
        %v4932 = vadd.f32 %v4788, %v4931
        %v4933 = vpop.f32.mrb[0].mxu0
        %4934 = vdwg.mxu0
        %v4935 = vtanh.pop %v4857
        %v4936 = vtanh.pop %v4862
        %v4937 = vtanh.pop %v4867
        %v4938 = vtanh.pop %v4872
        %v4939 = vtanh.pop %v4877
        %v4940 = vtanh.pop %v4882
        %v4941 = vtanh.pop %v4887
        %v4942 = vtanh.pop %v4892
        %v4943 = vtanh.pop %v4897
        %v4944 = vtanh.pop %v4902
        %v4945 = vtanh.pop %v4907
        %v4946 = vtanh.pop %v4912
        %v4947 = vtanh.pop %v4917
        %v4948 = vtanh.pop %v4922
        %v4949 = vtanh.pop %v4927
        %v4950 = vtanh.pop %v4932
        %v4951 = vld [vmem:[%s460] sm:$0x1]
        %v4952 = vmul.f32 %v4935, %v4751
        %v4953 = vmul.f32 %v4936, %v4752
        %v4954 = vmul.f32 %v4937, %v4753
        %v4955 = vmul.f32 %v4938, %v4754
        %v4956 = vmul.f32 %v4939, %v4755
        %v4957 = vmul.f32 %v4940, %v4756
        %v4958 = vmul.f32 %v4941, %v4757
        %v4959 = vmul.f32 %v4942, %v4758
        %v4960 = vmul.f32 %v4943, %v4759
        %v4961 = vmul.f32 %v4944, %v4760
        %v4962 = vmul.f32 %v4945, %v4761
        %v4963 = vmul.f32 %v4946, %v4762
        %v4964 = vmul.f32 %v4947, %v4763
        %v4965 = vmul.f32 %v4948, %v4764
        %v4966 = vmul.f32 %v4949, %v4765
        %v4967 = vmul.f32 %v4950, %v4766
        %v4968 = vadd.f32 %v4952, %v4953
        %v4969 = vadd.f32 %v4968, %v4954
        %v4970 = vadd.f32 %v4969, %v4955
        %v4971 = vadd.f32 %v4970, %v4956
        %v4972 = vadd.f32 %v4971, %v4957
        %v4973 = vadd.f32 %v4972, %v4958
        %v4974 = vadd.f32 %v4973, %v4959
        %v4975 = vadd.f32 %v4974, %v4960
        %v4976 = vadd.f32 %v4975, %v4961
        %v4977 = vadd.f32 %v4976, %v4962
        %v4978 = vadd.f32 %v4977, %v4963
        %v4979 = vadd.f32 %v4978, %v4964
        %v4980 = vadd.f32 %v4979, %v4965
        %v4981 = vadd.f32 %v4980, %v4966
        %v4982 = vadd.f32 %v4981, %v4967
        %v4983 = vrot.slane %v4982, 4
        %v4984 = vadd.f32 %v4982, %v4983
        %v4985 = vrot.slane %v4984, 2
        %v4986 = vadd.f32 %v4984, %v4985
        %v4987 = vrot.slane %v4986, 1
        %v4988 = vadd.f32 %v4986, %v4987
        %v4989 = vadd.f32 %v4951, %v4988
        %4990 = vst [vmem:[%s460] sm:$0x1] %v4989
        %s4991 = sand.u32 %s269, 1
        %s4992 = scalar_lea.sflag [#allocation7], %s4991
        %s4993 = sand.u32 %s269, 1
        %s4994 = smul.addr %s4993, 128
        %s4995 = scalar_lea.vmem [#allocation8], %s4994
        %s4996 = sand.u32 %s295, 1
        %s4997 = scalar_lea.sflag [#allocation10], %s4996
        %s4998 = sand.u32 %s295, 1
        %s4999 = scalar_lea.vmem [#allocation9], %s4998
        // Predicated region
        $region65: #{tpu_custom_call.1} parent=55 // pred_check
          %p5000 = pneg %p279
        $region66: #{tpu_custom_call.1} parent=55 // pred_check_branch
          %5002 = sbr.rel (%p5000) target = $region68
        $region67: #{tpu_custom_call.1} parent=55 // pred_region
          %s5003 = smul.u32 16, %s36
          %s5005 = ssub.s32 2048, 2048
          %5006 = vsyncadd %s4992, %s5005
          %s5007 = smul.addr %s35, 32
          %s5008 = sadd.s32 %s5003, %s5007
          %s5009 = smul.addr %s5008, 128
          %s5010 = scalar_lea.hbm %s9, %s5009
          %s5011 = sshll.u32 %s4995, 4
          %s5012 = int_to_ptr.vmem [resolvable:$true] %s5011
          %5017 = dma.vmem_to_hbm [thread:$0]  %s5012, 2048, %s5010, %s4992, 128, 128, 8
        $region68: #{tpu_custom_call.1} parent=55 // pred_fallthru
          _
        // Predicated region
        $region69: #{tpu_custom_call.1} parent=55 // pred_check
          %p5018 = pneg %p305
        $region70: #{tpu_custom_call.1} parent=55 // pred_check_branch
          %5020 = sbr.rel (%p5018) target = $region72
        $region71: #{tpu_custom_call.1} parent=55 // pred_region
          %s5022 = ssub.s32 16, 16
          %5023 = vsyncadd %s4997, %s5022
          %s5024 = smul.addr %s35, 16
          %s5025 = scalar_lea.hbm %s10, %s5024
          %s5027 = sshll.u32 %s4999, 4
          %s5028 = int_to_ptr.vmem [resolvable:$true] %s5027
          %5030 = dma.vmem_to_hbm [thread:$0]  %s5028, 16, %s5025, %s4997
        $region72: #{tpu_custom_call.1} parent=55 // pred_fallthru
          _
      $region56: #{tpu_custom_call.1} parent=5 // pred_fallthru
        _
      %p5031 = scmp.le.s32.totalorder 2, %s26
      // Predicated region
      $region73: #{tpu_custom_call.1} parent=5 // pred_check
        %p5032 = pneg %p5031
      $region74: #{tpu_custom_call.1} parent=5 // pred_check_branch
        %5034 = sbr.rel (%p5032) target = $region76
      $region75: #{tpu_custom_call.1} parent=5 // pred_region
        %s5035 = ssub.s32 %s26, 2
        // Predicated region
        $region77: #{tpu_custom_call.1} parent=75 // pred_check
          %p5036 = pneg %p285
        $region78: #{tpu_custom_call.1} parent=75 // pred_check_branch
          %5038 = sbr.rel (%p5036) target = $region80
        $region79: #{tpu_custom_call.1} parent=75 // pred_region
          %s5039 = sand.u32 %s270, 1
          %s5040 = scalar_lea.sflag [#allocation7], %s5039
          %s5041 = sand.u32 %s270, 1
          %s5042 = smul.addr %s5041, 128
          %s5043 = scalar_lea.vmem [#allocation8], %s5042
          %5044 = dma.done %s5040, 2048
        $region80: #{tpu_custom_call.1} parent=75 // pred_fallthru
          _
        // Predicated region
        $region81: #{tpu_custom_call.1} parent=75 // pred_check
          %p5045 = pneg %p311
        $region82: #{tpu_custom_call.1} parent=75 // pred_check_branch
          %5047 = sbr.rel (%p5045) target = $region84
        $region83: #{tpu_custom_call.1} parent=75 // pred_region
          %s5048 = sand.u32 %s296, 1
          %s5049 = scalar_lea.sflag [#allocation10], %s5048
          %s5050 = sand.u32 %s296, 1
          %s5051 = scalar_lea.vmem [#allocation9], %s5050
          %5052 = dma.done %s5049, 16
        $region84: #{tpu_custom_call.1} parent=75 // pred_fallthru
          _
      $region76: #{tpu_custom_call.1} parent=5 // pred_fallthru
        _
    $region6: #{tpu_custom_call.1} parent=1 // loop_footer
      %s30 = sadd.s32 1, %s26
    $region7: #{tpu_custom_call.1} parent=1 // loop_footer_branch
      %25 = sbr.rel target = $region3
    $region8: #{tpu_custom_call.1} parent=1 // loop_exit
      _
    %5053 = vsyncpa [#allocation6], 1
    %s5054 = scalar_lea.sflag [#allocation6], 1
    %5055 = vsyncpa %s5054, 1
    %5056 = vsyncpa [#allocation7], 1
    %s5057 = scalar_lea.sflag [#allocation7], 1
    %5058 = vsyncpa %s5057, 1
    %5059 = vsyncpa [#allocation10], 1
    %s5060 = scalar_lea.sflag [#allocation10], 1
    %5061 = vsyncpa %s5060, 1

</llo_original>
